<compile_context>
chip_gen: v7x
topology: tpu7x:2x2x1
jax: 0.10.0
libtpu: 0.0.40
codegen_flags: <defaults>
</compile_context>

<pallas_src>
import functools

import jax
import jax.numpy as jnp
import numpy as np
from jax.experimental import pallas as pl
from jax.experimental.pallas import tpu as pltpu

BN_EPS = 0.8
LRELU_SLOPE = 0.2
HIDDEN = 1024  # width of the last hidden layer


def _leaky_relu(x):
    # For slope < 1, LeakyReLU(x) == max(x, slope*x): one mul + one vmax, no select.
    return jnp.maximum(x, LRELU_SLOPE * x)


def _trunk_kernel(
    z_ref,
    w1_ref, b1_ref,
    w2_ref, b2_ref, g2_ref, be2_ref,
    w3_ref, b3_ref, g3_ref, be3_ref,
    w4_ref, b4_ref, g4_ref, be4_ref,
    h_ref,
):
    """Layers 1-4. Whole batch resident so BatchNorm batch statistics are exact."""
    inv_b = 1.0 / z_ref.shape[0]  # static

    x = z_ref[...].astype(jnp.bfloat16)

    # --- block 1: Linear -> LeakyReLU (no BatchNorm) ---
    h = jnp.dot(x, w1_ref[...], preferred_element_type=jnp.float32) + b1_ref[...]
    h = _leaky_relu(h)

    def bn_block(h, w_ref, b_ref, g_ref, be_ref):
        # Linear (bf16 inputs, f32 accumulation on the MXU)
        h = jnp.dot(h.astype(jnp.bfloat16), w_ref[...],
                    preferred_element_type=jnp.float32) + b_ref[...]
        # BatchNorm1d training mode: batch mean / biased batch variance.
        # Fused one-pass statistics: sum and sum-of-squares in a single sweep.
        s = jnp.sum(h, axis=0, keepdims=True)
        ss = jnp.sum(h * h, axis=0, keepdims=True)
        mean = s * inv_b
        var = ss * inv_b - mean * mean          # eps=0.8 dwarfs cancellation error
        h = (h - mean) * jax.lax.rsqrt(var + BN_EPS)
        h = h * g_ref[...] + be_ref[...]
        return _leaky_relu(h)

    h = bn_block(h, w2_ref, b2_ref, g2_ref, be2_ref)   # 128 -> 256
    h = bn_block(h, w3_ref, b3_ref, g3_ref, be3_ref)   # 256 -> 512
    h = bn_block(h, w4_ref, b4_ref, g4_ref, be4_ref)   # 512 -> 1024

    # bf16 hand-off to the head kernel (it feeds the MXU in bf16 anyway).
    h_ref[...] = h.astype(jnp.bfloat16)


def _head_kernel(h_ref, w5_ref, b5_ref, out_ref):
    """Final Linear -> Tanh on one out_dim tile (grid axis is 'parallel')."""
    o = jnp.dot(h_ref[...], w5_ref[...], preferred_element_type=jnp.float32)
    out_ref[...] = jnp.tanh(o + b5_ref[...])


def init_generator_params(key, latent_dim, img_shape):
    """Deterministic init matching PyTorch Linear default: U(-1/sqrt(in), 1/sqrt(in))."""
    out_dim = int(np.prod(img_shape))
    dims = [(latent_dim, 128), (128, 256), (256, 512), (512, 1024), (1024, out_dim)]
    params = {}
    for idx, (fin, fout) in enumerate(dims, start=1):
        key, kw, kb = jax.random.split(key, 3)
        bound = 1.0 / np.sqrt(fin)
        w = jax.random.uniform(kw, (fin, fout), jnp.float32, minval=-bound, maxval=bound)
        # bf16 weights: halves HBM->VMEM weight bytes (kernel is weight-DMA bound)
        params[f"w{idx}"] = w.astype(jnp.bfloat16)
        params[f"b{idx}"] = jax.random.uniform(
            kb, (1, fout), jnp.float32, minval=-bound, maxval=bound)
    # BatchNorm affine params (PyTorch init: weight=1, bias=0) for blocks 2..4
    for idx, fout in zip((2, 3, 4), (256, 512, 1024)):
        params[f"g{idx}"] = jnp.ones((1, fout), jnp.float32)
        params[f"be{idx}"] = jnp.zeros((1, fout), jnp.float32)
    return params


def _round_up(x, m):
    return (x + m - 1) // m * m


def _pick_tile(n_pad):
    # n_pad is a multiple of 128; pick the largest tile in {1024,512,256,128} that divides it.
    for t in (1024, 512, 256, 128):
        if n_pad % t == 0:
            return t
    return 128


def _nbytes(a):
    return int(np.prod(a.shape)) * a.dtype.itemsize


@functools.partial(jax.jit, static_argnames=("img_shape",))
def generator_forward(z, params, img_shape):
    batch = z.shape[0]
    out_dim = int(np.prod(img_shape))
    out_pad = _round_up(out_dim, 128)   # lane-dense output -> unmasked vst
    tn = _pick_tile(out_pad)

    # ---- trunk: layers 1-4, whole batch in one kernel (BN batch stats) ----
    trunk_args = (
        z,
        params["w1"], params["b1"],
        params["w2"], params["b2"], params["g2"], params["be2"],
        params["w3"], params["b3"], params["g3"], params["be3"],
        params["w4"], params["b4"], params["g4"], params["be4"],
    )
    vmem_spec = pl.BlockSpec(memory_space=pltpu.MemorySpace.VMEM)
    # Right-sized VMEM request: resident inputs + output + f32 activation scratch + headroom.
    trunk_vmem = int(
        sum(_nbytes(a) for a in trunk_args)
        + batch * HIDDEN * 2                 # bf16 output
        + 4 * batch * HIDDEN * 4             # f32 activation temporaries
        + (4 << 20))                         # headroom for Mosaic internals

    h = pl.pallas_call(
        _trunk_kernel,
        out_shape=jax.ShapeDtypeStruct((batch, HIDDEN), jnp.bfloat16),
        in_specs=[vmem_spec] * len(trunk_args),
        out_specs=vmem_spec,
        compiler_params=pltpu.CompilerParams(vmem_limit_bytes=trunk_vmem),
    )(*trunk_args)

    # ---- head: final Linear -> Tanh, tiled over out_dim (parallel grid) ----
    w5 = params["w5"]
    b5 = params["b5"]
    if out_pad != out_dim:
        w5 = jnp.pad(w5, ((0, 0), (0, out_pad - out_dim)))
        b5 = jnp.pad(b5, ((0, 0), (0, out_pad - out_dim)))

    head_vmem = int(
        2 * (batch * HIDDEN * 2              # h block (bf16), double-buffered
             + HIDDEN * tn * 2               # w5 tile (bf16)
             + tn * 4                        # b5 tile (f32)
             + batch * tn * 4)               # output tile (f32)
        + (4 << 20))

    img_flat = pl.pallas_call(
        _head_kernel,
        out_shape=jax.ShapeDtypeStruct((batch, out_pad), jnp.float32),
        grid=(out_pad // tn,),
        in_specs=[
            pl.BlockSpec((batch, HIDDEN), lambda j: (0, 0)),
            pl.BlockSpec((HIDDEN, tn), lambda j: (0, j)),
            pl.BlockSpec((1, tn), lambda j: (0, j)),
        ],
        out_specs=pl.BlockSpec((batch, tn), lambda j: (0, j)),
        compiler_params=pltpu.CompilerParams(
            dimension_semantics=("parallel",),
            vmem_limit_bytes=head_vmem),
    )(h, w5, b5)

    img_flat = img_flat[:, :out_dim]
    return img_flat.reshape((batch,) + tuple(img_shape))


def _reference_forward(z, params, img_shape):
    """Pure-JAX reference mirroring the kernel math (bf16 matmuls, f32 accumulation)."""
    def dot(a, b):
        return jnp.dot(a.astype(jnp.bfloat16), b, preferred_element_type=jnp.float32)

    h = _leaky_relu(dot(z, params["w1"]) + params["b1"])
    for idx in (2, 3, 4):
        h = dot(h, params[f"w{idx}"]) + params[f"b{idx}"]
        mean = jnp.mean(h, axis=0, keepdims=True)
        var = jnp.mean(h * h, axis=0, keepdims=True) - mean * mean
        h = (h - mean) * jax.lax.rsqrt(var + BN_EPS)
        h = h * params[f"g{idx}"] + params[f"be{idx}"]
        h = _leaky_relu(h)
    out = jnp.tanh(dot(h, params["w5"]) + params["b5"])
    return out.reshape((z.shape[0],) + tuple(img_shape))


if __name__ == "__main__":
    latent_dim = 32
    img_shape = (1, 16, 16)   # NCHW image shape -> 256 output features (lane-aligned)
    batch = 8

    key = jax.random.PRNGKey(0)
    kparam, knoise = jax.random.split(key)
    params = init_generator_params(kparam, latent_dim, img_shape)

    # equivalent of Generator.get_noise(batch, device)
    z = jax.random.normal(knoise, (batch, latent_dim), jnp.float32)

    img = generator_forward(z, params, img_shape)
    img = jax.block_until_ready(img)

    ref = _reference_forward(z, params, img_shape)
    np.testing.assert_allclose(np.asarray(img), np.asarray(ref), rtol=2e-3, atol=2e-3)
    assert img.shape == (batch,) + img_shape

    print("KERNEL_OK")
</pallas_src>

<mosaic_0001>
module attributes {stable_mosaic.version = 11 : i64} {
  func.func @_trunk_kernel(%arg0: memref<8x32xf32, #tpu.memory_space<vmem>>, %arg1: memref<32x128xbf16, #tpu.memory_space<vmem>>, %arg2: memref<1x128xf32, #tpu.memory_space<vmem>>, %arg3: memref<128x256xbf16, #tpu.memory_space<vmem>>, %arg4: memref<1x256xf32, #tpu.memory_space<vmem>>, %arg5: memref<1x256xf32, #tpu.memory_space<vmem>>, %arg6: memref<1x256xf32, #tpu.memory_space<vmem>>, %arg7: memref<256x512xbf16, #tpu.memory_space<vmem>>, %arg8: memref<1x512xf32, #tpu.memory_space<vmem>>, %arg9: memref<1x512xf32, #tpu.memory_space<vmem>>, %arg10: memref<1x512xf32, #tpu.memory_space<vmem>>, %arg11: memref<512x1024xbf16, #tpu.memory_space<vmem>>, %arg12: memref<1x1024xf32, #tpu.memory_space<vmem>>, %arg13: memref<1x1024xf32, #tpu.memory_space<vmem>>, %arg14: memref<1x1024xf32, #tpu.memory_space<vmem>>, %arg15: memref<8x1024xbf16, #tpu.memory_space<vmem>>) attributes {dimension_semantics = [], scalar_prefetch = 0 : i64, scratch_operands = 0 : i64, tpu.core_type = #tpu.core_type<tc>} {
    %c0 = arith.constant 0 : index
    %c0_0 = arith.constant 0 : index
    %0 = vector.load %arg0[%c0, %c0_0] : memref<8x32xf32, #tpu.memory_space<vmem>>, vector<8x32xf32>
    %1 = arith.truncf %0 : vector<8x32xf32> to vector<8x32xbf16>
    %c0_1 = arith.constant 0 : index
    %c0_2 = arith.constant 0 : index
    %2 = vector.load %arg1[%c0_1, %c0_2] : memref<32x128xbf16, #tpu.memory_space<vmem>>, vector<32x128xbf16>
    %cst = arith.constant dense<0.000000e+00> : vector<8x128xf32>
    %3 = tpu.matmul %1, %2, %cst {dimension_numbers = #tpu.dot_dimension_numbers<[1], [0], [0], [1], [0, 0, 1, 1], [], []>} : vector<8x32xbf16>, vector<32x128xbf16>, vector<8x128xf32> -> vector<8x128xf32>
    %c0_3 = arith.constant 0 : index
    %c0_4 = arith.constant 0 : index
    %4 = vector.load %arg2[%c0_3, %c0_4] : memref<1x128xf32, #tpu.memory_space<vmem>>, vector<1x128xf32>
    %5 = vector.broadcast %4 : vector<1x128xf32> to vector<8x128xf32>
    %6 = arith.addf %3, %5 : vector<8x128xf32>
    %cst_5 = arith.constant 2.000000e-01 : f32
    %7 = vector.broadcast %cst_5 : f32 to vector<8x128xf32>
    %8 = arith.mulf %7, %6 : vector<8x128xf32>
    %9 = arith.maximumf %6, %8 : vector<8x128xf32>
    %10 = arith.truncf %9 : vector<8x128xf32> to vector<8x128xbf16>
    %c0_6 = arith.constant 0 : index
    %c0_7 = arith.constant 0 : index
    %11 = vector.load %arg3[%c0_6, %c0_7] : memref<128x256xbf16, #tpu.memory_space<vmem>>, vector<128x256xbf16>
    %cst_8 = arith.constant dense<0.000000e+00> : vector<8x256xf32>
    %12 = tpu.matmul %10, %11, %cst_8 {dimension_numbers = #tpu.dot_dimension_numbers<[1], [0], [0], [1], [0, 0, 1, 1], [], []>} : vector<8x128xbf16>, vector<128x256xbf16>, vector<8x256xf32> -> vector<8x256xf32>
    %c0_9 = arith.constant 0 : index
    %c0_10 = arith.constant 0 : index
    %13 = vector.load %arg4[%c0_9, %c0_10] : memref<1x256xf32, #tpu.memory_space<vmem>>, vector<1x256xf32>
    %14 = vector.broadcast %13 : vector<1x256xf32> to vector<8x256xf32>
    %15 = arith.addf %12, %14 : vector<8x256xf32>
    %cst_11 = arith.constant dense<0.000000e+00> : vector<256xf32>
    %16 = vector.multi_reduction <add>, %15, %cst_11 [0] : vector<8x256xf32> to vector<256xf32>
    %17 = vector.shape_cast %16 : vector<256xf32> to vector<1x256xf32>
    %18 = arith.mulf %15, %15 : vector<8x256xf32>
    %cst_12 = arith.constant dense<0.000000e+00> : vector<256xf32>
    %19 = vector.multi_reduction <add>, %18, %cst_12 [0] : vector<8x256xf32> to vector<256xf32>
    %20 = vector.shape_cast %19 : vector<256xf32> to vector<1x256xf32>
    %cst_13 = arith.constant 1.250000e-01 : f32
    %21 = vector.broadcast %cst_13 : f32 to vector<1x256xf32>
    %22 = arith.mulf %17, %21 : vector<1x256xf32>
    %cst_14 = arith.constant 1.250000e-01 : f32
    %23 = vector.broadcast %cst_14 : f32 to vector<1x256xf32>
    %24 = arith.mulf %20, %23 : vector<1x256xf32>
    %25 = arith.mulf %22, %22 : vector<1x256xf32>
    %26 = arith.subf %24, %25 : vector<1x256xf32>
    %27 = vector.broadcast %22 : vector<1x256xf32> to vector<8x256xf32>
    %28 = arith.subf %15, %27 : vector<8x256xf32>
    %cst_15 = arith.constant 8.000000e-01 : f32
    %29 = vector.broadcast %cst_15 : f32 to vector<1x256xf32>
    %30 = arith.addf %26, %29 : vector<1x256xf32>
    %31 = math.rsqrt %30 : vector<1x256xf32>
    %32 = vector.broadcast %31 : vector<1x256xf32> to vector<8x256xf32>
    %33 = arith.mulf %28, %32 : vector<8x256xf32>
    %c0_16 = arith.constant 0 : index
    %c0_17 = arith.constant 0 : index
    %34 = vector.load %arg5[%c0_16, %c0_17] : memref<1x256xf32, #tpu.memory_space<vmem>>, vector<1x256xf32>
    %35 = vector.broadcast %34 : vector<1x256xf32> to vector<8x256xf32>
    %36 = arith.mulf %33, %35 : vector<8x256xf32>
    %c0_18 = arith.constant 0 : index
    %c0_19 = arith.constant 0 : index
    %37 = vector.load %arg6[%c0_18, %c0_19] : memref<1x256xf32, #tpu.memory_space<vmem>>, vector<1x256xf32>
    %38 = vector.broadcast %37 : vector<1x256xf32> to vector<8x256xf32>
    %39 = arith.addf %36, %38 : vector<8x256xf32>
    %cst_20 = arith.constant 2.000000e-01 : f32
    %40 = vector.broadcast %cst_20 : f32 to vector<8x256xf32>
    %41 = arith.mulf %40, %39 : vector<8x256xf32>
    %42 = arith.maximumf %39, %41 : vector<8x256xf32>
    %43 = arith.truncf %42 : vector<8x256xf32> to vector<8x256xbf16>
    %c0_21 = arith.constant 0 : index
    %c0_22 = arith.constant 0 : index
    %44 = vector.load %arg7[%c0_21, %c0_22] : memref<256x512xbf16, #tpu.memory_space<vmem>>, vector<256x512xbf16>
    %cst_23 = arith.constant dense<0.000000e+00> : vector<8x512xf32>
    %45 = tpu.matmul %43, %44, %cst_23 {dimension_numbers = #tpu.dot_dimension_numbers<[1], [0], [0], [1], [0, 0, 1, 1], [], []>} : vector<8x256xbf16>, vector<256x512xbf16>, vector<8x512xf32> -> vector<8x512xf32>
    %c0_24 = arith.constant 0 : index
    %c0_25 = arith.constant 0 : index
    %46 = vector.load %arg8[%c0_24, %c0_25] : memref<1x512xf32, #tpu.memory_space<vmem>>, vector<1x512xf32>
    %47 = vector.broadcast %46 : vector<1x512xf32> to vector<8x512xf32>
    %48 = arith.addf %45, %47 : vector<8x512xf32>
    %cst_26 = arith.constant dense<0.000000e+00> : vector<512xf32>
    %49 = vector.multi_reduction <add>, %48, %cst_26 [0] : vector<8x512xf32> to vector<512xf32>
    %50 = vector.shape_cast %49 : vector<512xf32> to vector<1x512xf32>
    %51 = arith.mulf %48, %48 : vector<8x512xf32>
    %cst_27 = arith.constant dense<0.000000e+00> : vector<512xf32>
    %52 = vector.multi_reduction <add>, %51, %cst_27 [0] : vector<8x512xf32> to vector<512xf32>
    %53 = vector.shape_cast %52 : vector<512xf32> to vector<1x512xf32>
    %cst_28 = arith.constant 1.250000e-01 : f32
    %54 = vector.broadcast %cst_28 : f32 to vector<1x512xf32>
    %55 = arith.mulf %50, %54 : vector<1x512xf32>
    %cst_29 = arith.constant 1.250000e-01 : f32
    %56 = vector.broadcast %cst_29 : f32 to vector<1x512xf32>
    %57 = arith.mulf %53, %56 : vector<1x512xf32>
    %58 = arith.mulf %55, %55 : vector<1x512xf32>
    %59 = arith.subf %57, %58 : vector<1x512xf32>
    %60 = vector.broadcast %55 : vector<1x512xf32> to vector<8x512xf32>
    %61 = arith.subf %48, %60 : vector<8x512xf32>
    %cst_30 = arith.constant 8.000000e-01 : f32
    %62 = vector.broadcast %cst_30 : f32 to vector<1x512xf32>
    %63 = arith.addf %59, %62 : vector<1x512xf32>
    %64 = math.rsqrt %63 : vector<1x512xf32>
    %65 = vector.broadcast %64 : vector<1x512xf32> to vector<8x512xf32>
    %66 = arith.mulf %61, %65 : vector<8x512xf32>
    %c0_31 = arith.constant 0 : index
    %c0_32 = arith.constant 0 : index
    %67 = vector.load %arg9[%c0_31, %c0_32] : memref<1x512xf32, #tpu.memory_space<vmem>>, vector<1x512xf32>
    %68 = vector.broadcast %67 : vector<1x512xf32> to vector<8x512xf32>
    %69 = arith.mulf %66, %68 : vector<8x512xf32>
    %c0_33 = arith.constant 0 : index
    %c0_34 = arith.constant 0 : index
    %70 = vector.load %arg10[%c0_33, %c0_34] : memref<1x512xf32, #tpu.memory_space<vmem>>, vector<1x512xf32>
    %71 = vector.broadcast %70 : vector<1x512xf32> to vector<8x512xf32>
    %72 = arith.addf %69, %71 : vector<8x512xf32>
    %cst_35 = arith.constant 2.000000e-01 : f32
    %73 = vector.broadcast %cst_35 : f32 to vector<8x512xf32>
    %74 = arith.mulf %73, %72 : vector<8x512xf32>
    %75 = arith.maximumf %72, %74 : vector<8x512xf32>
    %76 = arith.truncf %75 : vector<8x512xf32> to vector<8x512xbf16>
    %c0_36 = arith.constant 0 : index
    %c0_37 = arith.constant 0 : index
    %77 = vector.load %arg11[%c0_36, %c0_37] : memref<512x1024xbf16, #tpu.memory_space<vmem>>, vector<512x1024xbf16>
    %cst_38 = arith.constant dense<0.000000e+00> : vector<8x1024xf32>
    %78 = tpu.matmul %76, %77, %cst_38 {dimension_numbers = #tpu.dot_dimension_numbers<[1], [0], [0], [1], [0, 0, 1, 1], [], []>} : vector<8x512xbf16>, vector<512x1024xbf16>, vector<8x1024xf32> -> vector<8x1024xf32>
    %c0_39 = arith.constant 0 : index
    %c0_40 = arith.constant 0 : index
    %79 = vector.load %arg12[%c0_39, %c0_40] : memref<1x1024xf32, #tpu.memory_space<vmem>>, vector<1x1024xf32>
    %80 = vector.broadcast %79 : vector<1x1024xf32> to vector<8x1024xf32>
    %81 = arith.addf %78, %80 : vector<8x1024xf32>
    %cst_41 = arith.constant dense<0.000000e+00> : vector<1024xf32>
    %82 = vector.multi_reduction <add>, %81, %cst_41 [0] : vector<8x1024xf32> to vector<1024xf32>
    %83 = vector.shape_cast %82 : vector<1024xf32> to vector<1x1024xf32>
    %84 = arith.mulf %81, %81 : vector<8x1024xf32>
    %cst_42 = arith.constant dense<0.000000e+00> : vector<1024xf32>
    %85 = vector.multi_reduction <add>, %84, %cst_42 [0] : vector<8x1024xf32> to vector<1024xf32>
    %86 = vector.shape_cast %85 : vector<1024xf32> to vector<1x1024xf32>
    %cst_43 = arith.constant 1.250000e-01 : f32
    %87 = vector.broadcast %cst_43 : f32 to vector<1x1024xf32>
    %88 = arith.mulf %83, %87 : vector<1x1024xf32>
    %cst_44 = arith.constant 1.250000e-01 : f32
    %89 = vector.broadcast %cst_44 : f32 to vector<1x1024xf32>
    %90 = arith.mulf %86, %89 : vector<1x1024xf32>
    %91 = arith.mulf %88, %88 : vector<1x1024xf32>
    %92 = arith.subf %90, %91 : vector<1x1024xf32>
    %93 = vector.broadcast %88 : vector<1x1024xf32> to vector<8x1024xf32>
    %94 = arith.subf %81, %93 : vector<8x1024xf32>
    %cst_45 = arith.constant 8.000000e-01 : f32
    %95 = vector.broadcast %cst_45 : f32 to vector<1x1024xf32>
    %96 = arith.addf %92, %95 : vector<1x1024xf32>
    %97 = math.rsqrt %96 : vector<1x1024xf32>
    %98 = vector.broadcast %97 : vector<1x1024xf32> to vector<8x1024xf32>
    %99 = arith.mulf %94, %98 : vector<8x1024xf32>
    %c0_46 = arith.constant 0 : index
    %c0_47 = arith.constant 0 : index
    %100 = vector.load %arg13[%c0_46, %c0_47] : memref<1x1024xf32, #tpu.memory_space<vmem>>, vector<1x1024xf32>
    %101 = vector.broadcast %100 : vector<1x1024xf32> to vector<8x1024xf32>
    %102 = arith.mulf %99, %101 : vector<8x1024xf32>
    %c0_48 = arith.constant 0 : index
    %c0_49 = arith.constant 0 : index
    %103 = vector.load %arg14[%c0_48, %c0_49] : memref<1x1024xf32, #tpu.memory_space<vmem>>, vector<1x1024xf32>
    %104 = vector.broadcast %103 : vector<1x1024xf32> to vector<8x1024xf32>
    %105 = arith.addf %102, %104 : vector<8x1024xf32>
    %cst_50 = arith.constant 2.000000e-01 : f32
    %106 = vector.broadcast %cst_50 : f32 to vector<8x1024xf32>
    %107 = arith.mulf %106, %105 : vector<8x1024xf32>
    %108 = arith.maximumf %105, %107 : vector<8x1024xf32>
    %109 = arith.truncf %108 : vector<8x1024xf32> to vector<8x1024xbf16>
    %c0_51 = arith.constant 0 : index
    %c0_52 = arith.constant 0 : index
    %110 = vector.load %arg15[%c0_51, %c0_52] : memref<8x1024xbf16, #tpu.memory_space<vmem>>, vector<8x1024xbf16>
    tpu.vector_store %arg15[%c0_51, %c0_52], %109 {strides = array<i32>} : memref<8x1024xbf16, #tpu.memory_space<vmem>>, vector<8x1024xbf16>,
    return
  }
}

module attributes {stable_mosaic.version = 11 : i64} {
  func.func @_head_kernel(%arg0: i32, %arg1: memref<8x1024xbf16, #tpu.memory_space<vmem>>, %arg2: memref<1024x256xbf16, #tpu.memory_space<vmem>>, %arg3: memref<1x256xf32, #tpu.memory_space<vmem>>, %arg4: memref<8x256xf32, #tpu.memory_space<vmem>>) attributes {dimension_semantics = [#tpu.dimension_semantics<parallel>], iteration_bounds = array<i64: 1>, scalar_prefetch = 0 : i64, scratch_operands = 0 : i64, tpu.core_type = #tpu.core_type<tc>, window_params = [{pipeline_mode = #tpu.pipeline_mode<synchronous>, transform_indices = @transform_0, window_bounds = array<i64: 8, 1024>}, {transform_indices = @transform_1, window_bounds = array<i64: 1024, 256>}, {transform_indices = @transform_2, window_bounds = array<i64: 1, 256>}, {transform_indices = @transform_3, window_bounds = array<i64: 8, 256>}]} {
    %c0 = arith.constant 0 : index
    %c0_0 = arith.constant 0 : index
    %0 = vector.load %arg1[%c0, %c0_0] : memref<8x1024xbf16, #tpu.memory_space<vmem>>, vector<8x1024xbf16>
    %c0_1 = arith.constant 0 : index
    %c0_2 = arith.constant 0 : index
    %1 = vector.load %arg2[%c0_1, %c0_2] : memref<1024x256xbf16, #tpu.memory_space<vmem>>, vector<1024x256xbf16>
    %cst = arith.constant dense<0.000000e+00> : vector<8x256xf32>
    %2 = tpu.matmul %0, %1, %cst {dimension_numbers = #tpu.dot_dimension_numbers<[1], [0], [0], [1], [0, 0, 1, 1], [], []>} : vector<8x1024xbf16>, vector<1024x256xbf16>, vector<8x256xf32> -> vector<8x256xf32>
    %c0_3 = arith.constant 0 : index
    %c0_4 = arith.constant 0 : index
    %3 = vector.load %arg3[%c0_3, %c0_4] : memref<1x256xf32, #tpu.memory_space<vmem>>, vector<1x256xf32>
    %4 = vector.broadcast %3 : vector<1x256xf32> to vector<8x256xf32>
    %5 = arith.addf %2, %4 : vector<8x256xf32>
    %6 = math.tanh %5 : vector<8x256xf32>
    %c0_5 = arith.constant 0 : index
    %c0_6 = arith.constant 0 : index
    %7 = vector.load %arg4[%c0_5, %c0_6] : memref<8x256xf32, #tpu.memory_space<vmem>>, vector<8x256xf32>
    tpu.vector_store %arg4[%c0_5, %c0_6], %6 {strides = array<i32>} : memref<8x256xf32, #tpu.memory_space<vmem>>, vector<8x256xf32>,
    return
  }
  func.func @transform_0(%arg0: i32) -> (i32, i32) {
    %c0_i32 = arith.constant 0 : i32
    %c0_i32_0 = arith.constant 0 : i32
    %c0_i32_1 = arith.constant 0 : i32
    return %c0_i32, %c0_i32_0 : i32, i32
  }
  func.func @transform_1(%arg0: i32) -> (i32, i32) {
    %c0_i32 = arith.constant 0 : i32
    %c0_i32_0 = arith.constant 0 : i32
    return %c0_i32, %arg0 : i32, i32
  }
  func.func @transform_2(%arg0: i32) -> (i32, i32) {
    %c0_i32 = arith.constant 0 : i32
    %c0_i32_0 = arith.constant 0 : i32
    return %c0_i32, %arg0 : i32, i32
  }
  func.func @transform_3(%arg0: i32) -> (i32, i32) {
    %c0_i32 = arith.constant 0 : i32
    %c0_i32_0 = arith.constant 0 : i32
    return %c0_i32, %arg0 : i32, i32
  }
}

</mosaic_0001>

<llo_original>
// kernel: generator_forward.3
$region0: #{generator_forward.3}
  #allocation0 [shape = 'u32[]', space=smem, size = 0x4, offset = 0x4, fixed_abs, tag = 'smem constant byte address 0x4 - core index']
  #allocation1 [shape = 'u32[144,128]{1,0:T(1,128)}', space=vmem, size = 0x12000, scoped, tag = 'internal scratch']
  %s0 = inlined_call_operand.vmem [shape: bf16[8,1024], index: 0, kind: input, shape index: {}]
  %s1 = inlined_call_operand.vmem [shape: bf16[1024,256], index: 1, kind: input, shape index: {}]
  %s2 = inlined_call_operand.vmem [shape: f32[1,256], index: 2, kind: input, shape index: {}]
  %s3 = inlined_call_operand.vmem [shape: f32[8,256], index: 3, kind: output, shape index: {}]
  %s4 = sld [smem:[#allocation0]]
  $region22: #{generator_forward.3} parent=0
    _
  %s6 = ssub.s32 1, %s4
  %s7 = scalar_select 0, %s6, %s4
  // Predicated region
  $region2: #{generator_forward.3} parent=0 // pred_check
    _
  $region3: #{generator_forward.3} parent=0 // pred_check_branch
    %9 = sbr.rel (0) target = $region5
  $region4: #{generator_forward.3} parent=0 // pred_region
    _
  $region5: #{generator_forward.3} parent=0 // pred_fallthru
    _
  // Predicated region
  $region6: #{generator_forward.3} parent=0 // pred_check
    _
  $region7: #{generator_forward.3} parent=0 // pred_check_branch
    %11 = sbr.rel (0) target = $region9
  $region8: #{generator_forward.3} parent=0 // pred_region
    _
  $region9: #{generator_forward.3} parent=0 // pred_fallthru
    _
  // Predicated region
  $region10: #{generator_forward.3} parent=0 // pred_check
    _
  $region11: #{generator_forward.3} parent=0 // pred_check_branch
    %13 = sbr.rel (0) target = $region13
  $region12: #{generator_forward.3} parent=0 // pred_region
    _
  $region13: #{generator_forward.3} parent=0 // pred_fallthru
    _
  %v14 = vld [vmem:[%s0] sm:$0xff]
  %v15 = vld [vmem:[%s0 + $0x8] sm:$0xff]
  %v16 = vld [vmem:[%s0 + $0x10] sm:$0xff]
  %v17 = vld [vmem:[%s0 + $0x18] sm:$0xff]
  %v18 = vld [vmem:[%s1] sm:$0xff]
  %v19 = vld [vmem:[%s1 + $0x8] sm:$0xff]
  %v20 = vld [vmem:[%s1 + $0x10] sm:$0xff]
  %v21 = vld [vmem:[%s1 + $0x18] sm:$0xff]
  %v22 = vld [vmem:[%s1 + $0x20] sm:$0xff]
  %v23 = vld [vmem:[%s1 + $0x28] sm:$0xff]
  %v24 = vld [vmem:[%s1 + $0x30] sm:$0xff]
  %v25 = vld [vmem:[%s1 + $0x38] sm:$0xff]
  %v26 = vld [vmem:[%s1 + $0x40] sm:$0xff]
  %v27 = vld [vmem:[%s1 + $0x48] sm:$0xff]
  %v28 = vld [vmem:[%s1 + $0x50] sm:$0xff]
  %v29 = vld [vmem:[%s1 + $0x58] sm:$0xff]
  %v30 = vld [vmem:[%s1 + $0x60] sm:$0xff]
  %v31 = vld [vmem:[%s1 + $0x68] sm:$0xff]
  %v32 = vld [vmem:[%s1 + $0x70] sm:$0xff]
  %v33 = vld [vmem:[%s1 + $0x78] sm:$0xff]
  %v34 = vld [vmem:[%s1 + $0x80] sm:$0xff]
  %v35 = vld [vmem:[%s1 + $0x88] sm:$0xff]
  %v36 = vld [vmem:[%s1 + $0x90] sm:$0xff]
  %v37 = vld [vmem:[%s1 + $0x98] sm:$0xff]
  %v38 = vld [vmem:[%s1 + $0xa0] sm:$0xff]
  %v39 = vld [vmem:[%s1 + $0xa8] sm:$0xff]
  %v40 = vld [vmem:[%s1 + $0xb0] sm:$0xff]
  %v41 = vld [vmem:[%s1 + $0xb8] sm:$0xff]
  %v42 = vld [vmem:[%s1 + $0xc0] sm:$0xff]
  %v43 = vld [vmem:[%s1 + $0xc8] sm:$0xff]
  %v44 = vld [vmem:[%s1 + $0xd0] sm:$0xff]
  %v45 = vld [vmem:[%s1 + $0xd8] sm:$0xff]
  %v46 = vld [vmem:[%s1 + $0xe0] sm:$0xff]
  %v47 = vld [vmem:[%s1 + $0xe8] sm:$0xff]
  %v48 = vld [vmem:[%s1 + $0xf0] sm:$0xff]
  %v49 = vld [vmem:[%s1 + $0xf8] sm:$0xff]
  %v50 = vld [vmem:[%s1 + $0x100] sm:$0xff]
  %v51 = vld [vmem:[%s1 + $0x108] sm:$0xff]
  %v52 = vld [vmem:[%s1 + $0x110] sm:$0xff]
  %v53 = vld [vmem:[%s1 + $0x118] sm:$0xff]
  %v54 = vld [vmem:[%s1 + $0x120] sm:$0xff]
  %v55 = vld [vmem:[%s1 + $0x128] sm:$0xff]
  %v56 = vld [vmem:[%s1 + $0x130] sm:$0xff]
  %v57 = vld [vmem:[%s1 + $0x138] sm:$0xff]
  %v58 = vld [vmem:[%s1 + $0x140] sm:$0xff]
  %v59 = vld [vmem:[%s1 + $0x148] sm:$0xff]
  %v60 = vld [vmem:[%s1 + $0x150] sm:$0xff]
  %v61 = vld [vmem:[%s1 + $0x158] sm:$0xff]
  %v62 = vld [vmem:[%s1 + $0x160] sm:$0xff]
  %v63 = vld [vmem:[%s1 + $0x168] sm:$0xff]
  %v64 = vld [vmem:[%s1 + $0x170] sm:$0xff]
  %v65 = vld [vmem:[%s1 + $0x178] sm:$0xff]
  %v66 = vld [vmem:[%s1 + $0x180] sm:$0xff]
  %v67 = vld [vmem:[%s1 + $0x188] sm:$0xff]
  %v68 = vld [vmem:[%s1 + $0x190] sm:$0xff]
  %v69 = vld [vmem:[%s1 + $0x198] sm:$0xff]
  %v70 = vld [vmem:[%s1 + $0x1a0] sm:$0xff]
  %v71 = vld [vmem:[%s1 + $0x1a8] sm:$0xff]
  %v72 = vld [vmem:[%s1 + $0x1b0] sm:$0xff]
  %v73 = vld [vmem:[%s1 + $0x1b8] sm:$0xff]
  %v74 = vld [vmem:[%s1 + $0x1c0] sm:$0xff]
  %v75 = vld [vmem:[%s1 + $0x1c8] sm:$0xff]
  %v76 = vld [vmem:[%s1 + $0x1d0] sm:$0xff]
  %v77 = vld [vmem:[%s1 + $0x1d8] sm:$0xff]
  %v78 = vld [vmem:[%s1 + $0x1e0] sm:$0xff]
  %v79 = vld [vmem:[%s1 + $0x1e8] sm:$0xff]
  %v80 = vld [vmem:[%s1 + $0x1f0] sm:$0xff]
  %v81 = vld [vmem:[%s1 + $0x1f8] sm:$0xff]
  %v82 = vld [vmem:[%s1 + $0x200] sm:$0xff]
  %v83 = vld [vmem:[%s1 + $0x208] sm:$0xff]
  %v84 = vld [vmem:[%s1 + $0x210] sm:$0xff]
  %v85 = vld [vmem:[%s1 + $0x218] sm:$0xff]
  %v86 = vld [vmem:[%s1 + $0x220] sm:$0xff]
  %v87 = vld [vmem:[%s1 + $0x228] sm:$0xff]
  %v88 = vld [vmem:[%s1 + $0x230] sm:$0xff]
  %v89 = vld [vmem:[%s1 + $0x238] sm:$0xff]
  %v90 = vld [vmem:[%s1 + $0x240] sm:$0xff]
  %v91 = vld [vmem:[%s1 + $0x248] sm:$0xff]
  %v92 = vld [vmem:[%s1 + $0x250] sm:$0xff]
  %v93 = vld [vmem:[%s1 + $0x258] sm:$0xff]
  %v94 = vld [vmem:[%s1 + $0x260] sm:$0xff]
  %v95 = vld [vmem:[%s1 + $0x268] sm:$0xff]
  %v96 = vld [vmem:[%s1 + $0x270] sm:$0xff]
  %v97 = vld [vmem:[%s1 + $0x278] sm:$0xff]
  %v98 = vld [vmem:[%s1 + $0x280] sm:$0xff]
  %v99 = vld [vmem:[%s1 + $0x288] sm:$0xff]
  %v100 = vld [vmem:[%s1 + $0x290] sm:$0xff]
  %v101 = vld [vmem:[%s1 + $0x298] sm:$0xff]
  %v102 = vld [vmem:[%s1 + $0x2a0] sm:$0xff]
  %v103 = vld [vmem:[%s1 + $0x2a8] sm:$0xff]
  %v104 = vld [vmem:[%s1 + $0x2b0] sm:$0xff]
  %v105 = vld [vmem:[%s1 + $0x2b8] sm:$0xff]
  %v106 = vld [vmem:[%s1 + $0x2c0] sm:$0xff]
  %v107 = vld [vmem:[%s1 + $0x2c8] sm:$0xff]
  %v108 = vld [vmem:[%s1 + $0x2d0] sm:$0xff]
  %v109 = vld [vmem:[%s1 + $0x2d8] sm:$0xff]
  %v110 = vld [vmem:[%s1 + $0x2e0] sm:$0xff]
  %v111 = vld [vmem:[%s1 + $0x2e8] sm:$0xff]
  %v112 = vld [vmem:[%s1 + $0x2f0] sm:$0xff]
  %v113 = vld [vmem:[%s1 + $0x2f8] sm:$0xff]
  %v114 = vld [vmem:[%s1 + $0x300] sm:$0xff]
  %v115 = vld [vmem:[%s1 + $0x308] sm:$0xff]
  %v116 = vld [vmem:[%s1 + $0x310] sm:$0xff]
  %v117 = vld [vmem:[%s1 + $0x318] sm:$0xff]
  %v118 = vld [vmem:[%s1 + $0x320] sm:$0xff]
  %v119 = vld [vmem:[%s1 + $0x328] sm:$0xff]
  %v120 = vld [vmem:[%s1 + $0x330] sm:$0xff]
  %v121 = vld [vmem:[%s1 + $0x338] sm:$0xff]
  %v122 = vld [vmem:[%s1 + $0x340] sm:$0xff]
  %v123 = vld [vmem:[%s1 + $0x348] sm:$0xff]
  %v124 = vld [vmem:[%s1 + $0x350] sm:$0xff]
  %v125 = vld [vmem:[%s1 + $0x358] sm:$0xff]
  %v126 = vld [vmem:[%s1 + $0x360] sm:$0xff]
  %v127 = vld [vmem:[%s1 + $0x368] sm:$0xff]
  %v128 = vld [vmem:[%s1 + $0x370] sm:$0xff]
  %v129 = vld [vmem:[%s1 + $0x378] sm:$0xff]
  %v130 = vld [vmem:[%s1 + $0x380] sm:$0xff]
  %v131 = vld [vmem:[%s1 + $0x388] sm:$0xff]
  %v132 = vld [vmem:[%s1 + $0x390] sm:$0xff]
  %v133 = vld [vmem:[%s1 + $0x398] sm:$0xff]
  %v134 = vld [vmem:[%s1 + $0x3a0] sm:$0xff]
  %v135 = vld [vmem:[%s1 + $0x3a8] sm:$0xff]
  %v136 = vld [vmem:[%s1 + $0x3b0] sm:$0xff]
  %v137 = vld [vmem:[%s1 + $0x3b8] sm:$0xff]
  %v138 = vld [vmem:[%s1 + $0x3c0] sm:$0xff]
  %v139 = vld [vmem:[%s1 + $0x3c8] sm:$0xff]
  %v140 = vld [vmem:[%s1 + $0x3d0] sm:$0xff]
  %v141 = vld [vmem:[%s1 + $0x3d8] sm:$0xff]
  %v142 = vld [vmem:[%s1 + $0x3e0] sm:$0xff]
  %v143 = vld [vmem:[%s1 + $0x3e8] sm:$0xff]
  %v144 = vld [vmem:[%s1 + $0x3f0] sm:$0xff]
  %v145 = vld [vmem:[%s1 + $0x3f8] sm:$0xff]
  %v146 = vld [vmem:[%s2] sm:$0x3]
  %v148 = vlaneseq
  %v149 = vshrl.u32 %v148, 7
  %v150 = vsub.s32 0, %v149
  %v151 = vrot.slane %v146, %v150
  %v152 = vlaneseq
  %v153 = vshrl.u32 %v152, 7
  %v154 = vsub.s32 1, %v153
  %v155 = vrot.slane %v146, %v154
  %v162 = vunpack.c.l.b16 %v14
  %v163 = vunpack.c.h.b16 %v14
  %v164 = vunpack.c.l.b16 %v15
  %v165 = vunpack.c.h.b16 %v15
  %v166 = vunpack.c.l.b16 %v16
  %v167 = vunpack.c.h.b16 %v16
  %v168 = vunpack.c.l.b16 %v17
  %v169 = vunpack.c.h.b16 %v17
  %v170 = vpack.c.b16 %v162, %v162
  %v171 = vpack.c.b16 %v163, %v163
  %v172 = vpack.c.b16 %v164, %v164
  %v173 = vpack.c.b16 %v165, %v165
  %v174 = vpack.c.b16 %v166, %v166
  %v175 = vpack.c.b16 %v167, %v167
  %v176 = vpack.c.b16 %v168, %v168
  %v177 = vpack.c.b16 %v169, %v169
  %v314 = vunpack.c.l.b16 %v18
  %v315 = vunpack.c.h.b16 %v18
  %v316 = vunpack.c.l.b16 %v19
  %v317 = vunpack.c.h.b16 %v19
  %v318 = vunpack.c.l.b16 %v20
  %v319 = vunpack.c.h.b16 %v20
  %v320 = vunpack.c.l.b16 %v21
  %v321 = vunpack.c.h.b16 %v21
  %v322 = vunpack.c.l.b16 %v22
  %v323 = vunpack.c.h.b16 %v22
  %v324 = vunpack.c.l.b16 %v23
  %v325 = vunpack.c.h.b16 %v23
  %v326 = vunpack.c.l.b16 %v24
  %v327 = vunpack.c.h.b16 %v24
  %v328 = vunpack.c.l.b16 %v25
  %v329 = vunpack.c.h.b16 %v25
  %v330 = vunpack.c.l.b16 %v26
  %v331 = vunpack.c.h.b16 %v26
  %v332 = vunpack.c.l.b16 %v27
  %v333 = vunpack.c.h.b16 %v27
  %v334 = vunpack.c.l.b16 %v28
  %v335 = vunpack.c.h.b16 %v28
  %v336 = vunpack.c.l.b16 %v29
  %v337 = vunpack.c.h.b16 %v29
  %v338 = vunpack.c.l.b16 %v30
  %v339 = vunpack.c.h.b16 %v30
  %v340 = vunpack.c.l.b16 %v31
  %v341 = vunpack.c.h.b16 %v31
  %v342 = vunpack.c.l.b16 %v32
  %v343 = vunpack.c.h.b16 %v32
  %v344 = vunpack.c.l.b16 %v33
  %v345 = vunpack.c.h.b16 %v33
  %v346 = vunpack.c.l.b16 %v34
  %v347 = vunpack.c.h.b16 %v34
  %v348 = vunpack.c.l.b16 %v35
  %v349 = vunpack.c.h.b16 %v35
  %v350 = vunpack.c.l.b16 %v36
  %v351 = vunpack.c.h.b16 %v36
  %v352 = vunpack.c.l.b16 %v37
  %v353 = vunpack.c.h.b16 %v37
  %v354 = vunpack.c.l.b16 %v38
  %v355 = vunpack.c.h.b16 %v38
  %v356 = vunpack.c.l.b16 %v39
  %v357 = vunpack.c.h.b16 %v39
  %v358 = vunpack.c.l.b16 %v40
  %v359 = vunpack.c.h.b16 %v40
  %v360 = vunpack.c.l.b16 %v41
  %v361 = vunpack.c.h.b16 %v41
  %v362 = vunpack.c.l.b16 %v42
  %v363 = vunpack.c.h.b16 %v42
  %v364 = vunpack.c.l.b16 %v43
  %v365 = vunpack.c.h.b16 %v43
  %v366 = vunpack.c.l.b16 %v44
  %v367 = vunpack.c.h.b16 %v44
  %v368 = vunpack.c.l.b16 %v45
  %v369 = vunpack.c.h.b16 %v45
  %v370 = vunpack.c.l.b16 %v46
  %v371 = vunpack.c.h.b16 %v46
  %v372 = vunpack.c.l.b16 %v47
  %v373 = vunpack.c.h.b16 %v47
  %v374 = vunpack.c.l.b16 %v48
  %v375 = vunpack.c.h.b16 %v48
  %v376 = vunpack.c.l.b16 %v49
  %v377 = vunpack.c.h.b16 %v49
  %v378 = vunpack.c.l.b16 %v50
  %v379 = vunpack.c.h.b16 %v50
  %v380 = vunpack.c.l.b16 %v51
  %v381 = vunpack.c.h.b16 %v51
  %v382 = vunpack.c.l.b16 %v52
  %v383 = vunpack.c.h.b16 %v52
  %v384 = vunpack.c.l.b16 %v53
  %v385 = vunpack.c.h.b16 %v53
  %v386 = vunpack.c.l.b16 %v54
  %v387 = vunpack.c.h.b16 %v54
  %v388 = vunpack.c.l.b16 %v55
  %v389 = vunpack.c.h.b16 %v55
  %v390 = vunpack.c.l.b16 %v56
  %v391 = vunpack.c.h.b16 %v56
  %v392 = vunpack.c.l.b16 %v57
  %v393 = vunpack.c.h.b16 %v57
  %v394 = vunpack.c.l.b16 %v58
  %v395 = vunpack.c.h.b16 %v58
  %v396 = vunpack.c.l.b16 %v59
  %v397 = vunpack.c.h.b16 %v59
  %v398 = vunpack.c.l.b16 %v60
  %v399 = vunpack.c.h.b16 %v60
  %v400 = vunpack.c.l.b16 %v61
  %v401 = vunpack.c.h.b16 %v61
  %v402 = vunpack.c.l.b16 %v62
  %v403 = vunpack.c.h.b16 %v62
  %v404 = vunpack.c.l.b16 %v63
  %v405 = vunpack.c.h.b16 %v63
  %v406 = vunpack.c.l.b16 %v64
  %v407 = vunpack.c.h.b16 %v64
  %v408 = vunpack.c.l.b16 %v65
  %v409 = vunpack.c.h.b16 %v65
  %v410 = vunpack.c.l.b16 %v66
  %v411 = vunpack.c.h.b16 %v66
  %v412 = vunpack.c.l.b16 %v67
  %v413 = vunpack.c.h.b16 %v67
  %v414 = vunpack.c.l.b16 %v68
  %v415 = vunpack.c.h.b16 %v68
  %v416 = vunpack.c.l.b16 %v69
  %v417 = vunpack.c.h.b16 %v69
  %v418 = vunpack.c.l.b16 %v70
  %v419 = vunpack.c.h.b16 %v70
  %v420 = vunpack.c.l.b16 %v71
  %v421 = vunpack.c.h.b16 %v71
  %v422 = vunpack.c.l.b16 %v72
  %v423 = vunpack.c.h.b16 %v72
  %v424 = vunpack.c.l.b16 %v73
  %v425 = vunpack.c.h.b16 %v73
  %v426 = vunpack.c.l.b16 %v74
  %v427 = vunpack.c.h.b16 %v74
  %v428 = vunpack.c.l.b16 %v75
  %v429 = vunpack.c.h.b16 %v75
  %v430 = vunpack.c.l.b16 %v76
  %v431 = vunpack.c.h.b16 %v76
  %v432 = vunpack.c.l.b16 %v77
  %v433 = vunpack.c.h.b16 %v77
  %v434 = vunpack.c.l.b16 %v78
  %v435 = vunpack.c.h.b16 %v78
  %v436 = vunpack.c.l.b16 %v79
  %v437 = vunpack.c.h.b16 %v79
  %v438 = vunpack.c.l.b16 %v80
  %v439 = vunpack.c.h.b16 %v80
  %v440 = vunpack.c.l.b16 %v81
  %v441 = vunpack.c.h.b16 %v81
  %v442 = vunpack.c.l.b16 %v82
  %v443 = vunpack.c.h.b16 %v82
  %v444 = vunpack.c.l.b16 %v83
  %v445 = vunpack.c.h.b16 %v83
  %v446 = vunpack.c.l.b16 %v84
  %v447 = vunpack.c.h.b16 %v84
  %v448 = vunpack.c.l.b16 %v85
  %v449 = vunpack.c.h.b16 %v85
  %v450 = vunpack.c.l.b16 %v86
  %v451 = vunpack.c.h.b16 %v86
  %v452 = vunpack.c.l.b16 %v87
  %v453 = vunpack.c.h.b16 %v87
  %v454 = vunpack.c.l.b16 %v88
  %v455 = vunpack.c.h.b16 %v88
  %v456 = vunpack.c.l.b16 %v89
  %v457 = vunpack.c.h.b16 %v89
  %v458 = vunpack.c.l.b16 %v90
  %v459 = vunpack.c.h.b16 %v90
  %v460 = vunpack.c.l.b16 %v91
  %v461 = vunpack.c.h.b16 %v91
  %v462 = vunpack.c.l.b16 %v92
  %v463 = vunpack.c.h.b16 %v92
  %v464 = vunpack.c.l.b16 %v93
  %v465 = vunpack.c.h.b16 %v93
  %v466 = vunpack.c.l.b16 %v94
  %v467 = vunpack.c.h.b16 %v94
  %v468 = vunpack.c.l.b16 %v95
  %v469 = vunpack.c.h.b16 %v95
  %v470 = vunpack.c.l.b16 %v96
  %v471 = vunpack.c.h.b16 %v96
  %v472 = vunpack.c.l.b16 %v97
  %v473 = vunpack.c.h.b16 %v97
  %v474 = vunpack.c.l.b16 %v98
  %v475 = vunpack.c.h.b16 %v98
  %v476 = vunpack.c.l.b16 %v99
  %v477 = vunpack.c.h.b16 %v99
  %v478 = vunpack.c.l.b16 %v100
  %v479 = vunpack.c.h.b16 %v100
  %v480 = vunpack.c.l.b16 %v101
  %v481 = vunpack.c.h.b16 %v101
  %v482 = vunpack.c.l.b16 %v102
  %v483 = vunpack.c.h.b16 %v102
  %v484 = vunpack.c.l.b16 %v103
  %v485 = vunpack.c.h.b16 %v103
  %v486 = vunpack.c.l.b16 %v104
  %v487 = vunpack.c.h.b16 %v104
  %v488 = vunpack.c.l.b16 %v105
  %v489 = vunpack.c.h.b16 %v105
  %v490 = vunpack.c.l.b16 %v106
  %v491 = vunpack.c.h.b16 %v106
  %v492 = vunpack.c.l.b16 %v107
  %v493 = vunpack.c.h.b16 %v107
  %v494 = vunpack.c.l.b16 %v108
  %v495 = vunpack.c.h.b16 %v108
  %v496 = vunpack.c.l.b16 %v109
  %v497 = vunpack.c.h.b16 %v109
  %v498 = vunpack.c.l.b16 %v110
  %v499 = vunpack.c.h.b16 %v110
  %v500 = vunpack.c.l.b16 %v111
  %v501 = vunpack.c.h.b16 %v111
  %v502 = vunpack.c.l.b16 %v112
  %v503 = vunpack.c.h.b16 %v112
  %v504 = vunpack.c.l.b16 %v113
  %v505 = vunpack.c.h.b16 %v113
  %v506 = vunpack.c.l.b16 %v114
  %v507 = vunpack.c.h.b16 %v114
  %v508 = vunpack.c.l.b16 %v115
  %v509 = vunpack.c.h.b16 %v115
  %v510 = vunpack.c.l.b16 %v116
  %v511 = vunpack.c.h.b16 %v116
  %v512 = vunpack.c.l.b16 %v117
  %v513 = vunpack.c.h.b16 %v117
  %v514 = vunpack.c.l.b16 %v118
  %v515 = vunpack.c.h.b16 %v118
  %v516 = vunpack.c.l.b16 %v119
  %v517 = vunpack.c.h.b16 %v119
  %v518 = vunpack.c.l.b16 %v120
  %v519 = vunpack.c.h.b16 %v120
  %v520 = vunpack.c.l.b16 %v121
  %v521 = vunpack.c.h.b16 %v121
  %v522 = vunpack.c.l.b16 %v122
  %v523 = vunpack.c.h.b16 %v122
  %v524 = vunpack.c.l.b16 %v123
  %v525 = vunpack.c.h.b16 %v123
  %v526 = vunpack.c.l.b16 %v124
  %v527 = vunpack.c.h.b16 %v124
  %v528 = vunpack.c.l.b16 %v125
  %v529 = vunpack.c.h.b16 %v125
  %v530 = vunpack.c.l.b16 %v126
  %v531 = vunpack.c.h.b16 %v126
  %v532 = vunpack.c.l.b16 %v127
  %v533 = vunpack.c.h.b16 %v127
  %v534 = vunpack.c.l.b16 %v128
  %v535 = vunpack.c.h.b16 %v128
  %v536 = vunpack.c.l.b16 %v129
  %v537 = vunpack.c.h.b16 %v129
  %v538 = vunpack.c.l.b16 %v130
  %v539 = vunpack.c.h.b16 %v130
  %v540 = vunpack.c.l.b16 %v131
  %v541 = vunpack.c.h.b16 %v131
  %v542 = vunpack.c.l.b16 %v132
  %v543 = vunpack.c.h.b16 %v132
  %v544 = vunpack.c.l.b16 %v133
  %v545 = vunpack.c.h.b16 %v133
  %v546 = vunpack.c.l.b16 %v134
  %v547 = vunpack.c.h.b16 %v134
  %v548 = vunpack.c.l.b16 %v135
  %v549 = vunpack.c.h.b16 %v135
  %v550 = vunpack.c.l.b16 %v136
  %v551 = vunpack.c.h.b16 %v136
  %v552 = vunpack.c.l.b16 %v137
  %v553 = vunpack.c.h.b16 %v137
  %v554 = vunpack.c.l.b16 %v138
  %v555 = vunpack.c.h.b16 %v138
  %v556 = vunpack.c.l.b16 %v139
  %v557 = vunpack.c.h.b16 %v139
  %v558 = vunpack.c.l.b16 %v140
  %v559 = vunpack.c.h.b16 %v140
  %v560 = vunpack.c.l.b16 %v141
  %v561 = vunpack.c.h.b16 %v141
  %v562 = vunpack.c.l.b16 %v142
  %v563 = vunpack.c.h.b16 %v142
  %v564 = vunpack.c.l.b16 %v143
  %v565 = vunpack.c.h.b16 %v143
  %v566 = vunpack.c.l.b16 %v144
  %v567 = vunpack.c.h.b16 %v144
  %v568 = vunpack.c.l.b16 %v145
  %v569 = vunpack.c.h.b16 %v145
  %v570 = vpack.c.b16 %v316, %v314
  %v571 = vpack.c.b16 %v317, %v315
  %v572 = vpack.c.b16 %v320, %v318
  %v573 = vpack.c.b16 %v321, %v319
  %v574 = vpack.c.b16 %v324, %v322
  %v575 = vpack.c.b16 %v325, %v323
  %v576 = vpack.c.b16 %v328, %v326
  %v577 = vpack.c.b16 %v329, %v327
  %v578 = vpack.c.b16 %v332, %v330
  %v579 = vpack.c.b16 %v333, %v331
  %v580 = vpack.c.b16 %v336, %v334
  %v581 = vpack.c.b16 %v337, %v335
  %v582 = vpack.c.b16 %v340, %v338
  %v583 = vpack.c.b16 %v341, %v339
  %v584 = vpack.c.b16 %v344, %v342
  %v585 = vpack.c.b16 %v345, %v343
  %v586 = vpack.c.b16 %v348, %v346
  %v587 = vpack.c.b16 %v349, %v347
  %v588 = vpack.c.b16 %v352, %v350
  %v589 = vpack.c.b16 %v353, %v351
  %v590 = vpack.c.b16 %v356, %v354
  %v591 = vpack.c.b16 %v357, %v355
  %v592 = vpack.c.b16 %v360, %v358
  %v593 = vpack.c.b16 %v361, %v359
  %v594 = vpack.c.b16 %v364, %v362
  %v595 = vpack.c.b16 %v365, %v363
  %v596 = vpack.c.b16 %v368, %v366
  %v597 = vpack.c.b16 %v369, %v367
  %v598 = vpack.c.b16 %v372, %v370
  %v599 = vpack.c.b16 %v373, %v371
  %v600 = vpack.c.b16 %v376, %v374
  %v601 = vpack.c.b16 %v377, %v375
  %v602 = vpack.c.b16 %v380, %v378
  %v603 = vpack.c.b16 %v381, %v379
  %v604 = vpack.c.b16 %v384, %v382
  %v605 = vpack.c.b16 %v385, %v383
  %v606 = vpack.c.b16 %v388, %v386
  %v607 = vpack.c.b16 %v389, %v387
  %v608 = vpack.c.b16 %v392, %v390
  %v609 = vpack.c.b16 %v393, %v391
  %v610 = vpack.c.b16 %v396, %v394
  %v611 = vpack.c.b16 %v397, %v395
  %v612 = vpack.c.b16 %v400, %v398
  %v613 = vpack.c.b16 %v401, %v399
  %v614 = vpack.c.b16 %v404, %v402
  %v615 = vpack.c.b16 %v405, %v403
  %v616 = vpack.c.b16 %v408, %v406
  %v617 = vpack.c.b16 %v409, %v407
  %v618 = vpack.c.b16 %v412, %v410
  %v619 = vpack.c.b16 %v413, %v411
  %v620 = vpack.c.b16 %v416, %v414
  %v621 = vpack.c.b16 %v417, %v415
  %v622 = vpack.c.b16 %v420, %v418
  %v623 = vpack.c.b16 %v421, %v419
  %v624 = vpack.c.b16 %v424, %v422
  %v625 = vpack.c.b16 %v425, %v423
  %v626 = vpack.c.b16 %v428, %v426
  %v627 = vpack.c.b16 %v429, %v427
  %v628 = vpack.c.b16 %v432, %v430
  %v629 = vpack.c.b16 %v433, %v431
  %v630 = vpack.c.b16 %v436, %v434
  %v631 = vpack.c.b16 %v437, %v435
  %v632 = vpack.c.b16 %v440, %v438
  %v633 = vpack.c.b16 %v441, %v439
  %v634 = vpack.c.b16 %v444, %v442
  %v635 = vpack.c.b16 %v445, %v443
  %v636 = vpack.c.b16 %v448, %v446
  %v637 = vpack.c.b16 %v449, %v447
  %v638 = vpack.c.b16 %v452, %v450
  %v639 = vpack.c.b16 %v453, %v451
  %v640 = vpack.c.b16 %v456, %v454
  %v641 = vpack.c.b16 %v457, %v455
  %v642 = vpack.c.b16 %v460, %v458
  %v643 = vpack.c.b16 %v461, %v459
  %v644 = vpack.c.b16 %v464, %v462
  %v645 = vpack.c.b16 %v465, %v463
  %v646 = vpack.c.b16 %v468, %v466
  %v647 = vpack.c.b16 %v469, %v467
  %v648 = vpack.c.b16 %v472, %v470
  %v649 = vpack.c.b16 %v473, %v471
  %v650 = vpack.c.b16 %v476, %v474
  %v651 = vpack.c.b16 %v477, %v475
  %v652 = vpack.c.b16 %v480, %v478
  %v653 = vpack.c.b16 %v481, %v479
  %v654 = vpack.c.b16 %v484, %v482
  %v655 = vpack.c.b16 %v485, %v483
  %v656 = vpack.c.b16 %v488, %v486
  %v657 = vpack.c.b16 %v489, %v487
  %v658 = vpack.c.b16 %v492, %v490
  %v659 = vpack.c.b16 %v493, %v491
  %v660 = vpack.c.b16 %v496, %v494
  %v661 = vpack.c.b16 %v497, %v495
  %v662 = vpack.c.b16 %v500, %v498
  %v663 = vpack.c.b16 %v501, %v499
  %v664 = vpack.c.b16 %v504, %v502
  %v665 = vpack.c.b16 %v505, %v503
  %v666 = vpack.c.b16 %v508, %v506
  %v667 = vpack.c.b16 %v509, %v507
  %v668 = vpack.c.b16 %v512, %v510
  %v669 = vpack.c.b16 %v513, %v511
  %v670 = vpack.c.b16 %v516, %v514
  %v671 = vpack.c.b16 %v517, %v515
  %v672 = vpack.c.b16 %v520, %v518
  %v673 = vpack.c.b16 %v521, %v519
  %v674 = vpack.c.b16 %v524, %v522
  %v675 = vpack.c.b16 %v525, %v523
  %v676 = vpack.c.b16 %v528, %v526
  %v677 = vpack.c.b16 %v529, %v527
  %v678 = vpack.c.b16 %v532, %v530
  %v679 = vpack.c.b16 %v533, %v531
  %v680 = vpack.c.b16 %v536, %v534
  %v681 = vpack.c.b16 %v537, %v535
  %v682 = vpack.c.b16 %v540, %v538
  %v683 = vpack.c.b16 %v541, %v539
  %v684 = vpack.c.b16 %v544, %v542
  %v685 = vpack.c.b16 %v545, %v543
  %v686 = vpack.c.b16 %v548, %v546
  %v687 = vpack.c.b16 %v549, %v547
  %v688 = vpack.c.b16 %v552, %v550
  %v689 = vpack.c.b16 %v553, %v551
  %v690 = vpack.c.b16 %v556, %v554
  %v691 = vpack.c.b16 %v557, %v555
  %v692 = vpack.c.b16 %v560, %v558
  %v693 = vpack.c.b16 %v561, %v559
  %v694 = vpack.c.b16 %v564, %v562
  %v695 = vpack.c.b16 %v565, %v563
  %v696 = vpack.c.b16 %v568, %v566
  %v697 = vpack.c.b16 %v569, %v567
  %826 = vmatprep.subr.bf16.mxu0 %v571
  %827 = vmatpush1.bf16.msra.mxu0 %v570
  %828 = vmatprep.subr.bf16.mxu0 %v573
  %829 = vmatpush1.bf16.msra.mxu0 %v572
  %830 = vmatprep.subr.bf16.mxu0 %v575
  %831 = vmatpush1.bf16.msra.mxu0 %v574
  %832 = vmatprep.subr.bf16.mxu0 %v577
  %833 = vmatpush1.bf16.msra.mxu0 %v576
  %834 = vmatprep.subr.bf16.mxu0 %v579
  %835 = vmatpush1.bf16.msra.mxu0 %v578
  %836 = vmatprep.subr.bf16.mxu0 %v581
  %837 = vmatpush1.bf16.msra.mxu0 %v580
  %838 = vmatprep.subr.bf16.mxu0 %v583
  %839 = vmatpush1.bf16.msra.mxu0 %v582
  %840 = vmatprep.subr.bf16.mxu0 %v585
  %841 = vmatpush1.bf16.msra.mxu0 %v584
  %842 = vmatprep.subr.bf16.mxu0 %v587
  %843 = vmatpush1.bf16.msra.mxu0 %v586
  %844 = vmatprep.subr.bf16.mxu0 %v589
  %845 = vmatpush1.bf16.msra.mxu0 %v588
  %846 = vmatprep.subr.bf16.mxu0 %v591
  %847 = vmatpush1.bf16.msra.mxu0 %v590
  %848 = vmatprep.subr.bf16.mxu0 %v593
  %849 = vmatpush1.bf16.msra.mxu0 %v592
  %850 = vmatprep.subr.bf16.mxu0 %v595
  %851 = vmatpush1.bf16.msra.mxu0 %v594
  %852 = vmatprep.subr.bf16.mxu0 %v597
  %853 = vmatpush1.bf16.msra.mxu0 %v596
  %854 = vmatprep.subr.bf16.mxu0 %v599
  %855 = vmatpush1.bf16.msra.mxu0 %v598
  %856 = vmatprep.subr.bf16.mxu0 %v601
  %857 = vmatpush1.bf16.msra.mxu0 %v600
  %858 = vmatprep.mubr.bf16.mxu0 %v171
  %859 = vmatmul.mubr.bf16.gmra.mrb[0].mxu0 %v170
  %v860 = vpop.f32.mrb[0].mxu0
  %v861 = vadd.f32 %v151, %v860
  %v862 = vpop.f32.mrb[0].mxu0
  %v863 = vadd.f32 %v155, %v862
  %v864 = vpop.f32.mrb[0].mxu0
  %v865 = vpop.f32.mrb[0].mxu0
  %866 = vdwg.mxu0
  %867 = vmatprep.subr.bf16.mxu0 %v603
  %868 = vmatpush1.bf16.msra.mxu0 %v602
  %869 = vmatprep.subr.bf16.mxu0 %v605
  %870 = vmatpush1.bf16.msra.mxu0 %v604
  %871 = vmatprep.subr.bf16.mxu0 %v607
  %872 = vmatpush1.bf16.msra.mxu0 %v606
  %873 = vmatprep.subr.bf16.mxu0 %v609
  %874 = vmatpush1.bf16.msra.mxu0 %v608
  %875 = vmatprep.subr.bf16.mxu0 %v611
  %876 = vmatpush1.bf16.msra.mxu0 %v610
  %877 = vmatprep.subr.bf16.mxu0 %v613
  %878 = vmatpush1.bf16.msra.mxu0 %v612
  %879 = vmatprep.subr.bf16.mxu0 %v615
  %880 = vmatpush1.bf16.msra.mxu0 %v614
  %881 = vmatprep.subr.bf16.mxu0 %v617
  %882 = vmatpush1.bf16.msra.mxu0 %v616
  %883 = vmatprep.subr.bf16.mxu0 %v619
  %884 = vmatpush1.bf16.msra.mxu0 %v618
  %885 = vmatprep.subr.bf16.mxu0 %v621
  %886 = vmatpush1.bf16.msra.mxu0 %v620
  %887 = vmatprep.subr.bf16.mxu0 %v623
  %888 = vmatpush1.bf16.msra.mxu0 %v622
  %889 = vmatprep.subr.bf16.mxu0 %v625
  %890 = vmatpush1.bf16.msra.mxu0 %v624
  %891 = vmatprep.subr.bf16.mxu0 %v627
  %892 = vmatpush1.bf16.msra.mxu0 %v626
  %893 = vmatprep.subr.bf16.mxu0 %v629
  %894 = vmatpush1.bf16.msra.mxu0 %v628
  %895 = vmatprep.subr.bf16.mxu0 %v631
  %896 = vmatpush1.bf16.msra.mxu0 %v630
  %897 = vmatprep.subr.bf16.mxu0 %v633
  %898 = vmatpush1.bf16.msra.mxu0 %v632
  %899 = vmatprep.mubr.bf16.mxu0 %v173
  %900 = vmatmul.mubr.bf16.gmra.mrb[0].mxu0 %v172
  %v901 = vpop.f32.mrb[0].mxu0
  %v902 = vadd.f32 %v861, %v901
  %v903 = vpop.f32.mrb[0].mxu0
  %v904 = vadd.f32 %v863, %v903
  %v905 = vpop.f32.mrb[0].mxu0
  %v906 = vpop.f32.mrb[0].mxu0
  %907 = vdwg.mxu0
  %908 = vmatprep.subr.bf16.mxu0 %v635
  %909 = vmatpush1.bf16.msra.mxu0 %v634
  %910 = vmatprep.subr.bf16.mxu0 %v637
  %911 = vmatpush1.bf16.msra.mxu0 %v636
  %912 = vmatprep.subr.bf16.mxu0 %v639
  %913 = vmatpush1.bf16.msra.mxu0 %v638
  %914 = vmatprep.subr.bf16.mxu0 %v641
  %915 = vmatpush1.bf16.msra.mxu0 %v640
  %916 = vmatprep.subr.bf16.mxu0 %v643
  %917 = vmatpush1.bf16.msra.mxu0 %v642
  %918 = vmatprep.subr.bf16.mxu0 %v645
  %919 = vmatpush1.bf16.msra.mxu0 %v644
  %920 = vmatprep.subr.bf16.mxu0 %v647
  %921 = vmatpush1.bf16.msra.mxu0 %v646
  %922 = vmatprep.subr.bf16.mxu0 %v649
  %923 = vmatpush1.bf16.msra.mxu0 %v648
  %924 = vmatprep.subr.bf16.mxu0 %v651
  %925 = vmatpush1.bf16.msra.mxu0 %v650
  %926 = vmatprep.subr.bf16.mxu0 %v653
  %927 = vmatpush1.bf16.msra.mxu0 %v652
  %928 = vmatprep.subr.bf16.mxu0 %v655
  %929 = vmatpush1.bf16.msra.mxu0 %v654
  %930 = vmatprep.subr.bf16.mxu0 %v657
  %931 = vmatpush1.bf16.msra.mxu0 %v656
  %932 = vmatprep.subr.bf16.mxu0 %v659
  %933 = vmatpush1.bf16.msra.mxu0 %v658
  %934 = vmatprep.subr.bf16.mxu0 %v661
  %935 = vmatpush1.bf16.msra.mxu0 %v660
  %936 = vmatprep.subr.bf16.mxu0 %v663
  %937 = vmatpush1.bf16.msra.mxu0 %v662
  %938 = vmatprep.subr.bf16.mxu0 %v665
  %939 = vmatpush1.bf16.msra.mxu0 %v664
  %940 = vmatprep.mubr.bf16.mxu0 %v175
  %941 = vmatmul.mubr.bf16.gmra.mrb[0].mxu0 %v174
  %v942 = vpop.f32.mrb[0].mxu0
  %v943 = vadd.f32 %v902, %v942
  %v944 = vpop.f32.mrb[0].mxu0
  %v945 = vadd.f32 %v904, %v944
  %v946 = vpop.f32.mrb[0].mxu0
  %v947 = vpop.f32.mrb[0].mxu0
  %948 = vdwg.mxu0
  %949 = vmatprep.subr.bf16.mxu0 %v667
  %950 = vmatpush1.bf16.msra.mxu0 %v666
  %951 = vmatprep.subr.bf16.mxu0 %v669
  %952 = vmatpush1.bf16.msra.mxu0 %v668
  %953 = vmatprep.subr.bf16.mxu0 %v671
  %954 = vmatpush1.bf16.msra.mxu0 %v670
  %955 = vmatprep.subr.bf16.mxu0 %v673
  %956 = vmatpush1.bf16.msra.mxu0 %v672
  %957 = vmatprep.subr.bf16.mxu0 %v675
  %958 = vmatpush1.bf16.msra.mxu0 %v674
  %959 = vmatprep.subr.bf16.mxu0 %v677
  %960 = vmatpush1.bf16.msra.mxu0 %v676
  %961 = vmatprep.subr.bf16.mxu0 %v679
  %962 = vmatpush1.bf16.msra.mxu0 %v678
  %963 = vmatprep.subr.bf16.mxu0 %v681
  %964 = vmatpush1.bf16.msra.mxu0 %v680
  %965 = vmatprep.subr.bf16.mxu0 %v683
  %966 = vmatpush1.bf16.msra.mxu0 %v682
  %967 = vmatprep.subr.bf16.mxu0 %v685
  %968 = vmatpush1.bf16.msra.mxu0 %v684
  %969 = vmatprep.subr.bf16.mxu0 %v687
  %970 = vmatpush1.bf16.msra.mxu0 %v686
  %971 = vmatprep.subr.bf16.mxu0 %v689
  %972 = vmatpush1.bf16.msra.mxu0 %v688
  %973 = vmatprep.subr.bf16.mxu0 %v691
  %974 = vmatpush1.bf16.msra.mxu0 %v690
  %975 = vmatprep.subr.bf16.mxu0 %v693
  %976 = vmatpush1.bf16.msra.mxu0 %v692
  %977 = vmatprep.subr.bf16.mxu0 %v695
  %978 = vmatpush1.bf16.msra.mxu0 %v694
  %979 = vmatprep.subr.bf16.mxu0 %v697
  %980 = vmatpush1.bf16.msra.mxu0 %v696
  %981 = vmatprep.mubr.bf16.mxu0 %v177
  %982 = vmatmul.mubr.bf16.gmra.mrb[0].mxu0 %v176
  %v983 = vpop.f32.mrb[0].mxu0
  %v984 = vadd.f32 %v943, %v983
  %v985 = vpop.f32.mrb[0].mxu0
  %v986 = vadd.f32 %v945, %v985
  %v987 = vpop.f32.mrb[0].mxu0
  %v988 = vpop.f32.mrb[0].mxu0
  %989 = vdwg.mxu0
  %v990 = vtanh.pop %v984
  %v991 = vtanh.pop %v986
  %992 = vst [vmem:[%s3] sm:$0xff] %v990
  %993 = vst [vmem:[%s3 + $0x8] sm:$0xff] %v991
  // Predicated region
  $region14: #{generator_forward.3} parent=0 // pred_check
    _
  $region15: #{generator_forward.3} parent=0 // pred_check_branch
    %995 = sbr.rel (0) target = $region17
  $region16: #{generator_forward.3} parent=0 // pred_region
    _
  $region17: #{generator_forward.3} parent=0 // pred_fallthru
    _
  // Predicated region
  $region18: #{generator_forward.3} parent=0 // pred_check
    _
  $region19: #{generator_forward.3} parent=0 // pred_check_branch
    %997 = sbr.rel (0) target = $region21
  $region20: #{generator_forward.3} parent=0 // pred_region
    _
  $region21: #{generator_forward.3} parent=0 // pred_fallthru
    _

// kernel: generator_forward.2
$region0: #{generator_forward.2}
  #allocation0 [shape = 'u32[]', space=smem, size = 0x4, offset = 0x4, fixed_abs, tag = 'smem constant byte address 0x4 - core index']
  #allocation1 [shape = 'u32[144,128]{1,0:T(1,128)}', space=vmem, size = 0x12000, scoped, tag = 'internal scratch']
  %s0 = inlined_call_operand.hbm [shape: f32[8,32], index: 0, kind: input, shape index: {}]
  %s1 = inlined_call_operand.vmem [shape: bf16[32,128], index: 1, kind: input, shape index: {}]
  %s2 = inlined_call_operand.vmem [shape: f32[1,128], index: 2, kind: input, shape index: {}]
  %s3 = inlined_call_operand.hbm [shape: bf16[128,256], index: 3, kind: input, shape index: {}]
  %s4 = inlined_call_operand.hbm [shape: f32[1,256], index: 4, kind: input, shape index: {}]
  %s5 = inlined_call_operand.hbm [shape: f32[1,256], index: 5, kind: input, shape index: {}]
  %s6 = inlined_call_operand.hbm [shape: f32[1,256], index: 6, kind: input, shape index: {}]
  %s7 = inlined_call_operand.hbm [shape: bf16[256,512], index: 7, kind: input, shape index: {}]
  %s8 = inlined_call_operand.hbm [shape: f32[1,512], index: 8, kind: input, shape index: {}]
  %s9 = inlined_call_operand.vmem [shape: f32[1,512], index: 9, kind: input, shape index: {}]
  %s10 = inlined_call_operand.hbm [shape: f32[1,512], index: 10, kind: input, shape index: {}]
  %s11 = inlined_call_operand.hbm [shape: bf16[512,1024], index: 11, kind: input, shape index: {}]
  %s12 = inlined_call_operand.vmem [shape: f32[1,1024], index: 12, kind: input, shape index: {}]
  %s13 = inlined_call_operand.vmem [shape: f32[1,1024], index: 13, kind: input, shape index: {}]
  %s14 = inlined_call_operand.hbm [shape: f32[1,1024], index: 14, kind: input, shape index: {}]
  %s15 = inlined_call_operand.vmem [shape: bf16[8,1024], index: 15, kind: output, shape index: {}]
  %s16 = sld [smem:[#allocation0]]
  $region110: #{generator_forward.2} parent=0
    _
  %s18 = ssub.s32 1, %s16
  %s19 = scalar_select 0, %s18, %s16
  $region1: #{generator_forward.2} parent=0
    #allocation2 [shape = 'u8[4096]{0}', space=vmem, size = 0x1000, scoped, tag = 'input window, operand 0, single buffered']
    #allocation3 [shape = 's32[1]{0}', space=sflag, size = 0x4, scoped, tag = 'scoped memory for generator_forward.2']
    #allocation4 [shape = 'u8[65536]{0}', space=vmem, size = 0x10000, scoped, tag = 'input window, operand 3, single buffered']
    #allocation5 [shape = 's32[1]{0}', space=sflag, size = 0x4, scoped, tag = 'scoped memory for generator_forward.2']
    #allocation6 [shape = 'u8[1024]{0}', space=vmem, size = 0x400, scoped, tag = 'input window, operand 4, single buffered']
    #allocation7 [shape = 'u8[1024]{0}', space=vmem, size = 0x400, scoped, tag = 'input window, operand 5, single buffered']
    #allocation8 [shape = 's32[1]{0}', space=sflag, size = 0x4, scoped, tag = 'scoped memory for generator_forward.2']
    #allocation9 [shape = 'u8[1024]{0}', space=vmem, size = 0x400, scoped, tag = 'input window, operand 6, single buffered']
    #allocation10 [shape = 'u8[262144]{0}', space=vmem, size = 0x40000, scoped, tag = 'input window, operand 7, single buffered']
    #allocation11 [shape = 's32[1]{0}', space=sflag, size = 0x4, scoped, tag = 'scoped memory for generator_forward.2']
    #allocation12 [shape = 'u8[2048]{0}', space=vmem, size = 0x800, scoped, tag = 'input window, operand 8, single buffered']
    #allocation13 [shape = 'u8[2048]{0}', space=vmem, size = 0x800, scoped, tag = 'input window, operand 10, single buffered']
    #allocation14 [shape = 's32[1]{0}', space=sflag, size = 0x4, scoped, tag = 'scoped memory for generator_forward.2']
    #allocation15 [shape = 'u8[1048576]{0}', space=vmem, size = 0x100000, scoped, tag = 'input window, operand 11, single buffered']
    #allocation16 [shape = 'u8[4096]{0}', space=vmem, size = 0x1000, scoped, tag = 'input window, operand 14, single buffered']
    #allocation17 [shape = 's32[1]{0}', space=sflag, size = 0x4, scoped, tag = 'scoped memory for generator_forward.2']
    %20 = vsyncpa [#allocation3], 0
    %21 = vsyncpa [#allocation5], 0
    %22 = vsyncpa [#allocation8], 0
    %23 = vsyncpa [#allocation11], 0
    %24 = vsyncpa [#allocation14], 0
    %25 = vsyncpa [#allocation17], 0
    // Predicated region
    $region2: #{generator_forward.2} parent=1 // pred_check
      _
    $region3: #{generator_forward.2} parent=1 // pred_check_branch
      %27 = sbr.rel (0) target = $region5
    $region4: #{generator_forward.2} parent=1 // pred_region
      %s29 = ssub.s32 128, 128
      %30 = vsyncadd [#allocation3], %s29
      %s32 = sshll.u32 [#allocation2], 4
      %s33 = int_to_ptr.vmem [resolvable:$true] %s32
      %35 = dma.hbm_to_vmem [thread:$0]  %s0, 128, %s33, [#allocation3]
    $region5: #{generator_forward.2} parent=1 // pred_fallthru
      _
    // Predicated region
    $region6: #{generator_forward.2} parent=1 // pred_check
      _
    $region7: #{generator_forward.2} parent=1 // pred_check_branch
      %37 = sbr.rel (0) target = $region9
    $region8: #{generator_forward.2} parent=1 // pred_region
      _
    $region9: #{generator_forward.2} parent=1 // pred_fallthru
      _
    // Predicated region
    $region10: #{generator_forward.2} parent=1 // pred_check
      _
    $region11: #{generator_forward.2} parent=1 // pred_check_branch
      %39 = sbr.rel (0) target = $region13
    $region12: #{generator_forward.2} parent=1 // pred_region
      _
    $region13: #{generator_forward.2} parent=1 // pred_fallthru
      _
    // Predicated region
    $region14: #{generator_forward.2} parent=1 // pred_check
      _
    $region15: #{generator_forward.2} parent=1 // pred_check_branch
      %41 = sbr.rel (0) target = $region17
    $region16: #{generator_forward.2} parent=1 // pred_region
      %s43 = ssub.s32 2048, 2048
      %44 = vsyncadd [#allocation5], %s43
      %s45 = sshll.u32 [#allocation4], 4
      %s46 = int_to_ptr.vmem [resolvable:$true] %s45
      %51 = dma.hbm_to_vmem [thread:$0]  %s3, 2048, %s46, [#allocation5], 128, 128, 8
    $region17: #{generator_forward.2} parent=1 // pred_fallthru
      _
    // Predicated region
    $region18: #{generator_forward.2} parent=1 // pred_check
      _
    $region19: #{generator_forward.2} parent=1 // pred_check_branch
      %53 = sbr.rel (0) target = $region21
    $region20: #{generator_forward.2} parent=1 // pred_region
      %s55 = ssub.s32 32, 32
      %56 = vsyncadd [#allocation5], %s55
      %s58 = sshll.u32 [#allocation6], 4
      %s59 = int_to_ptr.vmem [resolvable:$true] %s58
      %61 = dma.hbm_to_vmem [thread:$0]  %s4, 32, %s59, [#allocation5]
    $region21: #{generator_forward.2} parent=1 // pred_fallthru
      _
    // Predicated region
    $region22: #{generator_forward.2} parent=1 // pred_check
      _
    $region23: #{generator_forward.2} parent=1 // pred_check_branch
      %63 = sbr.rel (0) target = $region25
    $region24: #{generator_forward.2} parent=1 // pred_region
      %s65 = ssub.s32 32, 32
      %66 = vsyncadd [#allocation8], %s65
      %s68 = sshll.u32 [#allocation7], 4
      %s69 = int_to_ptr.vmem [resolvable:$true] %s68
      %71 = dma.hbm_to_vmem [thread:$0]  %s5, 32, %s69, [#allocation8]
    $region25: #{generator_forward.2} parent=1 // pred_fallthru
      _
    // Predicated region
    $region26: #{generator_forward.2} parent=1 // pred_check
      _
    $region27: #{generator_forward.2} parent=1 // pred_check_branch
      %73 = sbr.rel (0) target = $region29
    $region28: #{generator_forward.2} parent=1 // pred_region
      %s75 = ssub.s32 32, 32
      %76 = vsyncadd [#allocation8], %s75
      %s78 = sshll.u32 [#allocation9], 4
      %s79 = int_to_ptr.vmem [resolvable:$true] %s78
      %81 = dma.hbm_to_vmem [thread:$0]  %s6, 32, %s79, [#allocation8]
    $region29: #{generator_forward.2} parent=1 // pred_fallthru
      _
    // Predicated region
    $region30: #{generator_forward.2} parent=1 // pred_check
      _
    $region31: #{generator_forward.2} parent=1 // pred_check_branch
      %83 = sbr.rel (0) target = $region33
    $region32: #{generator_forward.2} parent=1 // pred_region
      %s85 = ssub.s32 8192, 8192
      %86 = vsyncadd [#allocation11], %s85
      %s87 = sshll.u32 [#allocation10], 4
      %s88 = int_to_ptr.vmem [resolvable:$true] %s87
      %93 = dma.hbm_to_vmem [thread:$0]  %s7, 8192, %s88, [#allocation11], 256, 256, 16
    $region33: #{generator_forward.2} parent=1 // pred_fallthru
      _
    // Predicated region
    $region34: #{generator_forward.2} parent=1 // pred_check
      _
    $region35: #{generator_forward.2} parent=1 // pred_check_branch
      %95 = sbr.rel (0) target = $region37
    $region36: #{generator_forward.2} parent=1 // pred_region
      %s97 = ssub.s32 64, 64
      %98 = vsyncadd [#allocation11], %s97
      %s100 = sshll.u32 [#allocation12], 4
      %s101 = int_to_ptr.vmem [resolvable:$true] %s100
      %103 = dma.hbm_to_vmem [thread:$0]  %s8, 64, %s101, [#allocation11]
    $region37: #{generator_forward.2} parent=1 // pred_fallthru
      _
    // Predicated region
    $region38: #{generator_forward.2} parent=1 // pred_check
      _
    $region39: #{generator_forward.2} parent=1 // pred_check_branch
      %105 = sbr.rel (0) target = $region41
    $region40: #{generator_forward.2} parent=1 // pred_region
      _
    $region41: #{generator_forward.2} parent=1 // pred_fallthru
      _
    // Predicated region
    $region42: #{generator_forward.2} parent=1 // pred_check
      _
    $region43: #{generator_forward.2} parent=1 // pred_check_branch
      %107 = sbr.rel (0) target = $region45
    $region44: #{generator_forward.2} parent=1 // pred_region
      %s109 = ssub.s32 64, 64
      %110 = vsyncadd [#allocation14], %s109
      %s112 = sshll.u32 [#allocation13], 4
      %s113 = int_to_ptr.vmem [resolvable:$true] %s112
      %115 = dma.hbm_to_vmem [thread:$0]  %s10, 64, %s113, [#allocation14]
    $region45: #{generator_forward.2} parent=1 // pred_fallthru
      _
    // Predicated region
    $region46: #{generator_forward.2} parent=1 // pred_check
      _
    $region47: #{generator_forward.2} parent=1 // pred_check_branch
      %117 = sbr.rel (0) target = $region49
    $region48: #{generator_forward.2} parent=1 // pred_region
      %s119 = ssub.s32 32768, 32768
      %120 = vsyncadd [#allocation14], %s119
      %s121 = sshll.u32 [#allocation15], 4
      %s122 = int_to_ptr.vmem [resolvable:$true] %s121
      %127 = dma.hbm_to_vmem [thread:$0]  %s11, 32768, %s122, [#allocation14], 512, 512, 32
    $region49: #{generator_forward.2} parent=1 // pred_fallthru
      _
    // Predicated region
    $region50: #{generator_forward.2} parent=1 // pred_check
      _
    $region51: #{generator_forward.2} parent=1 // pred_check_branch
      %129 = sbr.rel (0) target = $region53
    $region52: #{generator_forward.2} parent=1 // pred_region
      _
    $region53: #{generator_forward.2} parent=1 // pred_fallthru
      _
    // Predicated region
    $region54: #{generator_forward.2} parent=1 // pred_check
      _
    $region55: #{generator_forward.2} parent=1 // pred_check_branch
      %131 = sbr.rel (0) target = $region57
    $region56: #{generator_forward.2} parent=1 // pred_region
      _
    $region57: #{generator_forward.2} parent=1 // pred_fallthru
      _
    // Predicated region
    $region58: #{generator_forward.2} parent=1 // pred_check
      _
    $region59: #{generator_forward.2} parent=1 // pred_check_branch
      %133 = sbr.rel (0) target = $region61
    $region60: #{generator_forward.2} parent=1 // pred_region
      %s135 = ssub.s32 128, 128
      %136 = vsyncadd [#allocation17], %s135
      %s138 = sshll.u32 [#allocation16], 4
      %s139 = int_to_ptr.vmem [resolvable:$true] %s138
      %141 = dma.hbm_to_vmem [thread:$0]  %s14, 128, %s139, [#allocation17]
    $region61: #{generator_forward.2} parent=1 // pred_fallthru
      _
    // Predicated region
    $region62: #{generator_forward.2} parent=1 // pred_check
      _
    $region63: #{generator_forward.2} parent=1 // pred_check_branch
      %143 = sbr.rel (0) target = $region65
    $region64: #{generator_forward.2} parent=1 // pred_region
      %144 = dma.done [#allocation3], 128
    $region65: #{generator_forward.2} parent=1 // pred_fallthru
      _
    // Predicated region
    $region66: #{generator_forward.2} parent=1 // pred_check
      _
    $region67: #{generator_forward.2} parent=1 // pred_check_branch
      %146 = sbr.rel (0) target = $region69
    $region68: #{generator_forward.2} parent=1 // pred_region
      %147 = dma.done [#allocation5], 2048
    $region69: #{generator_forward.2} parent=1 // pred_fallthru
      _
    // Predicated region
    $region70: #{generator_forward.2} parent=1 // pred_check
      _
    $region71: #{generator_forward.2} parent=1 // pred_check_branch
      %149 = sbr.rel (0) target = $region73
    $region72: #{generator_forward.2} parent=1 // pred_region
      %150 = dma.done [#allocation5], 32
    $region73: #{generator_forward.2} parent=1 // pred_fallthru
      _
    // Predicated region
    $region74: #{generator_forward.2} parent=1 // pred_check
      _
    $region75: #{generator_forward.2} parent=1 // pred_check_branch
      %152 = sbr.rel (0) target = $region77
    $region76: #{generator_forward.2} parent=1 // pred_region
      %153 = dma.done [#allocation8], 32
    $region77: #{generator_forward.2} parent=1 // pred_fallthru
      _
    // Predicated region
    $region78: #{generator_forward.2} parent=1 // pred_check
      _
    $region79: #{generator_forward.2} parent=1 // pred_check_branch
      %155 = sbr.rel (0) target = $region81
    $region80: #{generator_forward.2} parent=1 // pred_region
      %156 = dma.done [#allocation8], 32
    $region81: #{generator_forward.2} parent=1 // pred_fallthru
      _
    // Predicated region
    $region82: #{generator_forward.2} parent=1 // pred_check
      _
    $region83: #{generator_forward.2} parent=1 // pred_check_branch
      %158 = sbr.rel (0) target = $region85
    $region84: #{generator_forward.2} parent=1 // pred_region
      %159 = dma.done [#allocation11], 8192
    $region85: #{generator_forward.2} parent=1 // pred_fallthru
      _
    // Predicated region
    $region86: #{generator_forward.2} parent=1 // pred_check
      _
    $region87: #{generator_forward.2} parent=1 // pred_check_branch
      %161 = sbr.rel (0) target = $region89
    $region88: #{generator_forward.2} parent=1 // pred_region
      %162 = dma.done [#allocation11], 64
    $region89: #{generator_forward.2} parent=1 // pred_fallthru
      _
    // Predicated region
    $region90: #{generator_forward.2} parent=1 // pred_check
      _
    $region91: #{generator_forward.2} parent=1 // pred_check_branch
      %164 = sbr.rel (0) target = $region93
    $region92: #{generator_forward.2} parent=1 // pred_region
      %165 = dma.done [#allocation14], 64
    $region93: #{generator_forward.2} parent=1 // pred_fallthru
      _
    // Predicated region
    $region94: #{generator_forward.2} parent=1 // pred_check
      _
    $region95: #{generator_forward.2} parent=1 // pred_check_branch
      %167 = sbr.rel (0) target = $region97
    $region96: #{generator_forward.2} parent=1 // pred_region
      %168 = dma.done [#allocation14], 32768
    $region97: #{generator_forward.2} parent=1 // pred_fallthru
      _
    // Predicated region
    $region98: #{generator_forward.2} parent=1 // pred_check
      _
    $region99: #{generator_forward.2} parent=1 // pred_check_branch
      %170 = sbr.rel (0) target = $region101
    $region100: #{generator_forward.2} parent=1 // pred_region
      %171 = dma.done [#allocation17], 128
    $region101: #{generator_forward.2} parent=1 // pred_fallthru
      _
    %v173 = vld [vmem:[#allocation2] sm:$0xff]
    %v174 = vpack.c.bf16 %v173, %v173
    %v175 = vld [vmem:[%s1] sm:$0xf]
    %v176 = vld [vmem:[%s1 + $0x4] sm:$0xf]
    %v177 = vld [vmem:[%s1 + $0x8] sm:$0xf]
    %v178 = vld [vmem:[%s1 + $0xc] sm:$0xf]
    %v179 = vld [vmem:[%s2] sm:$0x1]
    %v181 = vlaneseq
    %v182 = vshrl.u32 %v181, 7
    %v183 = vsub.s32 0, %v182
    %v184 = vrot.slane %v179, %v183
    %v190 = vunpack.c.l.b16 %v175
    %v191 = vunpack.c.l.b16 %v176
    %v192 = vunpack.c.l.b16 %v177
    %v193 = vunpack.c.l.b16 %v178
    %v194 = vpack.c.b16 %v191, %v190
    %v195 = vpack.c.b16 %v193, %v192
    %vm198 = vcmask 261120
    %v200 = vsel %vm198, %v174, 0
    %202 = vmatprep.subr.bf16.mxu0 0
    %203 = vmatpush1.bf16.msra.mxu0 %v194
    %204 = vmatprep.subr.bf16.mxu0 0
    %205 = vmatpush1.bf16.msra.mxu0 %v195
    %206 = vmatprep.subr.bf16.mxu0 0
    %207 = vmatpush1.bf16.msra.mxu0 0
    %208 = vmatprep.subr.bf16.mxu0 0
    %209 = vmatpush1.bf16.msra.mxu0 0
    %210 = vmatprep.subr.bf16.mxu0 0
    %211 = vmatpush1.bf16.msra.mxu0 0
    %212 = vmatprep.subr.bf16.mxu0 0
    %213 = vmatpush1.bf16.msra.mxu0 0
    %214 = vmatprep.subr.bf16.mxu0 0
    %215 = vmatpush1.bf16.msra.mxu0 0
    %216 = vmatprep.subr.bf16.mxu0 0
    %217 = vmatpush1.bf16.msra.mxu0 0
    %218 = vmatprep.subr.bf16.mxu0 0
    %219 = vmatpush1.bf16.msra.mxu0 0
    %220 = vmatprep.subr.bf16.mxu0 0
    %221 = vmatpush1.bf16.msra.mxu0 0
    %222 = vmatprep.subr.bf16.mxu0 0
    %223 = vmatpush1.bf16.msra.mxu0 0
    %224 = vmatprep.subr.bf16.mxu0 0
    %225 = vmatpush1.bf16.msra.mxu0 0
    %226 = vmatprep.subr.bf16.mxu0 0
    %227 = vmatpush1.bf16.msra.mxu0 0
    %228 = vmatprep.subr.bf16.mxu0 0
    %229 = vmatpush1.bf16.msra.mxu0 0
    %230 = vmatprep.subr.bf16.mxu0 0
    %231 = vmatpush1.bf16.msra.mxu0 0
    %232 = vmatprep.subr.bf16.mxu0 0
    %233 = vmatpush1.bf16.msra.mxu0 0
    %234 = vmatprep.mubr.bf16.mxu0 0
    %235 = vmatmul.mubr.bf16.gmra.mrb[0].mxu0 %v200
    %v236 = vpop.f32.mrb[0].mxu0
    %v237 = vadd.f32 %v184, %v236
    %v238 = vpop.f32.mrb[0].mxu0
    %v239 = vpop.f32.mrb[0].mxu0
    %v240 = vpop.f32.mrb[0].mxu0
    %241 = vdwg.mxu0
    %v242 = vmul.f32 %v237, 0.2
    %v243 = vmax.f32 %v237, %v242
    %v244 = vpack.c.bf16 %v243, %v243
    %v245 = vld [vmem:[#allocation4] sm:$0xff]
    %v246 = vld [vmem:[#allocation4 + $0x8] sm:$0xff]
    %v247 = vld [vmem:[#allocation4 + $0x10] sm:$0xff]
    %v248 = vld [vmem:[#allocation4 + $0x18] sm:$0xff]
    %v249 = vld [vmem:[#allocation4 + $0x20] sm:$0xff]
    %v250 = vld [vmem:[#allocation4 + $0x28] sm:$0xff]
    %v251 = vld [vmem:[#allocation4 + $0x30] sm:$0xff]
    %v252 = vld [vmem:[#allocation4 + $0x38] sm:$0xff]
    %v253 = vld [vmem:[#allocation4 + $0x40] sm:$0xff]
    %v254 = vld [vmem:[#allocation4 + $0x48] sm:$0xff]
    %v255 = vld [vmem:[#allocation4 + $0x50] sm:$0xff]
    %v256 = vld [vmem:[#allocation4 + $0x58] sm:$0xff]
    %v257 = vld [vmem:[#allocation4 + $0x60] sm:$0xff]
    %v258 = vld [vmem:[#allocation4 + $0x68] sm:$0xff]
    %v259 = vld [vmem:[#allocation4 + $0x70] sm:$0xff]
    %v260 = vld [vmem:[#allocation4 + $0x78] sm:$0xff]
    %v261 = vld [vmem:[#allocation6] sm:$0x3]
    %v263 = vlaneseq
    %v264 = vshrl.u32 %v263, 7
    %v265 = vsub.s32 0, %v264
    %v266 = vrot.slane %v261, %v265
    %v267 = vlaneseq
    %v268 = vshrl.u32 %v267, 7
    %v269 = vsub.s32 1, %v268
    %v270 = vrot.slane %v261, %v269
    %v289 = vunpack.c.l.b16 %v245
    %v290 = vunpack.c.h.b16 %v245
    %v291 = vunpack.c.l.b16 %v246
    %v292 = vunpack.c.h.b16 %v246
    %v293 = vunpack.c.l.b16 %v247
    %v294 = vunpack.c.h.b16 %v247
    %v295 = vunpack.c.l.b16 %v248
    %v296 = vunpack.c.h.b16 %v248
    %v297 = vunpack.c.l.b16 %v249
    %v298 = vunpack.c.h.b16 %v249
    %v299 = vunpack.c.l.b16 %v250
    %v300 = vunpack.c.h.b16 %v250
    %v301 = vunpack.c.l.b16 %v251
    %v302 = vunpack.c.h.b16 %v251
    %v303 = vunpack.c.l.b16 %v252
    %v304 = vunpack.c.h.b16 %v252
    %v305 = vunpack.c.l.b16 %v253
    %v306 = vunpack.c.h.b16 %v253
    %v307 = vunpack.c.l.b16 %v254
    %v308 = vunpack.c.h.b16 %v254
    %v309 = vunpack.c.l.b16 %v255
    %v310 = vunpack.c.h.b16 %v255
    %v311 = vunpack.c.l.b16 %v256
    %v312 = vunpack.c.h.b16 %v256
    %v313 = vunpack.c.l.b16 %v257
    %v314 = vunpack.c.h.b16 %v257
    %v315 = vunpack.c.l.b16 %v258
    %v316 = vunpack.c.h.b16 %v258
    %v317 = vunpack.c.l.b16 %v259
    %v318 = vunpack.c.h.b16 %v259
    %v319 = vunpack.c.l.b16 %v260
    %v320 = vunpack.c.h.b16 %v260
    %v321 = vpack.c.b16 %v291, %v289
    %v322 = vpack.c.b16 %v292, %v290
    %v323 = vpack.c.b16 %v295, %v293
    %v324 = vpack.c.b16 %v296, %v294
    %v325 = vpack.c.b16 %v299, %v297
    %v326 = vpack.c.b16 %v300, %v298
    %v327 = vpack.c.b16 %v303, %v301
    %v328 = vpack.c.b16 %v304, %v302
    %v329 = vpack.c.b16 %v307, %v305
    %v330 = vpack.c.b16 %v308, %v306
    %v331 = vpack.c.b16 %v311, %v309
    %v332 = vpack.c.b16 %v312, %v310
    %v333 = vpack.c.b16 %v315, %v313
    %v334 = vpack.c.b16 %v316, %v314
    %v335 = vpack.c.b16 %v319, %v317
    %v336 = vpack.c.b16 %v320, %v318
    %353 = vmatprep.subr.bf16.mxu0 %v322
    %354 = vmatpush1.bf16.msra.mxu0 %v321
    %355 = vmatprep.subr.bf16.mxu0 %v324
    %356 = vmatpush1.bf16.msra.mxu0 %v323
    %357 = vmatprep.subr.bf16.mxu0 %v326
    %358 = vmatpush1.bf16.msra.mxu0 %v325
    %359 = vmatprep.subr.bf16.mxu0 %v328
    %360 = vmatpush1.bf16.msra.mxu0 %v327
    %361 = vmatprep.subr.bf16.mxu0 %v330
    %362 = vmatpush1.bf16.msra.mxu0 %v329
    %363 = vmatprep.subr.bf16.mxu0 %v332
    %364 = vmatpush1.bf16.msra.mxu0 %v331
    %365 = vmatprep.subr.bf16.mxu0 %v334
    %366 = vmatpush1.bf16.msra.mxu0 %v333
    %367 = vmatprep.subr.bf16.mxu0 %v336
    %368 = vmatpush1.bf16.msra.mxu0 %v335
    %369 = vmatprep.subr.bf16.mxu0 0
    %370 = vmatpush1.bf16.msra.mxu0 0
    %371 = vmatprep.subr.bf16.mxu0 0
    %372 = vmatpush1.bf16.msra.mxu0 0
    %373 = vmatprep.subr.bf16.mxu0 0
    %374 = vmatpush1.bf16.msra.mxu0 0
    %375 = vmatprep.subr.bf16.mxu0 0
    %376 = vmatpush1.bf16.msra.mxu0 0
    %377 = vmatprep.subr.bf16.mxu0 0
    %378 = vmatpush1.bf16.msra.mxu0 0
    %379 = vmatprep.subr.bf16.mxu0 0
    %380 = vmatpush1.bf16.msra.mxu0 0
    %381 = vmatprep.subr.bf16.mxu0 0
    %382 = vmatpush1.bf16.msra.mxu0 0
    %383 = vmatprep.subr.bf16.mxu0 0
    %384 = vmatpush1.bf16.msra.mxu0 0
    %385 = vmatprep.mubr.bf16.mxu0 0
    %386 = vmatmul.mubr.bf16.gmra.mrb[0].mxu0 %v244
    %v387 = vpop.f32.mrb[0].mxu0
    %v388 = vadd.f32 %v266, %v387
    %v389 = vpop.f32.mrb[0].mxu0
    %v390 = vadd.f32 %v270, %v389
    %v391 = vpop.f32.mrb[0].mxu0
    %v392 = vpop.f32.mrb[0].mxu0
    %393 = vdwg.mxu0
    %v394 = vrot.slane %v388, 4
    %v395 = vadd.f32 %v388, %v394
    %v396 = vrot.slane %v395, 2
    %v397 = vadd.f32 %v395, %v396
    %v398 = vrot.slane %v397, 1
    %v399 = vadd.f32 %v397, %v398
    %v400 = vrot.slane %v390, 4
    %v401 = vadd.f32 %v390, %v400
    %v402 = vrot.slane %v401, 2
    %v403 = vadd.f32 %v401, %v402
    %v404 = vrot.slane %v403, 1
    %v405 = vadd.f32 %v403, %v404
    %v406 = vmul.f32 %v388, %v388
    %v407 = vmul.f32 %v390, %v390
    %v408 = vrot.slane %v406, 4
    %v409 = vadd.f32 %v406, %v408
    %v410 = vrot.slane %v409, 2
    %v411 = vadd.f32 %v409, %v410
    %v412 = vrot.slane %v411, 1
    %v413 = vadd.f32 %v411, %v412
    %v414 = vrot.slane %v407, 4
    %v415 = vadd.f32 %v407, %v414
    %v416 = vrot.slane %v415, 2
    %v417 = vadd.f32 %v415, %v416
    %v418 = vrot.slane %v417, 1
    %v419 = vadd.f32 %v417, %v418
    %v420 = vmul.f32 %v399, 0.125
    %v421 = vmul.f32 %v405, 0.125
    %v422 = vmul.f32 %v413, 0.125
    %v423 = vmul.f32 %v419, 0.125
    %v424 = vmul.f32 %v420, %v420
    %v425 = vmul.f32 %v421, %v421
    %v426 = vsub.f32 %v422, %v424
    %v427 = vsub.f32 %v423, %v425
    %v428 = vsub.f32 %v388, %v420
    %v429 = vsub.f32 %v390, %v421
    %v430 = vadd.f32 %v426, 0.8
    %v431 = vadd.f32 %v427, 0.8
    %v432 = vrsqrt.pop %v430
    %v433 = vrsqrt.pop %v431
    %v434 = vmul.f32 %v428, %v432
    %v435 = vmul.f32 %v429, %v433
    %v436 = vld [vmem:[#allocation7] sm:$0x3]
    %v438 = vlaneseq
    %v439 = vshrl.u32 %v438, 7
    %v440 = vsub.s32 0, %v439
    %v441 = vrot.slane %v436, %v440
    %v442 = vlaneseq
    %v443 = vshrl.u32 %v442, 7
    %v444 = vsub.s32 1, %v443
    %v445 = vrot.slane %v436, %v444
    %v448 = vmul.f32 %v434, %v441
    %v449 = vmul.f32 %v435, %v445
    %v450 = vld [vmem:[#allocation9] sm:$0x3]
    %v452 = vlaneseq
    %v453 = vshrl.u32 %v452, 7
    %v454 = vsub.s32 0, %v453
    %v455 = vrot.slane %v450, %v454
    %v456 = vlaneseq
    %v457 = vshrl.u32 %v456, 7
    %v458 = vsub.s32 1, %v457
    %v459 = vrot.slane %v450, %v458
    %v462 = vadd.f32 %v448, %v455
    %v463 = vadd.f32 %v449, %v459
    %v464 = vmul.f32 %v462, 0.2
    %v465 = vmul.f32 %v463, 0.2
    %v466 = vmax.f32 %v462, %v464
    %v467 = vmax.f32 %v463, %v465
    %v468 = vpack.c.bf16 %v466, %v466
    %v469 = vpack.c.bf16 %v467, %v467
    %v470 = vld [vmem:[#allocation10] sm:$0xff]
    %v471 = vld [vmem:[#allocation10 + $0x8] sm:$0xff]
    %v472 = vld [vmem:[#allocation10 + $0x10] sm:$0xff]
    %v473 = vld [vmem:[#allocation10 + $0x18] sm:$0xff]
    %v474 = vld [vmem:[#allocation10 + $0x20] sm:$0xff]
    %v475 = vld [vmem:[#allocation10 + $0x28] sm:$0xff]
    %v476 = vld [vmem:[#allocation10 + $0x30] sm:$0xff]
    %v477 = vld [vmem:[#allocation10 + $0x38] sm:$0xff]
    %v478 = vld [vmem:[#allocation10 + $0x40] sm:$0xff]
    %v479 = vld [vmem:[#allocation10 + $0x48] sm:$0xff]
    %v480 = vld [vmem:[#allocation10 + $0x50] sm:$0xff]
    %v481 = vld [vmem:[#allocation10 + $0x58] sm:$0xff]
    %v482 = vld [vmem:[#allocation10 + $0x60] sm:$0xff]
    %v483 = vld [vmem:[#allocation10 + $0x68] sm:$0xff]
    %v484 = vld [vmem:[#allocation10 + $0x70] sm:$0xff]
    %v485 = vld [vmem:[#allocation10 + $0x78] sm:$0xff]
    %v486 = vld [vmem:[#allocation10 + $0x80] sm:$0xff]
    %v487 = vld [vmem:[#allocation10 + $0x88] sm:$0xff]
    %v488 = vld [vmem:[#allocation10 + $0x90] sm:$0xff]
    %v489 = vld [vmem:[#allocation10 + $0x98] sm:$0xff]
    %v490 = vld [vmem:[#allocation10 + $0xa0] sm:$0xff]
    %v491 = vld [vmem:[#allocation10 + $0xa8] sm:$0xff]
    %v492 = vld [vmem:[#allocation10 + $0xb0] sm:$0xff]
    %v493 = vld [vmem:[#allocation10 + $0xb8] sm:$0xff]
    %v494 = vld [vmem:[#allocation10 + $0xc0] sm:$0xff]
    %v495 = vld [vmem:[#allocation10 + $0xc8] sm:$0xff]
    %v496 = vld [vmem:[#allocation10 + $0xd0] sm:$0xff]
    %v497 = vld [vmem:[#allocation10 + $0xd8] sm:$0xff]
    %v498 = vld [vmem:[#allocation10 + $0xe0] sm:$0xff]
    %v499 = vld [vmem:[#allocation10 + $0xe8] sm:$0xff]
    %v500 = vld [vmem:[#allocation10 + $0xf0] sm:$0xff]
    %v501 = vld [vmem:[#allocation10 + $0xf8] sm:$0xff]
    %v502 = vld [vmem:[#allocation10 + $0x100] sm:$0xff]
    %v503 = vld [vmem:[#allocation10 + $0x108] sm:$0xff]
    %v504 = vld [vmem:[#allocation10 + $0x110] sm:$0xff]
    %v505 = vld [vmem:[#allocation10 + $0x118] sm:$0xff]
    %v506 = vld [vmem:[#allocation10 + $0x120] sm:$0xff]
    %v507 = vld [vmem:[#allocation10 + $0x128] sm:$0xff]
    %v508 = vld [vmem:[#allocation10 + $0x130] sm:$0xff]
    %v509 = vld [vmem:[#allocation10 + $0x138] sm:$0xff]
    %v510 = vld [vmem:[#allocation10 + $0x140] sm:$0xff]
    %v511 = vld [vmem:[#allocation10 + $0x148] sm:$0xff]
    %v512 = vld [vmem:[#allocation10 + $0x150] sm:$0xff]
    %v513 = vld [vmem:[#allocation10 + $0x158] sm:$0xff]
    %v514 = vld [vmem:[#allocation10 + $0x160] sm:$0xff]
    %v515 = vld [vmem:[#allocation10 + $0x168] sm:$0xff]
    %v516 = vld [vmem:[#allocation10 + $0x170] sm:$0xff]
    %v517 = vld [vmem:[#allocation10 + $0x178] sm:$0xff]
    %v518 = vld [vmem:[#allocation10 + $0x180] sm:$0xff]
    %v519 = vld [vmem:[#allocation10 + $0x188] sm:$0xff]
    %v520 = vld [vmem:[#allocation10 + $0x190] sm:$0xff]
    %v521 = vld [vmem:[#allocation10 + $0x198] sm:$0xff]
    %v522 = vld [vmem:[#allocation10 + $0x1a0] sm:$0xff]
    %v523 = vld [vmem:[#allocation10 + $0x1a8] sm:$0xff]
    %v524 = vld [vmem:[#allocation10 + $0x1b0] sm:$0xff]
    %v525 = vld [vmem:[#allocation10 + $0x1b8] sm:$0xff]
    %v526 = vld [vmem:[#allocation10 + $0x1c0] sm:$0xff]
    %v527 = vld [vmem:[#allocation10 + $0x1c8] sm:$0xff]
    %v528 = vld [vmem:[#allocation10 + $0x1d0] sm:$0xff]
    %v529 = vld [vmem:[#allocation10 + $0x1d8] sm:$0xff]
    %v530 = vld [vmem:[#allocation10 + $0x1e0] sm:$0xff]
    %v531 = vld [vmem:[#allocation10 + $0x1e8] sm:$0xff]
    %v532 = vld [vmem:[#allocation10 + $0x1f0] sm:$0xff]
    %v533 = vld [vmem:[#allocation10 + $0x1f8] sm:$0xff]
    %v534 = vld [vmem:[#allocation12] sm:$0xf]
    %v536 = vlaneseq
    %v537 = vshrl.u32 %v536, 7
    %v538 = vsub.s32 0, %v537
    %v539 = vrot.slane %v534, %v538
    %v540 = vlaneseq
    %v541 = vshrl.u32 %v540, 7
    %v542 = vsub.s32 1, %v541
    %v543 = vrot.slane %v534, %v542
    %v544 = vlaneseq
    %v545 = vshrl.u32 %v544, 7
    %v546 = vsub.s32 2, %v545
    %v547 = vrot.slane %v534, %v546
    %v548 = vlaneseq
    %v549 = vshrl.u32 %v548, 7
    %v550 = vsub.s32 3, %v549
    %v551 = vrot.slane %v534, %v550
    %v620 = vunpack.c.l.b16 %v470
    %v621 = vunpack.c.h.b16 %v470
    %v622 = vunpack.c.l.b16 %v471
    %v623 = vunpack.c.h.b16 %v471
    %v624 = vunpack.c.l.b16 %v472
    %v625 = vunpack.c.h.b16 %v472
    %v626 = vunpack.c.l.b16 %v473
    %v627 = vunpack.c.h.b16 %v473
    %v628 = vunpack.c.l.b16 %v474
    %v629 = vunpack.c.h.b16 %v474
    %v630 = vunpack.c.l.b16 %v475
    %v631 = vunpack.c.h.b16 %v475
    %v632 = vunpack.c.l.b16 %v476
    %v633 = vunpack.c.h.b16 %v476
    %v634 = vunpack.c.l.b16 %v477
    %v635 = vunpack.c.h.b16 %v477
    %v636 = vunpack.c.l.b16 %v478
    %v637 = vunpack.c.h.b16 %v478
    %v638 = vunpack.c.l.b16 %v479
    %v639 = vunpack.c.h.b16 %v479
    %v640 = vunpack.c.l.b16 %v480
    %v641 = vunpack.c.h.b16 %v480
    %v642 = vunpack.c.l.b16 %v481
    %v643 = vunpack.c.h.b16 %v481
    %v644 = vunpack.c.l.b16 %v482
    %v645 = vunpack.c.h.b16 %v482
    %v646 = vunpack.c.l.b16 %v483
    %v647 = vunpack.c.h.b16 %v483
    %v648 = vunpack.c.l.b16 %v484
    %v649 = vunpack.c.h.b16 %v484
    %v650 = vunpack.c.l.b16 %v485
    %v651 = vunpack.c.h.b16 %v485
    %v652 = vunpack.c.l.b16 %v486
    %v653 = vunpack.c.h.b16 %v486
    %v654 = vunpack.c.l.b16 %v487
    %v655 = vunpack.c.h.b16 %v487
    %v656 = vunpack.c.l.b16 %v488
    %v657 = vunpack.c.h.b16 %v488
    %v658 = vunpack.c.l.b16 %v489
    %v659 = vunpack.c.h.b16 %v489
    %v660 = vunpack.c.l.b16 %v490
    %v661 = vunpack.c.h.b16 %v490
    %v662 = vunpack.c.l.b16 %v491
    %v663 = vunpack.c.h.b16 %v491
    %v664 = vunpack.c.l.b16 %v492
    %v665 = vunpack.c.h.b16 %v492
    %v666 = vunpack.c.l.b16 %v493
    %v667 = vunpack.c.h.b16 %v493
    %v668 = vunpack.c.l.b16 %v494
    %v669 = vunpack.c.h.b16 %v494
    %v670 = vunpack.c.l.b16 %v495
    %v671 = vunpack.c.h.b16 %v495
    %v672 = vunpack.c.l.b16 %v496
    %v673 = vunpack.c.h.b16 %v496
    %v674 = vunpack.c.l.b16 %v497
    %v675 = vunpack.c.h.b16 %v497
    %v676 = vunpack.c.l.b16 %v498
    %v677 = vunpack.c.h.b16 %v498
    %v678 = vunpack.c.l.b16 %v499
    %v679 = vunpack.c.h.b16 %v499
    %v680 = vunpack.c.l.b16 %v500
    %v681 = vunpack.c.h.b16 %v500
    %v682 = vunpack.c.l.b16 %v501
    %v683 = vunpack.c.h.b16 %v501
    %v684 = vunpack.c.l.b16 %v502
    %v685 = vunpack.c.h.b16 %v502
    %v686 = vunpack.c.l.b16 %v503
    %v687 = vunpack.c.h.b16 %v503
    %v688 = vunpack.c.l.b16 %v504
    %v689 = vunpack.c.h.b16 %v504
    %v690 = vunpack.c.l.b16 %v505
    %v691 = vunpack.c.h.b16 %v505
    %v692 = vunpack.c.l.b16 %v506
    %v693 = vunpack.c.h.b16 %v506
    %v694 = vunpack.c.l.b16 %v507
    %v695 = vunpack.c.h.b16 %v507
    %v696 = vunpack.c.l.b16 %v508
    %v697 = vunpack.c.h.b16 %v508
    %v698 = vunpack.c.l.b16 %v509
    %v699 = vunpack.c.h.b16 %v509
    %v700 = vunpack.c.l.b16 %v510
    %v701 = vunpack.c.h.b16 %v510
    %v702 = vunpack.c.l.b16 %v511
    %v703 = vunpack.c.h.b16 %v511
    %v704 = vunpack.c.l.b16 %v512
    %v705 = vunpack.c.h.b16 %v512
    %v706 = vunpack.c.l.b16 %v513
    %v707 = vunpack.c.h.b16 %v513
    %v708 = vunpack.c.l.b16 %v514
    %v709 = vunpack.c.h.b16 %v514
    %v710 = vunpack.c.l.b16 %v515
    %v711 = vunpack.c.h.b16 %v515
    %v712 = vunpack.c.l.b16 %v516
    %v713 = vunpack.c.h.b16 %v516
    %v714 = vunpack.c.l.b16 %v517
    %v715 = vunpack.c.h.b16 %v517
    %v716 = vunpack.c.l.b16 %v518
    %v717 = vunpack.c.h.b16 %v518
    %v718 = vunpack.c.l.b16 %v519
    %v719 = vunpack.c.h.b16 %v519
    %v720 = vunpack.c.l.b16 %v520
    %v721 = vunpack.c.h.b16 %v520
    %v722 = vunpack.c.l.b16 %v521
    %v723 = vunpack.c.h.b16 %v521
    %v724 = vunpack.c.l.b16 %v522
    %v725 = vunpack.c.h.b16 %v522
    %v726 = vunpack.c.l.b16 %v523
    %v727 = vunpack.c.h.b16 %v523
    %v728 = vunpack.c.l.b16 %v524
    %v729 = vunpack.c.h.b16 %v524
    %v730 = vunpack.c.l.b16 %v525
    %v731 = vunpack.c.h.b16 %v525
    %v732 = vunpack.c.l.b16 %v526
    %v733 = vunpack.c.h.b16 %v526
    %v734 = vunpack.c.l.b16 %v527
    %v735 = vunpack.c.h.b16 %v527
    %v736 = vunpack.c.l.b16 %v528
    %v737 = vunpack.c.h.b16 %v528
    %v738 = vunpack.c.l.b16 %v529
    %v739 = vunpack.c.h.b16 %v529
    %v740 = vunpack.c.l.b16 %v530
    %v741 = vunpack.c.h.b16 %v530
    %v742 = vunpack.c.l.b16 %v531
    %v743 = vunpack.c.h.b16 %v531
    %v744 = vunpack.c.l.b16 %v532
    %v745 = vunpack.c.h.b16 %v532
    %v746 = vunpack.c.l.b16 %v533
    %v747 = vunpack.c.h.b16 %v533
    %v748 = vpack.c.b16 %v624, %v620
    %v749 = vpack.c.b16 %v625, %v621
    %v750 = vpack.c.b16 %v626, %v622
    %v751 = vpack.c.b16 %v627, %v623
    %v752 = vpack.c.b16 %v632, %v628
    %v753 = vpack.c.b16 %v633, %v629
    %v754 = vpack.c.b16 %v634, %v630
    %v755 = vpack.c.b16 %v635, %v631
    %v756 = vpack.c.b16 %v640, %v636
    %v757 = vpack.c.b16 %v641, %v637
    %v758 = vpack.c.b16 %v642, %v638
    %v759 = vpack.c.b16 %v643, %v639
    %v760 = vpack.c.b16 %v648, %v644
    %v761 = vpack.c.b16 %v649, %v645
    %v762 = vpack.c.b16 %v650, %v646
    %v763 = vpack.c.b16 %v651, %v647
    %v764 = vpack.c.b16 %v656, %v652
    %v765 = vpack.c.b16 %v657, %v653
    %v766 = vpack.c.b16 %v658, %v654
    %v767 = vpack.c.b16 %v659, %v655
    %v768 = vpack.c.b16 %v664, %v660
    %v769 = vpack.c.b16 %v665, %v661
    %v770 = vpack.c.b16 %v666, %v662
    %v771 = vpack.c.b16 %v667, %v663
    %v772 = vpack.c.b16 %v672, %v668
    %v773 = vpack.c.b16 %v673, %v669
    %v774 = vpack.c.b16 %v674, %v670
    %v775 = vpack.c.b16 %v675, %v671
    %v776 = vpack.c.b16 %v680, %v676
    %v777 = vpack.c.b16 %v681, %v677
    %v778 = vpack.c.b16 %v682, %v678
    %v779 = vpack.c.b16 %v683, %v679
    %v780 = vpack.c.b16 %v688, %v684
    %v781 = vpack.c.b16 %v689, %v685
    %v782 = vpack.c.b16 %v690, %v686
    %v783 = vpack.c.b16 %v691, %v687
    %v784 = vpack.c.b16 %v696, %v692
    %v785 = vpack.c.b16 %v697, %v693
    %v786 = vpack.c.b16 %v698, %v694
    %v787 = vpack.c.b16 %v699, %v695
    %v788 = vpack.c.b16 %v704, %v700
    %v789 = vpack.c.b16 %v705, %v701
    %v790 = vpack.c.b16 %v706, %v702
    %v791 = vpack.c.b16 %v707, %v703
    %v792 = vpack.c.b16 %v712, %v708
    %v793 = vpack.c.b16 %v713, %v709
    %v794 = vpack.c.b16 %v714, %v710
    %v795 = vpack.c.b16 %v715, %v711
    %v796 = vpack.c.b16 %v720, %v716
    %v797 = vpack.c.b16 %v721, %v717
    %v798 = vpack.c.b16 %v722, %v718
    %v799 = vpack.c.b16 %v723, %v719
    %v800 = vpack.c.b16 %v728, %v724
    %v801 = vpack.c.b16 %v729, %v725
    %v802 = vpack.c.b16 %v730, %v726
    %v803 = vpack.c.b16 %v731, %v727
    %v804 = vpack.c.b16 %v736, %v732
    %v805 = vpack.c.b16 %v737, %v733
    %v806 = vpack.c.b16 %v738, %v734
    %v807 = vpack.c.b16 %v739, %v735
    %v808 = vpack.c.b16 %v744, %v740
    %v809 = vpack.c.b16 %v745, %v741
    %v810 = vpack.c.b16 %v746, %v742
    %v811 = vpack.c.b16 %v747, %v743
    %876 = vmatprep.subr.bf16.mxu0 %v749
    %877 = vmatpush1.bf16.msra.mxu0 %v748
    %878 = vmatprep.subr.bf16.mxu0 %v753
    %879 = vmatpush1.bf16.msra.mxu0 %v752
    %880 = vmatprep.subr.bf16.mxu0 %v757
    %881 = vmatpush1.bf16.msra.mxu0 %v756
    %882 = vmatprep.subr.bf16.mxu0 %v761
    %883 = vmatpush1.bf16.msra.mxu0 %v760
    %884 = vmatprep.subr.bf16.mxu0 %v765
    %885 = vmatpush1.bf16.msra.mxu0 %v764
    %886 = vmatprep.subr.bf16.mxu0 %v769
    %887 = vmatpush1.bf16.msra.mxu0 %v768
    %888 = vmatprep.subr.bf16.mxu0 %v773
    %889 = vmatpush1.bf16.msra.mxu0 %v772
    %890 = vmatprep.subr.bf16.mxu0 %v777
    %891 = vmatpush1.bf16.msra.mxu0 %v776
    %892 = vmatprep.subr.bf16.mxu0 %v781
    %893 = vmatpush1.bf16.msra.mxu0 %v780
    %894 = vmatprep.subr.bf16.mxu0 %v785
    %895 = vmatpush1.bf16.msra.mxu0 %v784
    %896 = vmatprep.subr.bf16.mxu0 %v789
    %897 = vmatpush1.bf16.msra.mxu0 %v788
    %898 = vmatprep.subr.bf16.mxu0 %v793
    %899 = vmatpush1.bf16.msra.mxu0 %v792
    %900 = vmatprep.subr.bf16.mxu0 %v797
    %901 = vmatpush1.bf16.msra.mxu0 %v796
    %902 = vmatprep.subr.bf16.mxu0 %v801
    %903 = vmatpush1.bf16.msra.mxu0 %v800
    %904 = vmatprep.subr.bf16.mxu0 %v805
    %905 = vmatpush1.bf16.msra.mxu0 %v804
    %906 = vmatprep.subr.bf16.mxu0 %v809
    %907 = vmatpush1.bf16.msra.mxu0 %v808
    %908 = vmatprep.mubr.bf16.mxu0 %v469
    %909 = vmatmul.mubr.bf16.gmra.mrb[0].mxu0 %v468
    %v910 = vpop.f32.mrb[0].mxu0
    %v911 = vadd.f32 %v539, %v910
    %v912 = vpop.f32.mrb[0].mxu0
    %v913 = vadd.f32 %v543, %v912
    %v914 = vpop.f32.mrb[0].mxu0
    %v915 = vpop.f32.mrb[0].mxu0
    %916 = vdwg.mxu0
    %917 = vmatprep.subr.bf16.mxu0 %v751
    %918 = vmatpush1.bf16.msra.mxu0 %v750
    %919 = vmatprep.subr.bf16.mxu0 %v755
    %920 = vmatpush1.bf16.msra.mxu0 %v754
    %921 = vmatprep.subr.bf16.mxu0 %v759
    %922 = vmatpush1.bf16.msra.mxu0 %v758
    %923 = vmatprep.subr.bf16.mxu0 %v763
    %924 = vmatpush1.bf16.msra.mxu0 %v762
    %925 = vmatprep.subr.bf16.mxu0 %v767
    %926 = vmatpush1.bf16.msra.mxu0 %v766
    %927 = vmatprep.subr.bf16.mxu0 %v771
    %928 = vmatpush1.bf16.msra.mxu0 %v770
    %929 = vmatprep.subr.bf16.mxu0 %v775
    %930 = vmatpush1.bf16.msra.mxu0 %v774
    %931 = vmatprep.subr.bf16.mxu0 %v779
    %932 = vmatpush1.bf16.msra.mxu0 %v778
    %933 = vmatprep.subr.bf16.mxu0 %v783
    %934 = vmatpush1.bf16.msra.mxu0 %v782
    %935 = vmatprep.subr.bf16.mxu0 %v787
    %936 = vmatpush1.bf16.msra.mxu0 %v786
    %937 = vmatprep.subr.bf16.mxu0 %v791
    %938 = vmatpush1.bf16.msra.mxu0 %v790
    %939 = vmatprep.subr.bf16.mxu0 %v795
    %940 = vmatpush1.bf16.msra.mxu0 %v794
    %941 = vmatprep.subr.bf16.mxu0 %v799
    %942 = vmatpush1.bf16.msra.mxu0 %v798
    %943 = vmatprep.subr.bf16.mxu0 %v803
    %944 = vmatpush1.bf16.msra.mxu0 %v802
    %945 = vmatprep.subr.bf16.mxu0 %v807
    %946 = vmatpush1.bf16.msra.mxu0 %v806
    %947 = vmatprep.subr.bf16.mxu0 %v811
    %948 = vmatpush1.bf16.msra.mxu0 %v810
    %949 = vmatprep.mubr.bf16.mxu0 %v469
    %950 = vmatmul.mubr.bf16.gmra.mrb[0].mxu0 %v468
    %v951 = vpop.f32.mrb[0].mxu0
    %v952 = vadd.f32 %v547, %v951
    %v953 = vpop.f32.mrb[0].mxu0
    %v954 = vadd.f32 %v551, %v953
    %v955 = vpop.f32.mrb[0].mxu0
    %v956 = vpop.f32.mrb[0].mxu0
    %957 = vdwg.mxu0
    %v958 = vrot.slane %v911, 4
    %v959 = vadd.f32 %v911, %v958
    %v960 = vrot.slane %v959, 2
    %v961 = vadd.f32 %v959, %v960
    %v962 = vrot.slane %v961, 1
    %v963 = vadd.f32 %v961, %v962
    %v964 = vrot.slane %v913, 4
    %v965 = vadd.f32 %v913, %v964
    %v966 = vrot.slane %v965, 2
    %v967 = vadd.f32 %v965, %v966
    %v968 = vrot.slane %v967, 1
    %v969 = vadd.f32 %v967, %v968
    %v970 = vrot.slane %v952, 4
    %v971 = vadd.f32 %v952, %v970
    %v972 = vrot.slane %v971, 2
    %v973 = vadd.f32 %v971, %v972
    %v974 = vrot.slane %v973, 1
    %v975 = vadd.f32 %v973, %v974
    %v976 = vrot.slane %v954, 4
    %v977 = vadd.f32 %v954, %v976
    %v978 = vrot.slane %v977, 2
    %v979 = vadd.f32 %v977, %v978
    %v980 = vrot.slane %v979, 1
    %v981 = vadd.f32 %v979, %v980
    %v982 = vmul.f32 %v911, %v911
    %v983 = vmul.f32 %v913, %v913
    %v984 = vmul.f32 %v952, %v952
    %v985 = vmul.f32 %v954, %v954
    %v986 = vrot.slane %v982, 4
    %v987 = vadd.f32 %v982, %v986
    %v988 = vrot.slane %v987, 2
    %v989 = vadd.f32 %v987, %v988
    %v990 = vrot.slane %v989, 1
    %v991 = vadd.f32 %v989, %v990
    %v992 = vrot.slane %v983, 4
    %v993 = vadd.f32 %v983, %v992
    %v994 = vrot.slane %v993, 2
    %v995 = vadd.f32 %v993, %v994
    %v996 = vrot.slane %v995, 1
    %v997 = vadd.f32 %v995, %v996
    %v998 = vrot.slane %v984, 4
    %v999 = vadd.f32 %v984, %v998
    %v1000 = vrot.slane %v999, 2
    %v1001 = vadd.f32 %v999, %v1000
    %v1002 = vrot.slane %v1001, 1
    %v1003 = vadd.f32 %v1001, %v1002
    %v1004 = vrot.slane %v985, 4
    %v1005 = vadd.f32 %v985, %v1004
    %v1006 = vrot.slane %v1005, 2
    %v1007 = vadd.f32 %v1005, %v1006
    %v1008 = vrot.slane %v1007, 1
    %v1009 = vadd.f32 %v1007, %v1008
    %v1010 = vmul.f32 %v963, 0.125
    %v1011 = vmul.f32 %v969, 0.125
    %v1012 = vmul.f32 %v975, 0.125
    %v1013 = vmul.f32 %v981, 0.125
    %v1014 = vmul.f32 %v991, 0.125
    %v1015 = vmul.f32 %v997, 0.125
    %v1016 = vmul.f32 %v1003, 0.125
    %v1017 = vmul.f32 %v1009, 0.125
    %v1018 = vmul.f32 %v1010, %v1010
    %v1019 = vmul.f32 %v1011, %v1011
    %v1020 = vmul.f32 %v1012, %v1012
    %v1021 = vmul.f32 %v1013, %v1013
    %v1022 = vsub.f32 %v1014, %v1018
    %v1023 = vsub.f32 %v1015, %v1019
    %v1024 = vsub.f32 %v1016, %v1020
    %v1025 = vsub.f32 %v1017, %v1021
    %v1026 = vsub.f32 %v911, %v1010
    %v1027 = vsub.f32 %v913, %v1011
    %v1028 = vsub.f32 %v952, %v1012
    %v1029 = vsub.f32 %v954, %v1013
    %v1030 = vadd.f32 %v1022, 0.8
    %v1031 = vadd.f32 %v1023, 0.8
    %v1032 = vadd.f32 %v1024, 0.8
    %v1033 = vadd.f32 %v1025, 0.8
    %v1034 = vrsqrt.pop %v1030
    %v1035 = vrsqrt.pop %v1031
    %v1036 = vrsqrt.pop %v1032
    %v1037 = vrsqrt.pop %v1033
    %v1038 = vmul.f32 %v1026, %v1034
    %v1039 = vmul.f32 %v1027, %v1035
    %v1040 = vmul.f32 %v1028, %v1036
    %v1041 = vmul.f32 %v1029, %v1037
    %v1042 = vld [vmem:[%s9] sm:$0xf]
    %v1044 = vlaneseq
    %v1045 = vshrl.u32 %v1044, 7
    %v1046 = vsub.s32 0, %v1045
    %v1047 = vrot.slane %v1042, %v1046
    %v1048 = vlaneseq
    %v1049 = vshrl.u32 %v1048, 7
    %v1050 = vsub.s32 1, %v1049
    %v1051 = vrot.slane %v1042, %v1050
    %v1052 = vlaneseq
    %v1053 = vshrl.u32 %v1052, 7
    %v1054 = vsub.s32 2, %v1053
    %v1055 = vrot.slane %v1042, %v1054
    %v1056 = vlaneseq
    %v1057 = vshrl.u32 %v1056, 7
    %v1058 = vsub.s32 3, %v1057
    %v1059 = vrot.slane %v1042, %v1058
    %v1064 = vmul.f32 %v1038, %v1047
    %v1065 = vmul.f32 %v1039, %v1051
    %v1066 = vmul.f32 %v1040, %v1055
    %v1067 = vmul.f32 %v1041, %v1059
    %v1068 = vld [vmem:[#allocation13] sm:$0xf]
    %v1070 = vlaneseq
    %v1071 = vshrl.u32 %v1070, 7
    %v1072 = vsub.s32 0, %v1071
    %v1073 = vrot.slane %v1068, %v1072
    %v1074 = vlaneseq
    %v1075 = vshrl.u32 %v1074, 7
    %v1076 = vsub.s32 1, %v1075
    %v1077 = vrot.slane %v1068, %v1076
    %v1078 = vlaneseq
    %v1079 = vshrl.u32 %v1078, 7
    %v1080 = vsub.s32 2, %v1079
    %v1081 = vrot.slane %v1068, %v1080
    %v1082 = vlaneseq
    %v1083 = vshrl.u32 %v1082, 7
    %v1084 = vsub.s32 3, %v1083
    %v1085 = vrot.slane %v1068, %v1084
    %v1090 = vadd.f32 %v1064, %v1073
    %v1091 = vadd.f32 %v1065, %v1077
    %v1092 = vadd.f32 %v1066, %v1081
    %v1093 = vadd.f32 %v1067, %v1085
    %v1094 = vmul.f32 %v1090, 0.2
    %v1095 = vmul.f32 %v1091, 0.2
    %v1096 = vmul.f32 %v1092, 0.2
    %v1097 = vmul.f32 %v1093, 0.2
    %v1098 = vmax.f32 %v1090, %v1094
    %v1099 = vmax.f32 %v1091, %v1095
    %v1100 = vmax.f32 %v1092, %v1096
    %v1101 = vmax.f32 %v1093, %v1097
    %v1102 = vpack.c.bf16 %v1098, %v1098
    %v1103 = vpack.c.bf16 %v1099, %v1099
    %v1104 = vpack.c.bf16 %v1100, %v1100
    %v1105 = vpack.c.bf16 %v1101, %v1101
    %v1106 = vld [vmem:[#allocation15] sm:$0xff]
    %v1107 = vld [vmem:[#allocation15 + $0x8] sm:$0xff]
    %v1108 = vld [vmem:[#allocation15 + $0x10] sm:$0xff]
    %v1109 = vld [vmem:[#allocation15 + $0x18] sm:$0xff]
    %v1110 = vld [vmem:[#allocation15 + $0x20] sm:$0xff]
    %v1111 = vld [vmem:[#allocation15 + $0x28] sm:$0xff]
    %v1112 = vld [vmem:[#allocation15 + $0x30] sm:$0xff]
    %v1113 = vld [vmem:[#allocation15 + $0x38] sm:$0xff]
    %v1114 = vld [vmem:[#allocation15 + $0x40] sm:$0xff]
    %v1115 = vld [vmem:[#allocation15 + $0x48] sm:$0xff]
    %v1116 = vld [vmem:[#allocation15 + $0x50] sm:$0xff]
    %v1117 = vld [vmem:[#allocation15 + $0x58] sm:$0xff]
    %v1118 = vld [vmem:[#allocation15 + $0x60] sm:$0xff]
    %v1119 = vld [vmem:[#allocation15 + $0x68] sm:$0xff]
    %v1120 = vld [vmem:[#allocation15 + $0x70] sm:$0xff]
    %v1121 = vld [vmem:[#allocation15 + $0x78] sm:$0xff]
    %v1122 = vld [vmem:[#allocation15 + $0x80] sm:$0xff]
    %v1123 = vld [vmem:[#allocation15 + $0x88] sm:$0xff]
    %v1124 = vld [vmem:[#allocation15 + $0x90] sm:$0xff]
    %v1125 = vld [vmem:[#allocation15 + $0x98] sm:$0xff]
    %v1126 = vld [vmem:[#allocation15 + $0xa0] sm:$0xff]
    %v1127 = vld [vmem:[#allocation15 + $0xa8] sm:$0xff]
    %v1128 = vld [vmem:[#allocation15 + $0xb0] sm:$0xff]
    %v1129 = vld [vmem:[#allocation15 + $0xb8] sm:$0xff]
    %v1130 = vld [vmem:[#allocation15 + $0xc0] sm:$0xff]
    %v1131 = vld [vmem:[#allocation15 + $0xc8] sm:$0xff]
    %v1132 = vld [vmem:[#allocation15 + $0xd0] sm:$0xff]
    %v1133 = vld [vmem:[#allocation15 + $0xd8] sm:$0xff]
    %v1134 = vld [vmem:[#allocation15 + $0xe0] sm:$0xff]
    %v1135 = vld [vmem:[#allocation15 + $0xe8] sm:$0xff]
    %v1136 = vld [vmem:[#allocation15 + $0xf0] sm:$0xff]
    %v1137 = vld [vmem:[#allocation15 + $0xf8] sm:$0xff]
    %v1138 = vld [vmem:[#allocation15 + $0x100] sm:$0xff]
    %v1139 = vld [vmem:[#allocation15 + $0x108] sm:$0xff]
    %v1140 = vld [vmem:[#allocation15 + $0x110] sm:$0xff]
    %v1141 = vld [vmem:[#allocation15 + $0x118] sm:$0xff]
    %v1142 = vld [vmem:[#allocation15 + $0x120] sm:$0xff]
    %v1143 = vld [vmem:[#allocation15 + $0x128] sm:$0xff]
    %v1144 = vld [vmem:[#allocation15 + $0x130] sm:$0xff]
    %v1145 = vld [vmem:[#allocation15 + $0x138] sm:$0xff]
    %v1146 = vld [vmem:[#allocation15 + $0x140] sm:$0xff]
    %v1147 = vld [vmem:[#allocation15 + $0x148] sm:$0xff]
    %v1148 = vld [vmem:[#allocation15 + $0x150] sm:$0xff]
    %v1149 = vld [vmem:[#allocation15 + $0x158] sm:$0xff]
    %v1150 = vld [vmem:[#allocation15 + $0x160] sm:$0xff]
    %v1151 = vld [vmem:[#allocation15 + $0x168] sm:$0xff]
    %v1152 = vld [vmem:[#allocation15 + $0x170] sm:$0xff]
    %v1153 = vld [vmem:[#allocation15 + $0x178] sm:$0xff]
    %v1154 = vld [vmem:[#allocation15 + $0x180] sm:$0xff]
    %v1155 = vld [vmem:[#allocation15 + $0x188] sm:$0xff]
    %v1156 = vld [vmem:[#allocation15 + $0x190] sm:$0xff]
    %v1157 = vld [vmem:[#allocation15 + $0x198] sm:$0xff]
    %v1158 = vld [vmem:[#allocation15 + $0x1a0] sm:$0xff]
    %v1159 = vld [vmem:[#allocation15 + $0x1a8] sm:$0xff]
    %v1160 = vld [vmem:[#allocation15 + $0x1b0] sm:$0xff]
    %v1161 = vld [vmem:[#allocation15 + $0x1b8] sm:$0xff]
    %v1162 = vld [vmem:[#allocation15 + $0x1c0] sm:$0xff]
    %v1163 = vld [vmem:[#allocation15 + $0x1c8] sm:$0xff]
    %v1164 = vld [vmem:[#allocation15 + $0x1d0] sm:$0xff]
    %v1165 = vld [vmem:[#allocation15 + $0x1d8] sm:$0xff]
    %v1166 = vld [vmem:[#allocation15 + $0x1e0] sm:$0xff]
    %v1167 = vld [vmem:[#allocation15 + $0x1e8] sm:$0xff]
    %v1168 = vld [vmem:[#allocation15 + $0x1f0] sm:$0xff]
    %v1169 = vld [vmem:[#allocation15 + $0x1f8] sm:$0xff]
    %v1170 = vld [vmem:[#allocation15 + $0x200] sm:$0xff]
    %v1171 = vld [vmem:[#allocation15 + $0x208] sm:$0xff]
    %v1172 = vld [vmem:[#allocation15 + $0x210] sm:$0xff]
    %v1173 = vld [vmem:[#allocation15 + $0x218] sm:$0xff]
    %v1174 = vld [vmem:[#allocation15 + $0x220] sm:$0xff]
    %v1175 = vld [vmem:[#allocation15 + $0x228] sm:$0xff]
    %v1176 = vld [vmem:[#allocation15 + $0x230] sm:$0xff]
    %v1177 = vld [vmem:[#allocation15 + $0x238] sm:$0xff]
    %v1178 = vld [vmem:[#allocation15 + $0x240] sm:$0xff]
    %v1179 = vld [vmem:[#allocation15 + $0x248] sm:$0xff]
    %v1180 = vld [vmem:[#allocation15 + $0x250] sm:$0xff]
    %v1181 = vld [vmem:[#allocation15 + $0x258] sm:$0xff]
    %v1182 = vld [vmem:[#allocation15 + $0x260] sm:$0xff]
    %v1183 = vld [vmem:[#allocation15 + $0x268] sm:$0xff]
    %v1184 = vld [vmem:[#allocation15 + $0x270] sm:$0xff]
    %v1185 = vld [vmem:[#allocation15 + $0x278] sm:$0xff]
    %v1186 = vld [vmem:[#allocation15 + $0x280] sm:$0xff]
    %v1187 = vld [vmem:[#allocation15 + $0x288] sm:$0xff]
    %v1188 = vld [vmem:[#allocation15 + $0x290] sm:$0xff]
    %v1189 = vld [vmem:[#allocation15 + $0x298] sm:$0xff]
    %v1190 = vld [vmem:[#allocation15 + $0x2a0] sm:$0xff]
    %v1191 = vld [vmem:[#allocation15 + $0x2a8] sm:$0xff]
    %v1192 = vld [vmem:[#allocation15 + $0x2b0] sm:$0xff]
    %v1193 = vld [vmem:[#allocation15 + $0x2b8] sm:$0xff]
    %v1194 = vld [vmem:[#allocation15 + $0x2c0] sm:$0xff]
    %v1195 = vld [vmem:[#allocation15 + $0x2c8] sm:$0xff]
    %v1196 = vld [vmem:[#allocation15 + $0x2d0] sm:$0xff]
    %v1197 = vld [vmem:[#allocation15 + $0x2d8] sm:$0xff]
    %v1198 = vld [vmem:[#allocation15 + $0x2e0] sm:$0xff]
    %v1199 = vld [vmem:[#allocation15 + $0x2e8] sm:$0xff]
    %v1200 = vld [vmem:[#allocation15 + $0x2f0] sm:$0xff]
    %v1201 = vld [vmem:[#allocation15 + $0x2f8] sm:$0xff]
    %v1202 = vld [vmem:[#allocation15 + $0x300] sm:$0xff]
    %v1203 = vld [vmem:[#allocation15 + $0x308] sm:$0xff]
    %v1204 = vld [vmem:[#allocation15 + $0x310] sm:$0xff]
    %v1205 = vld [vmem:[#allocation15 + $0x318] sm:$0xff]
    %v1206 = vld [vmem:[#allocation15 + $0x320] sm:$0xff]
    %v1207 = vld [vmem:[#allocation15 + $0x328] sm:$0xff]
    %v1208 = vld [vmem:[#allocation15 + $0x330] sm:$0xff]
    %v1209 = vld [vmem:[#allocation15 + $0x338] sm:$0xff]
    %v1210 = vld [vmem:[#allocation15 + $0x340] sm:$0xff]
    %v1211 = vld [vmem:[#allocation15 + $0x348] sm:$0xff]
    %v1212 = vld [vmem:[#allocation15 + $0x350] sm:$0xff]
    %v1213 = vld [vmem:[#allocation15 + $0x358] sm:$0xff]
    %v1214 = vld [vmem:[#allocation15 + $0x360] sm:$0xff]
    %v1215 = vld [vmem:[#allocation15 + $0x368] sm:$0xff]
    %v1216 = vld [vmem:[#allocation15 + $0x370] sm:$0xff]
    %v1217 = vld [vmem:[#allocation15 + $0x378] sm:$0xff]
    %v1218 = vld [vmem:[#allocation15 + $0x380] sm:$0xff]
    %v1219 = vld [vmem:[#allocation15 + $0x388] sm:$0xff]
    %v1220 = vld [vmem:[#allocation15 + $0x390] sm:$0xff]
    %v1221 = vld [vmem:[#allocation15 + $0x398] sm:$0xff]
    %v1222 = vld [vmem:[#allocation15 + $0x3a0] sm:$0xff]
    %v1223 = vld [vmem:[#allocation15 + $0x3a8] sm:$0xff]
    %v1224 = vld [vmem:[#allocation15 + $0x3b0] sm:$0xff]
    %v1225 = vld [vmem:[#allocation15 + $0x3b8] sm:$0xff]
    %v1226 = vld [vmem:[#allocation15 + $0x3c0] sm:$0xff]
    %v1227 = vld [vmem:[#allocation15 + $0x3c8] sm:$0xff]
    %v1228 = vld [vmem:[#allocation15 + $0x3d0] sm:$0xff]
    %v1229 = vld [vmem:[#allocation15 + $0x3d8] sm:$0xff]
    %v1230 = vld [vmem:[#allocation15 + $0x3e0] sm:$0xff]
    %v1231 = vld [vmem:[#allocation15 + $0x3e8] sm:$0xff]
    %v1232 = vld [vmem:[#allocation15 + $0x3f0] sm:$0xff]
    %v1233 = vld [vmem:[#allocation15 + $0x3f8] sm:$0xff]
    %v1234 = vld [vmem:[#allocation15 + $0x400] sm:$0xff]
    %v1235 = vld [vmem:[#allocation15 + $0x408] sm:$0xff]
    %v1236 = vld [vmem:[#allocation15 + $0x410] sm:$0xff]
    %v1237 = vld [vmem:[#allocation15 + $0x418] sm:$0xff]
    %v1238 = vld [vmem:[#allocation15 + $0x420] sm:$0xff]
    %v1239 = vld [vmem:[#allocation15 + $0x428] sm:$0xff]
    %v1240 = vld [vmem:[#allocation15 + $0x430] sm:$0xff]
    %v1241 = vld [vmem:[#allocation15 + $0x438] sm:$0xff]
    %v1242 = vld [vmem:[#allocation15 + $0x440] sm:$0xff]
    %v1243 = vld [vmem:[#allocation15 + $0x448] sm:$0xff]
    %v1244 = vld [vmem:[#allocation15 + $0x450] sm:$0xff]
    %v1245 = vld [vmem:[#allocation15 + $0x458] sm:$0xff]
    %v1246 = vld [vmem:[#allocation15 + $0x460] sm:$0xff]
    %v1247 = vld [vmem:[#allocation15 + $0x468] sm:$0xff]
    %v1248 = vld [vmem:[#allocation15 + $0x470] sm:$0xff]
    %v1249 = vld [vmem:[#allocation15 + $0x478] sm:$0xff]
    %v1250 = vld [vmem:[#allocation15 + $0x480] sm:$0xff]
    %v1251 = vld [vmem:[#allocation15 + $0x488] sm:$0xff]
    %v1252 = vld [vmem:[#allocation15 + $0x490] sm:$0xff]
    %v1253 = vld [vmem:[#allocation15 + $0x498] sm:$0xff]
    %v1254 = vld [vmem:[#allocation15 + $0x4a0] sm:$0xff]
    %v1255 = vld [vmem:[#allocation15 + $0x4a8] sm:$0xff]
    %v1256 = vld [vmem:[#allocation15 + $0x4b0] sm:$0xff]
    %v1257 = vld [vmem:[#allocation15 + $0x4b8] sm:$0xff]
    %v1258 = vld [vmem:[#allocation15 + $0x4c0] sm:$0xff]
    %v1259 = vld [vmem:[#allocation15 + $0x4c8] sm:$0xff]
    %v1260 = vld [vmem:[#allocation15 + $0x4d0] sm:$0xff]
    %v1261 = vld [vmem:[#allocation15 + $0x4d8] sm:$0xff]
    %v1262 = vld [vmem:[#allocation15 + $0x4e0] sm:$0xff]
    %v1263 = vld [vmem:[#allocation15 + $0x4e8] sm:$0xff]
    %v1264 = vld [vmem:[#allocation15 + $0x4f0] sm:$0xff]
    %v1265 = vld [vmem:[#allocation15 + $0x4f8] sm:$0xff]
    %v1266 = vld [vmem:[#allocation15 + $0x500] sm:$0xff]
    %v1267 = vld [vmem:[#allocation15 + $0x508] sm:$0xff]
    %v1268 = vld [vmem:[#allocation15 + $0x510] sm:$0xff]
    %v1269 = vld [vmem:[#allocation15 + $0x518] sm:$0xff]
    %v1270 = vld [vmem:[#allocation15 + $0x520] sm:$0xff]
    %v1271 = vld [vmem:[#allocation15 + $0x528] sm:$0xff]
    %v1272 = vld [vmem:[#allocation15 + $0x530] sm:$0xff]
    %v1273 = vld [vmem:[#allocation15 + $0x538] sm:$0xff]
    %v1274 = vld [vmem:[#allocation15 + $0x540] sm:$0xff]
    %v1275 = vld [vmem:[#allocation15 + $0x548] sm:$0xff]
    %v1276 = vld [vmem:[#allocation15 + $0x550] sm:$0xff]
    %v1277 = vld [vmem:[#allocation15 + $0x558] sm:$0xff]
    %v1278 = vld [vmem:[#allocation15 + $0x560] sm:$0xff]
    %v1279 = vld [vmem:[#allocation15 + $0x568] sm:$0xff]
    %v1280 = vld [vmem:[#allocation15 + $0x570] sm:$0xff]
    %v1281 = vld [vmem:[#allocation15 + $0x578] sm:$0xff]
    %v1282 = vld [vmem:[#allocation15 + $0x580] sm:$0xff]
    %v1283 = vld [vmem:[#allocation15 + $0x588] sm:$0xff]
    %v1284 = vld [vmem:[#allocation15 + $0x590] sm:$0xff]
    %v1285 = vld [vmem:[#allocation15 + $0x598] sm:$0xff]
    %v1286 = vld [vmem:[#allocation15 + $0x5a0] sm:$0xff]
    %v1287 = vld [vmem:[#allocation15 + $0x5a8] sm:$0xff]
    %v1288 = vld [vmem:[#allocation15 + $0x5b0] sm:$0xff]
    %v1289 = vld [vmem:[#allocation15 + $0x5b8] sm:$0xff]
    %v1290 = vld [vmem:[#allocation15 + $0x5c0] sm:$0xff]
    %v1291 = vld [vmem:[#allocation15 + $0x5c8] sm:$0xff]
    %v1292 = vld [vmem:[#allocation15 + $0x5d0] sm:$0xff]
    %v1293 = vld [vmem:[#allocation15 + $0x5d8] sm:$0xff]
    %v1294 = vld [vmem:[#allocation15 + $0x5e0] sm:$0xff]
    %v1295 = vld [vmem:[#allocation15 + $0x5e8] sm:$0xff]
    %v1296 = vld [vmem:[#allocation15 + $0x5f0] sm:$0xff]
    %v1297 = vld [vmem:[#allocation15 + $0x5f8] sm:$0xff]
    %v1298 = vld [vmem:[#allocation15 + $0x600] sm:$0xff]
    %v1299 = vld [vmem:[#allocation15 + $0x608] sm:$0xff]
    %v1300 = vld [vmem:[#allocation15 + $0x610] sm:$0xff]
    %v1301 = vld [vmem:[#allocation15 + $0x618] sm:$0xff]
    %v1302 = vld [vmem:[#allocation15 + $0x620] sm:$0xff]
    %v1303 = vld [vmem:[#allocation15 + $0x628] sm:$0xff]
    %v1304 = vld [vmem:[#allocation15 + $0x630] sm:$0xff]
    %v1305 = vld [vmem:[#allocation15 + $0x638] sm:$0xff]
    %v1306 = vld [vmem:[#allocation15 + $0x640] sm:$0xff]
    %v1307 = vld [vmem:[#allocation15 + $0x648] sm:$0xff]
    %v1308 = vld [vmem:[#allocation15 + $0x650] sm:$0xff]
    %v1309 = vld [vmem:[#allocation15 + $0x658] sm:$0xff]
    %v1310 = vld [vmem:[#allocation15 + $0x660] sm:$0xff]
    %v1311 = vld [vmem:[#allocation15 + $0x668] sm:$0xff]
    %v1312 = vld [vmem:[#allocation15 + $0x670] sm:$0xff]
    %v1313 = vld [vmem:[#allocation15 + $0x678] sm:$0xff]
    %v1314 = vld [vmem:[#allocation15 + $0x680] sm:$0xff]
    %v1315 = vld [vmem:[#allocation15 + $0x688] sm:$0xff]
    %v1316 = vld [vmem:[#allocation15 + $0x690] sm:$0xff]
    %v1317 = vld [vmem:[#allocation15 + $0x698] sm:$0xff]
    %v1318 = vld [vmem:[#allocation15 + $0x6a0] sm:$0xff]
    %v1319 = vld [vmem:[#allocation15 + $0x6a8] sm:$0xff]
    %v1320 = vld [vmem:[#allocation15 + $0x6b0] sm:$0xff]
    %v1321 = vld [vmem:[#allocation15 + $0x6b8] sm:$0xff]
    %v1322 = vld [vmem:[#allocation15 + $0x6c0] sm:$0xff]
    %v1323 = vld [vmem:[#allocation15 + $0x6c8] sm:$0xff]
    %v1324 = vld [vmem:[#allocation15 + $0x6d0] sm:$0xff]
    %v1325 = vld [vmem:[#allocation15 + $0x6d8] sm:$0xff]
    %v1326 = vld [vmem:[#allocation15 + $0x6e0] sm:$0xff]
    %v1327 = vld [vmem:[#allocation15 + $0x6e8] sm:$0xff]
    %v1328 = vld [vmem:[#allocation15 + $0x6f0] sm:$0xff]
    %v1329 = vld [vmem:[#allocation15 + $0x6f8] sm:$0xff]
    %v1330 = vld [vmem:[#allocation15 + $0x700] sm:$0xff]
    %v1331 = vld [vmem:[#allocation15 + $0x708] sm:$0xff]
    %v1332 = vld [vmem:[#allocation15 + $0x710] sm:$0xff]
    %v1333 = vld [vmem:[#allocation15 + $0x718] sm:$0xff]
    %v1334 = vld [vmem:[#allocation15 + $0x720] sm:$0xff]
    %v1335 = vld [vmem:[#allocation15 + $0x728] sm:$0xff]
    %v1336 = vld [vmem:[#allocation15 + $0x730] sm:$0xff]
    %v1337 = vld [vmem:[#allocation15 + $0x738] sm:$0xff]
    %v1338 = vld [vmem:[#allocation15 + $0x740] sm:$0xff]
    %v1339 = vld [vmem:[#allocation15 + $0x748] sm:$0xff]
    %v1340 = vld [vmem:[#allocation15 + $0x750] sm:$0xff]
    %v1341 = vld [vmem:[#allocation15 + $0x758] sm:$0xff]
    %v1342 = vld [vmem:[#allocation15 + $0x760] sm:$0xff]
    %v1343 = vld [vmem:[#allocation15 + $0x768] sm:$0xff]
    %v1344 = vld [vmem:[#allocation15 + $0x770] sm:$0xff]
    %v1345 = vld [vmem:[#allocation15 + $0x778] sm:$0xff]
    %v1346 = vld [vmem:[#allocation15 + $0x780] sm:$0xff]
    %v1347 = vld [vmem:[#allocation15 + $0x788] sm:$0xff]
    %v1348 = vld [vmem:[#allocation15 + $0x790] sm:$0xff]
    %v1349 = vld [vmem:[#allocation15 + $0x798] sm:$0xff]
    %v1350 = vld [vmem:[#allocation15 + $0x7a0] sm:$0xff]
    %v1351 = vld [vmem:[#allocation15 + $0x7a8] sm:$0xff]
    %v1352 = vld [vmem:[#allocation15 + $0x7b0] sm:$0xff]
    %v1353 = vld [vmem:[#allocation15 + $0x7b8] sm:$0xff]
    %v1354 = vld [vmem:[#allocation15 + $0x7c0] sm:$0xff]
    %v1355 = vld [vmem:[#allocation15 + $0x7c8] sm:$0xff]
    %v1356 = vld [vmem:[#allocation15 + $0x7d0] sm:$0xff]
    %v1357 = vld [vmem:[#allocation15 + $0x7d8] sm:$0xff]
    %v1358 = vld [vmem:[#allocation15 + $0x7e0] sm:$0xff]
    %v1359 = vld [vmem:[#allocation15 + $0x7e8] sm:$0xff]
    %v1360 = vld [vmem:[#allocation15 + $0x7f0] sm:$0xff]
    %v1361 = vld [vmem:[#allocation15 + $0x7f8] sm:$0xff]
    %v1362 = vld [vmem:[%s12] sm:$0xff]
    %v1364 = vlaneseq
    %v1365 = vshrl.u32 %v1364, 7
    %v1366 = vsub.s32 0, %v1365
    %v1367 = vrot.slane %v1362, %v1366
    %v1368 = vlaneseq
    %v1369 = vshrl.u32 %v1368, 7
    %v1370 = vsub.s32 1, %v1369
    %v1371 = vrot.slane %v1362, %v1370
    %v1372 = vlaneseq
    %v1373 = vshrl.u32 %v1372, 7
    %v1374 = vsub.s32 2, %v1373
    %v1375 = vrot.slane %v1362, %v1374
    %v1376 = vlaneseq
    %v1377 = vshrl.u32 %v1376, 7
    %v1378 = vsub.s32 3, %v1377
    %v1379 = vrot.slane %v1362, %v1378
    %v1380 = vlaneseq
    %v1381 = vshrl.u32 %v1380, 7
    %v1382 = vsub.s32 4, %v1381
    %v1383 = vrot.slane %v1362, %v1382
    %v1384 = vlaneseq
    %v1385 = vshrl.u32 %v1384, 7
    %v1386 = vsub.s32 5, %v1385
    %v1387 = vrot.slane %v1362, %v1386
    %v1388 = vlaneseq
    %v1389 = vshrl.u32 %v1388, 7
    %v1390 = vsub.s32 6, %v1389
    %v1391 = vrot.slane %v1362, %v1390
    %v1392 = vlaneseq
    %v1393 = vshrl.u32 %v1392, 7
    %v1394 = vsub.s32 7, %v1393
    %v1395 = vrot.slane %v1362, %v1394
    %v1660 = vunpack.c.l.b16 %v1106
    %v1661 = vunpack.c.h.b16 %v1106
    %v1662 = vunpack.c.l.b16 %v1107
    %v1663 = vunpack.c.h.b16 %v1107
    %v1664 = vunpack.c.l.b16 %v1108
    %v1665 = vunpack.c.h.b16 %v1108
    %v1666 = vunpack.c.l.b16 %v1109
    %v1667 = vunpack.c.h.b16 %v1109
    %v1668 = vunpack.c.l.b16 %v1110
    %v1669 = vunpack.c.h.b16 %v1110
    %v1670 = vunpack.c.l.b16 %v1111
    %v1671 = vunpack.c.h.b16 %v1111
    %v1672 = vunpack.c.l.b16 %v1112
    %v1673 = vunpack.c.h.b16 %v1112
    %v1674 = vunpack.c.l.b16 %v1113
    %v1675 = vunpack.c.h.b16 %v1113
    %v1676 = vunpack.c.l.b16 %v1114
    %v1677 = vunpack.c.h.b16 %v1114
    %v1678 = vunpack.c.l.b16 %v1115
    %v1679 = vunpack.c.h.b16 %v1115
    %v1680 = vunpack.c.l.b16 %v1116
    %v1681 = vunpack.c.h.b16 %v1116
    %v1682 = vunpack.c.l.b16 %v1117
    %v1683 = vunpack.c.h.b16 %v1117
    %v1684 = vunpack.c.l.b16 %v1118
    %v1685 = vunpack.c.h.b16 %v1118
    %v1686 = vunpack.c.l.b16 %v1119
    %v1687 = vunpack.c.h.b16 %v1119
    %v1688 = vunpack.c.l.b16 %v1120
    %v1689 = vunpack.c.h.b16 %v1120
    %v1690 = vunpack.c.l.b16 %v1121
    %v1691 = vunpack.c.h.b16 %v1121
    %v1692 = vunpack.c.l.b16 %v1122
    %v1693 = vunpack.c.h.b16 %v1122
    %v1694 = vunpack.c.l.b16 %v1123
    %v1695 = vunpack.c.h.b16 %v1123
    %v1696 = vunpack.c.l.b16 %v1124
    %v1697 = vunpack.c.h.b16 %v1124
    %v1698 = vunpack.c.l.b16 %v1125
    %v1699 = vunpack.c.h.b16 %v1125
    %v1700 = vunpack.c.l.b16 %v1126
    %v1701 = vunpack.c.h.b16 %v1126
    %v1702 = vunpack.c.l.b16 %v1127
    %v1703 = vunpack.c.h.b16 %v1127
    %v1704 = vunpack.c.l.b16 %v1128
    %v1705 = vunpack.c.h.b16 %v1128
    %v1706 = vunpack.c.l.b16 %v1129
    %v1707 = vunpack.c.h.b16 %v1129
    %v1708 = vunpack.c.l.b16 %v1130
    %v1709 = vunpack.c.h.b16 %v1130
    %v1710 = vunpack.c.l.b16 %v1131
    %v1711 = vunpack.c.h.b16 %v1131
    %v1712 = vunpack.c.l.b16 %v1132
    %v1713 = vunpack.c.h.b16 %v1132
    %v1714 = vunpack.c.l.b16 %v1133
    %v1715 = vunpack.c.h.b16 %v1133
    %v1716 = vunpack.c.l.b16 %v1134
    %v1717 = vunpack.c.h.b16 %v1134
    %v1718 = vunpack.c.l.b16 %v1135
    %v1719 = vunpack.c.h.b16 %v1135
    %v1720 = vunpack.c.l.b16 %v1136
    %v1721 = vunpack.c.h.b16 %v1136
    %v1722 = vunpack.c.l.b16 %v1137
    %v1723 = vunpack.c.h.b16 %v1137
    %v1724 = vunpack.c.l.b16 %v1138
    %v1725 = vunpack.c.h.b16 %v1138
    %v1726 = vunpack.c.l.b16 %v1139
    %v1727 = vunpack.c.h.b16 %v1139
    %v1728 = vunpack.c.l.b16 %v1140
    %v1729 = vunpack.c.h.b16 %v1140
    %v1730 = vunpack.c.l.b16 %v1141
    %v1731 = vunpack.c.h.b16 %v1141
    %v1732 = vunpack.c.l.b16 %v1142
    %v1733 = vunpack.c.h.b16 %v1142
    %v1734 = vunpack.c.l.b16 %v1143
    %v1735 = vunpack.c.h.b16 %v1143
    %v1736 = vunpack.c.l.b16 %v1144
    %v1737 = vunpack.c.h.b16 %v1144
    %v1738 = vunpack.c.l.b16 %v1145
    %v1739 = vunpack.c.h.b16 %v1145
    %v1740 = vunpack.c.l.b16 %v1146
    %v1741 = vunpack.c.h.b16 %v1146
    %v1742 = vunpack.c.l.b16 %v1147
    %v1743 = vunpack.c.h.b16 %v1147
    %v1744 = vunpack.c.l.b16 %v1148
    %v1745 = vunpack.c.h.b16 %v1148
    %v1746 = vunpack.c.l.b16 %v1149
    %v1747 = vunpack.c.h.b16 %v1149
    %v1748 = vunpack.c.l.b16 %v1150
    %v1749 = vunpack.c.h.b16 %v1150
    %v1750 = vunpack.c.l.b16 %v1151
    %v1751 = vunpack.c.h.b16 %v1151
    %v1752 = vunpack.c.l.b16 %v1152
    %v1753 = vunpack.c.h.b16 %v1152
    %v1754 = vunpack.c.l.b16 %v1153
    %v1755 = vunpack.c.h.b16 %v1153
    %v1756 = vunpack.c.l.b16 %v1154
    %v1757 = vunpack.c.h.b16 %v1154
    %v1758 = vunpack.c.l.b16 %v1155
    %v1759 = vunpack.c.h.b16 %v1155
    %v1760 = vunpack.c.l.b16 %v1156
    %v1761 = vunpack.c.h.b16 %v1156
    %v1762 = vunpack.c.l.b16 %v1157
    %v1763 = vunpack.c.h.b16 %v1157
    %v1764 = vunpack.c.l.b16 %v1158
    %v1765 = vunpack.c.h.b16 %v1158
    %v1766 = vunpack.c.l.b16 %v1159
    %v1767 = vunpack.c.h.b16 %v1159
    %v1768 = vunpack.c.l.b16 %v1160
    %v1769 = vunpack.c.h.b16 %v1160
    %v1770 = vunpack.c.l.b16 %v1161
    %v1771 = vunpack.c.h.b16 %v1161
    %v1772 = vunpack.c.l.b16 %v1162
    %v1773 = vunpack.c.h.b16 %v1162
    %v1774 = vunpack.c.l.b16 %v1163
    %v1775 = vunpack.c.h.b16 %v1163
    %v1776 = vunpack.c.l.b16 %v1164
    %v1777 = vunpack.c.h.b16 %v1164
    %v1778 = vunpack.c.l.b16 %v1165
    %v1779 = vunpack.c.h.b16 %v1165
    %v1780 = vunpack.c.l.b16 %v1166
    %v1781 = vunpack.c.h.b16 %v1166
    %v1782 = vunpack.c.l.b16 %v1167
    %v1783 = vunpack.c.h.b16 %v1167
    %v1784 = vunpack.c.l.b16 %v1168
    %v1785 = vunpack.c.h.b16 %v1168
    %v1786 = vunpack.c.l.b16 %v1169
    %v1787 = vunpack.c.h.b16 %v1169
    %v1788 = vunpack.c.l.b16 %v1170
    %v1789 = vunpack.c.h.b16 %v1170
    %v1790 = vunpack.c.l.b16 %v1171
    %v1791 = vunpack.c.h.b16 %v1171
    %v1792 = vunpack.c.l.b16 %v1172
    %v1793 = vunpack.c.h.b16 %v1172
    %v1794 = vunpack.c.l.b16 %v1173
    %v1795 = vunpack.c.h.b16 %v1173
    %v1796 = vunpack.c.l.b16 %v1174
    %v1797 = vunpack.c.h.b16 %v1174
    %v1798 = vunpack.c.l.b16 %v1175
    %v1799 = vunpack.c.h.b16 %v1175
    %v1800 = vunpack.c.l.b16 %v1176
    %v1801 = vunpack.c.h.b16 %v1176
    %v1802 = vunpack.c.l.b16 %v1177
    %v1803 = vunpack.c.h.b16 %v1177
    %v1804 = vunpack.c.l.b16 %v1178
    %v1805 = vunpack.c.h.b16 %v1178
    %v1806 = vunpack.c.l.b16 %v1179
    %v1807 = vunpack.c.h.b16 %v1179
    %v1808 = vunpack.c.l.b16 %v1180
    %v1809 = vunpack.c.h.b16 %v1180
    %v1810 = vunpack.c.l.b16 %v1181
    %v1811 = vunpack.c.h.b16 %v1181
    %v1812 = vunpack.c.l.b16 %v1182
    %v1813 = vunpack.c.h.b16 %v1182
    %v1814 = vunpack.c.l.b16 %v1183
    %v1815 = vunpack.c.h.b16 %v1183
    %v1816 = vunpack.c.l.b16 %v1184
    %v1817 = vunpack.c.h.b16 %v1184
    %v1818 = vunpack.c.l.b16 %v1185
    %v1819 = vunpack.c.h.b16 %v1185
    %v1820 = vunpack.c.l.b16 %v1186
    %v1821 = vunpack.c.h.b16 %v1186
    %v1822 = vunpack.c.l.b16 %v1187
    %v1823 = vunpack.c.h.b16 %v1187
    %v1824 = vunpack.c.l.b16 %v1188
    %v1825 = vunpack.c.h.b16 %v1188
    %v1826 = vunpack.c.l.b16 %v1189
    %v1827 = vunpack.c.h.b16 %v1189
    %v1828 = vunpack.c.l.b16 %v1190
    %v1829 = vunpack.c.h.b16 %v1190
    %v1830 = vunpack.c.l.b16 %v1191
    %v1831 = vunpack.c.h.b16 %v1191
    %v1832 = vunpack.c.l.b16 %v1192
    %v1833 = vunpack.c.h.b16 %v1192
    %v1834 = vunpack.c.l.b16 %v1193
    %v1835 = vunpack.c.h.b16 %v1193
    %v1836 = vunpack.c.l.b16 %v1194
    %v1837 = vunpack.c.h.b16 %v1194
    %v1838 = vunpack.c.l.b16 %v1195
    %v1839 = vunpack.c.h.b16 %v1195
    %v1840 = vunpack.c.l.b16 %v1196
    %v1841 = vunpack.c.h.b16 %v1196
    %v1842 = vunpack.c.l.b16 %v1197
    %v1843 = vunpack.c.h.b16 %v1197
    %v1844 = vunpack.c.l.b16 %v1198
    %v1845 = vunpack.c.h.b16 %v1198
    %v1846 = vunpack.c.l.b16 %v1199
    %v1847 = vunpack.c.h.b16 %v1199
    %v1848 = vunpack.c.l.b16 %v1200
    %v1849 = vunpack.c.h.b16 %v1200
    %v1850 = vunpack.c.l.b16 %v1201
    %v1851 = vunpack.c.h.b16 %v1201
    %v1852 = vunpack.c.l.b16 %v1202
    %v1853 = vunpack.c.h.b16 %v1202
    %v1854 = vunpack.c.l.b16 %v1203
    %v1855 = vunpack.c.h.b16 %v1203
    %v1856 = vunpack.c.l.b16 %v1204
    %v1857 = vunpack.c.h.b16 %v1204
    %v1858 = vunpack.c.l.b16 %v1205
    %v1859 = vunpack.c.h.b16 %v1205
    %v1860 = vunpack.c.l.b16 %v1206
    %v1861 = vunpack.c.h.b16 %v1206
    %v1862 = vunpack.c.l.b16 %v1207
    %v1863 = vunpack.c.h.b16 %v1207
    %v1864 = vunpack.c.l.b16 %v1208
    %v1865 = vunpack.c.h.b16 %v1208
    %v1866 = vunpack.c.l.b16 %v1209
    %v1867 = vunpack.c.h.b16 %v1209
    %v1868 = vunpack.c.l.b16 %v1210
    %v1869 = vunpack.c.h.b16 %v1210
    %v1870 = vunpack.c.l.b16 %v1211
    %v1871 = vunpack.c.h.b16 %v1211
    %v1872 = vunpack.c.l.b16 %v1212
    %v1873 = vunpack.c.h.b16 %v1212
    %v1874 = vunpack.c.l.b16 %v1213
    %v1875 = vunpack.c.h.b16 %v1213
    %v1876 = vunpack.c.l.b16 %v1214
    %v1877 = vunpack.c.h.b16 %v1214
    %v1878 = vunpack.c.l.b16 %v1215
    %v1879 = vunpack.c.h.b16 %v1215
    %v1880 = vunpack.c.l.b16 %v1216
    %v1881 = vunpack.c.h.b16 %v1216
    %v1882 = vunpack.c.l.b16 %v1217
    %v1883 = vunpack.c.h.b16 %v1217
    %v1884 = vunpack.c.l.b16 %v1218
    %v1885 = vunpack.c.h.b16 %v1218
    %v1886 = vunpack.c.l.b16 %v1219
    %v1887 = vunpack.c.h.b16 %v1219
    %v1888 = vunpack.c.l.b16 %v1220
    %v1889 = vunpack.c.h.b16 %v1220
    %v1890 = vunpack.c.l.b16 %v1221
    %v1891 = vunpack.c.h.b16 %v1221
    %v1892 = vunpack.c.l.b16 %v1222
    %v1893 = vunpack.c.h.b16 %v1222
    %v1894 = vunpack.c.l.b16 %v1223
    %v1895 = vunpack.c.h.b16 %v1223
    %v1896 = vunpack.c.l.b16 %v1224
    %v1897 = vunpack.c.h.b16 %v1224
    %v1898 = vunpack.c.l.b16 %v1225
    %v1899 = vunpack.c.h.b16 %v1225
    %v1900 = vunpack.c.l.b16 %v1226
    %v1901 = vunpack.c.h.b16 %v1226
    %v1902 = vunpack.c.l.b16 %v1227
    %v1903 = vunpack.c.h.b16 %v1227
    %v1904 = vunpack.c.l.b16 %v1228
    %v1905 = vunpack.c.h.b16 %v1228
    %v1906 = vunpack.c.l.b16 %v1229
    %v1907 = vunpack.c.h.b16 %v1229
    %v1908 = vunpack.c.l.b16 %v1230
    %v1909 = vunpack.c.h.b16 %v1230
    %v1910 = vunpack.c.l.b16 %v1231
    %v1911 = vunpack.c.h.b16 %v1231
    %v1912 = vunpack.c.l.b16 %v1232
    %v1913 = vunpack.c.h.b16 %v1232
    %v1914 = vunpack.c.l.b16 %v1233
    %v1915 = vunpack.c.h.b16 %v1233
    %v1916 = vunpack.c.l.b16 %v1234
    %v1917 = vunpack.c.h.b16 %v1234
    %v1918 = vunpack.c.l.b16 %v1235
    %v1919 = vunpack.c.h.b16 %v1235
    %v1920 = vunpack.c.l.b16 %v1236
    %v1921 = vunpack.c.h.b16 %v1236
    %v1922 = vunpack.c.l.b16 %v1237
    %v1923 = vunpack.c.h.b16 %v1237
    %v1924 = vunpack.c.l.b16 %v1238
    %v1925 = vunpack.c.h.b16 %v1238
    %v1926 = vunpack.c.l.b16 %v1239
    %v1927 = vunpack.c.h.b16 %v1239
    %v1928 = vunpack.c.l.b16 %v1240
    %v1929 = vunpack.c.h.b16 %v1240
    %v1930 = vunpack.c.l.b16 %v1241
    %v1931 = vunpack.c.h.b16 %v1241
    %v1932 = vunpack.c.l.b16 %v1242
    %v1933 = vunpack.c.h.b16 %v1242
    %v1934 = vunpack.c.l.b16 %v1243
    %v1935 = vunpack.c.h.b16 %v1243
    %v1936 = vunpack.c.l.b16 %v1244
    %v1937 = vunpack.c.h.b16 %v1244
    %v1938 = vunpack.c.l.b16 %v1245
    %v1939 = vunpack.c.h.b16 %v1245
    %v1940 = vunpack.c.l.b16 %v1246
    %v1941 = vunpack.c.h.b16 %v1246
    %v1942 = vunpack.c.l.b16 %v1247
    %v1943 = vunpack.c.h.b16 %v1247
    %v1944 = vunpack.c.l.b16 %v1248
    %v1945 = vunpack.c.h.b16 %v1248
    %v1946 = vunpack.c.l.b16 %v1249
    %v1947 = vunpack.c.h.b16 %v1249
    %v1948 = vunpack.c.l.b16 %v1250
    %v1949 = vunpack.c.h.b16 %v1250
    %v1950 = vunpack.c.l.b16 %v1251
    %v1951 = vunpack.c.h.b16 %v1251
    %v1952 = vunpack.c.l.b16 %v1252
    %v1953 = vunpack.c.h.b16 %v1252
    %v1954 = vunpack.c.l.b16 %v1253
    %v1955 = vunpack.c.h.b16 %v1253
    %v1956 = vunpack.c.l.b16 %v1254
    %v1957 = vunpack.c.h.b16 %v1254
    %v1958 = vunpack.c.l.b16 %v1255
    %v1959 = vunpack.c.h.b16 %v1255
    %v1960 = vunpack.c.l.b16 %v1256
    %v1961 = vunpack.c.h.b16 %v1256
    %v1962 = vunpack.c.l.b16 %v1257
    %v1963 = vunpack.c.h.b16 %v1257
    %v1964 = vunpack.c.l.b16 %v1258
    %v1965 = vunpack.c.h.b16 %v1258
    %v1966 = vunpack.c.l.b16 %v1259
    %v1967 = vunpack.c.h.b16 %v1259
    %v1968 = vunpack.c.l.b16 %v1260
    %v1969 = vunpack.c.h.b16 %v1260
    %v1970 = vunpack.c.l.b16 %v1261
    %v1971 = vunpack.c.h.b16 %v1261
    %v1972 = vunpack.c.l.b16 %v1262
    %v1973 = vunpack.c.h.b16 %v1262
    %v1974 = vunpack.c.l.b16 %v1263
    %v1975 = vunpack.c.h.b16 %v1263
    %v1976 = vunpack.c.l.b16 %v1264
    %v1977 = vunpack.c.h.b16 %v1264
    %v1978 = vunpack.c.l.b16 %v1265
    %v1979 = vunpack.c.h.b16 %v1265
    %v1980 = vunpack.c.l.b16 %v1266
    %v1981 = vunpack.c.h.b16 %v1266
    %v1982 = vunpack.c.l.b16 %v1267
    %v1983 = vunpack.c.h.b16 %v1267
    %v1984 = vunpack.c.l.b16 %v1268
    %v1985 = vunpack.c.h.b16 %v1268
    %v1986 = vunpack.c.l.b16 %v1269
    %v1987 = vunpack.c.h.b16 %v1269
    %v1988 = vunpack.c.l.b16 %v1270
    %v1989 = vunpack.c.h.b16 %v1270
    %v1990 = vunpack.c.l.b16 %v1271
    %v1991 = vunpack.c.h.b16 %v1271
    %v1992 = vunpack.c.l.b16 %v1272
    %v1993 = vunpack.c.h.b16 %v1272
    %v1994 = vunpack.c.l.b16 %v1273
    %v1995 = vunpack.c.h.b16 %v1273
    %v1996 = vunpack.c.l.b16 %v1274
    %v1997 = vunpack.c.h.b16 %v1274
    %v1998 = vunpack.c.l.b16 %v1275
    %v1999 = vunpack.c.h.b16 %v1275
    %v2000 = vunpack.c.l.b16 %v1276
    %v2001 = vunpack.c.h.b16 %v1276
    %v2002 = vunpack.c.l.b16 %v1277
    %v2003 = vunpack.c.h.b16 %v1277
    %v2004 = vunpack.c.l.b16 %v1278
    %v2005 = vunpack.c.h.b16 %v1278
    %v2006 = vunpack.c.l.b16 %v1279
    %v2007 = vunpack.c.h.b16 %v1279
    %v2008 = vunpack.c.l.b16 %v1280
    %v2009 = vunpack.c.h.b16 %v1280
    %v2010 = vunpack.c.l.b16 %v1281
    %v2011 = vunpack.c.h.b16 %v1281
    %v2012 = vunpack.c.l.b16 %v1282
    %v2013 = vunpack.c.h.b16 %v1282
    %v2014 = vunpack.c.l.b16 %v1283
    %v2015 = vunpack.c.h.b16 %v1283
    %v2016 = vunpack.c.l.b16 %v1284
    %v2017 = vunpack.c.h.b16 %v1284
    %v2018 = vunpack.c.l.b16 %v1285
    %v2019 = vunpack.c.h.b16 %v1285
    %v2020 = vunpack.c.l.b16 %v1286
    %v2021 = vunpack.c.h.b16 %v1286
    %v2022 = vunpack.c.l.b16 %v1287
    %v2023 = vunpack.c.h.b16 %v1287
    %v2024 = vunpack.c.l.b16 %v1288
    %v2025 = vunpack.c.h.b16 %v1288
    %v2026 = vunpack.c.l.b16 %v1289
    %v2027 = vunpack.c.h.b16 %v1289
    %v2028 = vunpack.c.l.b16 %v1290
    %v2029 = vunpack.c.h.b16 %v1290
    %v2030 = vunpack.c.l.b16 %v1291
    %v2031 = vunpack.c.h.b16 %v1291
    %v2032 = vunpack.c.l.b16 %v1292
    %v2033 = vunpack.c.h.b16 %v1292
    %v2034 = vunpack.c.l.b16 %v1293
    %v2035 = vunpack.c.h.b16 %v1293
    %v2036 = vunpack.c.l.b16 %v1294
    %v2037 = vunpack.c.h.b16 %v1294
    %v2038 = vunpack.c.l.b16 %v1295
    %v2039 = vunpack.c.h.b16 %v1295
    %v2040 = vunpack.c.l.b16 %v1296
    %v2041 = vunpack.c.h.b16 %v1296
    %v2042 = vunpack.c.l.b16 %v1297
    %v2043 = vunpack.c.h.b16 %v1297
    %v2044 = vunpack.c.l.b16 %v1298
    %v2045 = vunpack.c.h.b16 %v1298
    %v2046 = vunpack.c.l.b16 %v1299
    %v2047 = vunpack.c.h.b16 %v1299
    %v2048 = vunpack.c.l.b16 %v1300
    %v2049 = vunpack.c.h.b16 %v1300
    %v2050 = vunpack.c.l.b16 %v1301
    %v2051 = vunpack.c.h.b16 %v1301
    %v2052 = vunpack.c.l.b16 %v1302
    %v2053 = vunpack.c.h.b16 %v1302
    %v2054 = vunpack.c.l.b16 %v1303
    %v2055 = vunpack.c.h.b16 %v1303
    %v2056 = vunpack.c.l.b16 %v1304
    %v2057 = vunpack.c.h.b16 %v1304
    %v2058 = vunpack.c.l.b16 %v1305
    %v2059 = vunpack.c.h.b16 %v1305
    %v2060 = vunpack.c.l.b16 %v1306
    %v2061 = vunpack.c.h.b16 %v1306
    %v2062 = vunpack.c.l.b16 %v1307
    %v2063 = vunpack.c.h.b16 %v1307
    %v2064 = vunpack.c.l.b16 %v1308
    %v2065 = vunpack.c.h.b16 %v1308
    %v2066 = vunpack.c.l.b16 %v1309
    %v2067 = vunpack.c.h.b16 %v1309
    %v2068 = vunpack.c.l.b16 %v1310
    %v2069 = vunpack.c.h.b16 %v1310
    %v2070 = vunpack.c.l.b16 %v1311
    %v2071 = vunpack.c.h.b16 %v1311
    %v2072 = vunpack.c.l.b16 %v1312
    %v2073 = vunpack.c.h.b16 %v1312
    %v2074 = vunpack.c.l.b16 %v1313
    %v2075 = vunpack.c.h.b16 %v1313
    %v2076 = vunpack.c.l.b16 %v1314
    %v2077 = vunpack.c.h.b16 %v1314
    %v2078 = vunpack.c.l.b16 %v1315
    %v2079 = vunpack.c.h.b16 %v1315
    %v2080 = vunpack.c.l.b16 %v1316
    %v2081 = vunpack.c.h.b16 %v1316
    %v2082 = vunpack.c.l.b16 %v1317
    %v2083 = vunpack.c.h.b16 %v1317
    %v2084 = vunpack.c.l.b16 %v1318
    %v2085 = vunpack.c.h.b16 %v1318
    %v2086 = vunpack.c.l.b16 %v1319
    %v2087 = vunpack.c.h.b16 %v1319
    %v2088 = vunpack.c.l.b16 %v1320
    %v2089 = vunpack.c.h.b16 %v1320
    %v2090 = vunpack.c.l.b16 %v1321
    %v2091 = vunpack.c.h.b16 %v1321
    %v2092 = vunpack.c.l.b16 %v1322
    %v2093 = vunpack.c.h.b16 %v1322
    %v2094 = vunpack.c.l.b16 %v1323
    %v2095 = vunpack.c.h.b16 %v1323
    %v2096 = vunpack.c.l.b16 %v1324
    %v2097 = vunpack.c.h.b16 %v1324
    %v2098 = vunpack.c.l.b16 %v1325
    %v2099 = vunpack.c.h.b16 %v1325
    %v2100 = vunpack.c.l.b16 %v1326
    %v2101 = vunpack.c.h.b16 %v1326
    %v2102 = vunpack.c.l.b16 %v1327
    %v2103 = vunpack.c.h.b16 %v1327
    %v2104 = vunpack.c.l.b16 %v1328
    %v2105 = vunpack.c.h.b16 %v1328
    %v2106 = vunpack.c.l.b16 %v1329
    %v2107 = vunpack.c.h.b16 %v1329
    %v2108 = vunpack.c.l.b16 %v1330
    %v2109 = vunpack.c.h.b16 %v1330
    %v2110 = vunpack.c.l.b16 %v1331
    %v2111 = vunpack.c.h.b16 %v1331
    %v2112 = vunpack.c.l.b16 %v1332
    %v2113 = vunpack.c.h.b16 %v1332
    %v2114 = vunpack.c.l.b16 %v1333
    %v2115 = vunpack.c.h.b16 %v1333
    %v2116 = vunpack.c.l.b16 %v1334
    %v2117 = vunpack.c.h.b16 %v1334
    %v2118 = vunpack.c.l.b16 %v1335
    %v2119 = vunpack.c.h.b16 %v1335
    %v2120 = vunpack.c.l.b16 %v1336
    %v2121 = vunpack.c.h.b16 %v1336
    %v2122 = vunpack.c.l.b16 %v1337
    %v2123 = vunpack.c.h.b16 %v1337
    %v2124 = vunpack.c.l.b16 %v1338
    %v2125 = vunpack.c.h.b16 %v1338
    %v2126 = vunpack.c.l.b16 %v1339
    %v2127 = vunpack.c.h.b16 %v1339
    %v2128 = vunpack.c.l.b16 %v1340
    %v2129 = vunpack.c.h.b16 %v1340
    %v2130 = vunpack.c.l.b16 %v1341
    %v2131 = vunpack.c.h.b16 %v1341
    %v2132 = vunpack.c.l.b16 %v1342
    %v2133 = vunpack.c.h.b16 %v1342
    %v2134 = vunpack.c.l.b16 %v1343
    %v2135 = vunpack.c.h.b16 %v1343
    %v2136 = vunpack.c.l.b16 %v1344
    %v2137 = vunpack.c.h.b16 %v1344
    %v2138 = vunpack.c.l.b16 %v1345
    %v2139 = vunpack.c.h.b16 %v1345
    %v2140 = vunpack.c.l.b16 %v1346
    %v2141 = vunpack.c.h.b16 %v1346
    %v2142 = vunpack.c.l.b16 %v1347
    %v2143 = vunpack.c.h.b16 %v1347
    %v2144 = vunpack.c.l.b16 %v1348
    %v2145 = vunpack.c.h.b16 %v1348
    %v2146 = vunpack.c.l.b16 %v1349
    %v2147 = vunpack.c.h.b16 %v1349
    %v2148 = vunpack.c.l.b16 %v1350
    %v2149 = vunpack.c.h.b16 %v1350
    %v2150 = vunpack.c.l.b16 %v1351
    %v2151 = vunpack.c.h.b16 %v1351
    %v2152 = vunpack.c.l.b16 %v1352
    %v2153 = vunpack.c.h.b16 %v1352
    %v2154 = vunpack.c.l.b16 %v1353
    %v2155 = vunpack.c.h.b16 %v1353
    %v2156 = vunpack.c.l.b16 %v1354
    %v2157 = vunpack.c.h.b16 %v1354
    %v2158 = vunpack.c.l.b16 %v1355
    %v2159 = vunpack.c.h.b16 %v1355
    %v2160 = vunpack.c.l.b16 %v1356
    %v2161 = vunpack.c.h.b16 %v1356
    %v2162 = vunpack.c.l.b16 %v1357
    %v2163 = vunpack.c.h.b16 %v1357
    %v2164 = vunpack.c.l.b16 %v1358
    %v2165 = vunpack.c.h.b16 %v1358
    %v2166 = vunpack.c.l.b16 %v1359
    %v2167 = vunpack.c.h.b16 %v1359
    %v2168 = vunpack.c.l.b16 %v1360
    %v2169 = vunpack.c.h.b16 %v1360
    %v2170 = vunpack.c.l.b16 %v1361
    %v2171 = vunpack.c.h.b16 %v1361
    %v2172 = vpack.c.b16 %v1668, %v1660
    %v2173 = vpack.c.b16 %v1669, %v1661
    %v2174 = vpack.c.b16 %v1670, %v1662
    %v2175 = vpack.c.b16 %v1671, %v1663
    %v2176 = vpack.c.b16 %v1672, %v1664
    %v2177 = vpack.c.b16 %v1673, %v1665
    %v2178 = vpack.c.b16 %v1674, %v1666
    %v2179 = vpack.c.b16 %v1675, %v1667
    %v2180 = vpack.c.b16 %v1684, %v1676
    %v2181 = vpack.c.b16 %v1685, %v1677
    %v2182 = vpack.c.b16 %v1686, %v1678
    %v2183 = vpack.c.b16 %v1687, %v1679
    %v2184 = vpack.c.b16 %v1688, %v1680
    %v2185 = vpack.c.b16 %v1689, %v1681
    %v2186 = vpack.c.b16 %v1690, %v1682
    %v2187 = vpack.c.b16 %v1691, %v1683
    %v2188 = vpack.c.b16 %v1700, %v1692
    %v2189 = vpack.c.b16 %v1701, %v1693
    %v2190 = vpack.c.b16 %v1702, %v1694
    %v2191 = vpack.c.b16 %v1703, %v1695
    %v2192 = vpack.c.b16 %v1704, %v1696
    %v2193 = vpack.c.b16 %v1705, %v1697
    %v2194 = vpack.c.b16 %v1706, %v1698
    %v2195 = vpack.c.b16 %v1707, %v1699
    %v2196 = vpack.c.b16 %v1716, %v1708
    %v2197 = vpack.c.b16 %v1717, %v1709
    %v2198 = vpack.c.b16 %v1718, %v1710
    %v2199 = vpack.c.b16 %v1719, %v1711
    %v2200 = vpack.c.b16 %v1720, %v1712
    %v2201 = vpack.c.b16 %v1721, %v1713
    %v2202 = vpack.c.b16 %v1722, %v1714
    %v2203 = vpack.c.b16 %v1723, %v1715
    %v2204 = vpack.c.b16 %v1732, %v1724
    %v2205 = vpack.c.b16 %v1733, %v1725
    %v2206 = vpack.c.b16 %v1734, %v1726
    %v2207 = vpack.c.b16 %v1735, %v1727
    %v2208 = vpack.c.b16 %v1736, %v1728
    %v2209 = vpack.c.b16 %v1737, %v1729
    %v2210 = vpack.c.b16 %v1738, %v1730
    %v2211 = vpack.c.b16 %v1739, %v1731
    %v2212 = vpack.c.b16 %v1748, %v1740
    %v2213 = vpack.c.b16 %v1749, %v1741
    %v2214 = vpack.c.b16 %v1750, %v1742
    %v2215 = vpack.c.b16 %v1751, %v1743
    %v2216 = vpack.c.b16 %v1752, %v1744
    %v2217 = vpack.c.b16 %v1753, %v1745
    %v2218 = vpack.c.b16 %v1754, %v1746
    %v2219 = vpack.c.b16 %v1755, %v1747
    %v2220 = vpack.c.b16 %v1764, %v1756
    %v2221 = vpack.c.b16 %v1765, %v1757
    %v2222 = vpack.c.b16 %v1766, %v1758
    %v2223 = vpack.c.b16 %v1767, %v1759
    %v2224 = vpack.c.b16 %v1768, %v1760
    %v2225 = vpack.c.b16 %v1769, %v1761
    %v2226 = vpack.c.b16 %v1770, %v1762
    %v2227 = vpack.c.b16 %v1771, %v1763
    %v2228 = vpack.c.b16 %v1780, %v1772
    %v2229 = vpack.c.b16 %v1781, %v1773
    %v2230 = vpack.c.b16 %v1782, %v1774
    %v2231 = vpack.c.b16 %v1783, %v1775
    %v2232 = vpack.c.b16 %v1784, %v1776
    %v2233 = vpack.c.b16 %v1785, %v1777
    %v2234 = vpack.c.b16 %v1786, %v1778
    %v2235 = vpack.c.b16 %v1787, %v1779
    %v2236 = vpack.c.b16 %v1796, %v1788
    %v2237 = vpack.c.b16 %v1797, %v1789
    %v2238 = vpack.c.b16 %v1798, %v1790
    %v2239 = vpack.c.b16 %v1799, %v1791
    %v2240 = vpack.c.b16 %v1800, %v1792
    %v2241 = vpack.c.b16 %v1801, %v1793
    %v2242 = vpack.c.b16 %v1802, %v1794
    %v2243 = vpack.c.b16 %v1803, %v1795
    %v2244 = vpack.c.b16 %v1812, %v1804
    %v2245 = vpack.c.b16 %v1813, %v1805
    %v2246 = vpack.c.b16 %v1814, %v1806
    %v2247 = vpack.c.b16 %v1815, %v1807
    %v2248 = vpack.c.b16 %v1816, %v1808
    %v2249 = vpack.c.b16 %v1817, %v1809
    %v2250 = vpack.c.b16 %v1818, %v1810
    %v2251 = vpack.c.b16 %v1819, %v1811
    %v2252 = vpack.c.b16 %v1828, %v1820
    %v2253 = vpack.c.b16 %v1829, %v1821
    %v2254 = vpack.c.b16 %v1830, %v1822
    %v2255 = vpack.c.b16 %v1831, %v1823
    %v2256 = vpack.c.b16 %v1832, %v1824
    %v2257 = vpack.c.b16 %v1833, %v1825
    %v2258 = vpack.c.b16 %v1834, %v1826
    %v2259 = vpack.c.b16 %v1835, %v1827
    %v2260 = vpack.c.b16 %v1844, %v1836
    %v2261 = vpack.c.b16 %v1845, %v1837
    %v2262 = vpack.c.b16 %v1846, %v1838
    %v2263 = vpack.c.b16 %v1847, %v1839
    %v2264 = vpack.c.b16 %v1848, %v1840
    %v2265 = vpack.c.b16 %v1849, %v1841
    %v2266 = vpack.c.b16 %v1850, %v1842
    %v2267 = vpack.c.b16 %v1851, %v1843
    %v2268 = vpack.c.b16 %v1860, %v1852
    %v2269 = vpack.c.b16 %v1861, %v1853
    %v2270 = vpack.c.b16 %v1862, %v1854
    %v2271 = vpack.c.b16 %v1863, %v1855
    %v2272 = vpack.c.b16 %v1864, %v1856
    %v2273 = vpack.c.b16 %v1865, %v1857
    %v2274 = vpack.c.b16 %v1866, %v1858
    %v2275 = vpack.c.b16 %v1867, %v1859
    %v2276 = vpack.c.b16 %v1876, %v1868
    %v2277 = vpack.c.b16 %v1877, %v1869
    %v2278 = vpack.c.b16 %v1878, %v1870
    %v2279 = vpack.c.b16 %v1879, %v1871
    %v2280 = vpack.c.b16 %v1880, %v1872
    %v2281 = vpack.c.b16 %v1881, %v1873
    %v2282 = vpack.c.b16 %v1882, %v1874
    %v2283 = vpack.c.b16 %v1883, %v1875
    %v2284 = vpack.c.b16 %v1892, %v1884
    %v2285 = vpack.c.b16 %v1893, %v1885
    %v2286 = vpack.c.b16 %v1894, %v1886
    %v2287 = vpack.c.b16 %v1895, %v1887
    %v2288 = vpack.c.b16 %v1896, %v1888
    %v2289 = vpack.c.b16 %v1897, %v1889
    %v2290 = vpack.c.b16 %v1898, %v1890
    %v2291 = vpack.c.b16 %v1899, %v1891
    %v2292 = vpack.c.b16 %v1908, %v1900
    %v2293 = vpack.c.b16 %v1909, %v1901
    %v2294 = vpack.c.b16 %v1910, %v1902
    %v2295 = vpack.c.b16 %v1911, %v1903
    %v2296 = vpack.c.b16 %v1912, %v1904
    %v2297 = vpack.c.b16 %v1913, %v1905
    %v2298 = vpack.c.b16 %v1914, %v1906
    %v2299 = vpack.c.b16 %v1915, %v1907
    %v2300 = vpack.c.b16 %v1924, %v1916
    %v2301 = vpack.c.b16 %v1925, %v1917
    %v2302 = vpack.c.b16 %v1926, %v1918
    %v2303 = vpack.c.b16 %v1927, %v1919
    %v2304 = vpack.c.b16 %v1928, %v1920
    %v2305 = vpack.c.b16 %v1929, %v1921
    %v2306 = vpack.c.b16 %v1930, %v1922
    %v2307 = vpack.c.b16 %v1931, %v1923
    %v2308 = vpack.c.b16 %v1940, %v1932
    %v2309 = vpack.c.b16 %v1941, %v1933
    %v2310 = vpack.c.b16 %v1942, %v1934
    %v2311 = vpack.c.b16 %v1943, %v1935
    %v2312 = vpack.c.b16 %v1944, %v1936
    %v2313 = vpack.c.b16 %v1945, %v1937
    %v2314 = vpack.c.b16 %v1946, %v1938
    %v2315 = vpack.c.b16 %v1947, %v1939
    %v2316 = vpack.c.b16 %v1956, %v1948
    %v2317 = vpack.c.b16 %v1957, %v1949
    %v2318 = vpack.c.b16 %v1958, %v1950
    %v2319 = vpack.c.b16 %v1959, %v1951
    %v2320 = vpack.c.b16 %v1960, %v1952
    %v2321 = vpack.c.b16 %v1961, %v1953
    %v2322 = vpack.c.b16 %v1962, %v1954
    %v2323 = vpack.c.b16 %v1963, %v1955
    %v2324 = vpack.c.b16 %v1972, %v1964
    %v2325 = vpack.c.b16 %v1973, %v1965
    %v2326 = vpack.c.b16 %v1974, %v1966
    %v2327 = vpack.c.b16 %v1975, %v1967
    %v2328 = vpack.c.b16 %v1976, %v1968
    %v2329 = vpack.c.b16 %v1977, %v1969
    %v2330 = vpack.c.b16 %v1978, %v1970
    %v2331 = vpack.c.b16 %v1979, %v1971
    %v2332 = vpack.c.b16 %v1988, %v1980
    %v2333 = vpack.c.b16 %v1989, %v1981
    %v2334 = vpack.c.b16 %v1990, %v1982
    %v2335 = vpack.c.b16 %v1991, %v1983
    %v2336 = vpack.c.b16 %v1992, %v1984
    %v2337 = vpack.c.b16 %v1993, %v1985
    %v2338 = vpack.c.b16 %v1994, %v1986
    %v2339 = vpack.c.b16 %v1995, %v1987
    %v2340 = vpack.c.b16 %v2004, %v1996
    %v2341 = vpack.c.b16 %v2005, %v1997
    %v2342 = vpack.c.b16 %v2006, %v1998
    %v2343 = vpack.c.b16 %v2007, %v1999
    %v2344 = vpack.c.b16 %v2008, %v2000
    %v2345 = vpack.c.b16 %v2009, %v2001
    %v2346 = vpack.c.b16 %v2010, %v2002
    %v2347 = vpack.c.b16 %v2011, %v2003
    %v2348 = vpack.c.b16 %v2020, %v2012
    %v2349 = vpack.c.b16 %v2021, %v2013
    %v2350 = vpack.c.b16 %v2022, %v2014
    %v2351 = vpack.c.b16 %v2023, %v2015
    %v2352 = vpack.c.b16 %v2024, %v2016
    %v2353 = vpack.c.b16 %v2025, %v2017
    %v2354 = vpack.c.b16 %v2026, %v2018
    %v2355 = vpack.c.b16 %v2027, %v2019
    %v2356 = vpack.c.b16 %v2036, %v2028
    %v2357 = vpack.c.b16 %v2037, %v2029
    %v2358 = vpack.c.b16 %v2038, %v2030
    %v2359 = vpack.c.b16 %v2039, %v2031
    %v2360 = vpack.c.b16 %v2040, %v2032
    %v2361 = vpack.c.b16 %v2041, %v2033
    %v2362 = vpack.c.b16 %v2042, %v2034
    %v2363 = vpack.c.b16 %v2043, %v2035
    %v2364 = vpack.c.b16 %v2052, %v2044
    %v2365 = vpack.c.b16 %v2053, %v2045
    %v2366 = vpack.c.b16 %v2054, %v2046
    %v2367 = vpack.c.b16 %v2055, %v2047
    %v2368 = vpack.c.b16 %v2056, %v2048
    %v2369 = vpack.c.b16 %v2057, %v2049
    %v2370 = vpack.c.b16 %v2058, %v2050
    %v2371 = vpack.c.b16 %v2059, %v2051
    %v2372 = vpack.c.b16 %v2068, %v2060
    %v2373 = vpack.c.b16 %v2069, %v2061
    %v2374 = vpack.c.b16 %v2070, %v2062
    %v2375 = vpack.c.b16 %v2071, %v2063
    %v2376 = vpack.c.b16 %v2072, %v2064
    %v2377 = vpack.c.b16 %v2073, %v2065
    %v2378 = vpack.c.b16 %v2074, %v2066
    %v2379 = vpack.c.b16 %v2075, %v2067
    %v2380 = vpack.c.b16 %v2084, %v2076
    %v2381 = vpack.c.b16 %v2085, %v2077
    %v2382 = vpack.c.b16 %v2086, %v2078
    %v2383 = vpack.c.b16 %v2087, %v2079
    %v2384 = vpack.c.b16 %v2088, %v2080
    %v2385 = vpack.c.b16 %v2089, %v2081
    %v2386 = vpack.c.b16 %v2090, %v2082
    %v2387 = vpack.c.b16 %v2091, %v2083
    %v2388 = vpack.c.b16 %v2100, %v2092
    %v2389 = vpack.c.b16 %v2101, %v2093
    %v2390 = vpack.c.b16 %v2102, %v2094
    %v2391 = vpack.c.b16 %v2103, %v2095
    %v2392 = vpack.c.b16 %v2104, %v2096
    %v2393 = vpack.c.b16 %v2105, %v2097
    %v2394 = vpack.c.b16 %v2106, %v2098
    %v2395 = vpack.c.b16 %v2107, %v2099
    %v2396 = vpack.c.b16 %v2116, %v2108
    %v2397 = vpack.c.b16 %v2117, %v2109
    %v2398 = vpack.c.b16 %v2118, %v2110
    %v2399 = vpack.c.b16 %v2119, %v2111
    %v2400 = vpack.c.b16 %v2120, %v2112
    %v2401 = vpack.c.b16 %v2121, %v2113
    %v2402 = vpack.c.b16 %v2122, %v2114
    %v2403 = vpack.c.b16 %v2123, %v2115
    %v2404 = vpack.c.b16 %v2132, %v2124
    %v2405 = vpack.c.b16 %v2133, %v2125
    %v2406 = vpack.c.b16 %v2134, %v2126
    %v2407 = vpack.c.b16 %v2135, %v2127
    %v2408 = vpack.c.b16 %v2136, %v2128
    %v2409 = vpack.c.b16 %v2137, %v2129
    %v2410 = vpack.c.b16 %v2138, %v2130
    %v2411 = vpack.c.b16 %v2139, %v2131
    %v2412 = vpack.c.b16 %v2148, %v2140
    %v2413 = vpack.c.b16 %v2149, %v2141
    %v2414 = vpack.c.b16 %v2150, %v2142
    %v2415 = vpack.c.b16 %v2151, %v2143
    %v2416 = vpack.c.b16 %v2152, %v2144
    %v2417 = vpack.c.b16 %v2153, %v2145
    %v2418 = vpack.c.b16 %v2154, %v2146
    %v2419 = vpack.c.b16 %v2155, %v2147
    %v2420 = vpack.c.b16 %v2164, %v2156
    %v2421 = vpack.c.b16 %v2165, %v2157
    %v2422 = vpack.c.b16 %v2166, %v2158
    %v2423 = vpack.c.b16 %v2167, %v2159
    %v2424 = vpack.c.b16 %v2168, %v2160
    %v2425 = vpack.c.b16 %v2169, %v2161
    %v2426 = vpack.c.b16 %v2170, %v2162
    %v2427 = vpack.c.b16 %v2171, %v2163
    %2684 = vmatprep.subr.bf16.mxu0 %v2173
    %2685 = vmatpush1.bf16.msra.mxu0 %v2172
    %2686 = vmatprep.subr.bf16.mxu0 %v2181
    %2687 = vmatpush1.bf16.msra.mxu0 %v2180
    %2688 = vmatprep.subr.bf16.mxu0 %v2189
    %2689 = vmatpush1.bf16.msra.mxu0 %v2188
    %2690 = vmatprep.subr.bf16.mxu0 %v2197
    %2691 = vmatpush1.bf16.msra.mxu0 %v2196
    %2692 = vmatprep.subr.bf16.mxu0 %v2205
    %2693 = vmatpush1.bf16.msra.mxu0 %v2204
    %2694 = vmatprep.subr.bf16.mxu0 %v2213
    %2695 = vmatpush1.bf16.msra.mxu0 %v2212
    %2696 = vmatprep.subr.bf16.mxu0 %v2221
    %2697 = vmatpush1.bf16.msra.mxu0 %v2220
    %2698 = vmatprep.subr.bf16.mxu0 %v2229
    %2699 = vmatpush1.bf16.msra.mxu0 %v2228
    %2700 = vmatprep.subr.bf16.mxu0 %v2237
    %2701 = vmatpush1.bf16.msra.mxu0 %v2236
    %2702 = vmatprep.subr.bf16.mxu0 %v2245
    %2703 = vmatpush1.bf16.msra.mxu0 %v2244
    %2704 = vmatprep.subr.bf16.mxu0 %v2253
    %2705 = vmatpush1.bf16.msra.mxu0 %v2252
    %2706 = vmatprep.subr.bf16.mxu0 %v2261
    %2707 = vmatpush1.bf16.msra.mxu0 %v2260
    %2708 = vmatprep.subr.bf16.mxu0 %v2269
    %2709 = vmatpush1.bf16.msra.mxu0 %v2268
    %2710 = vmatprep.subr.bf16.mxu0 %v2277
    %2711 = vmatpush1.bf16.msra.mxu0 %v2276
    %2712 = vmatprep.subr.bf16.mxu0 %v2285
    %2713 = vmatpush1.bf16.msra.mxu0 %v2284
    %2714 = vmatprep.subr.bf16.mxu0 %v2293
    %2715 = vmatpush1.bf16.msra.mxu0 %v2292
    %2716 = vmatprep.mubr.bf16.mxu0 %v1103
    %2717 = vmatmul.mubr.bf16.gmra.mrb[0].mxu0 %v1102
    %v2718 = vpop.f32.mrb[0].mxu0
    %v2719 = vadd.f32 %v1367, %v2718
    %v2720 = vpop.f32.mrb[0].mxu0
    %v2721 = vadd.f32 %v1371, %v2720
    %v2722 = vpop.f32.mrb[0].mxu0
    %v2723 = vpop.f32.mrb[0].mxu0
    %2724 = vdwg.mxu0
    %2725 = vmatprep.subr.bf16.mxu0 %v2301
    %2726 = vmatpush1.bf16.msra.mxu0 %v2300
    %2727 = vmatprep.subr.bf16.mxu0 %v2309
    %2728 = vmatpush1.bf16.msra.mxu0 %v2308
    %2729 = vmatprep.subr.bf16.mxu0 %v2317
    %2730 = vmatpush1.bf16.msra.mxu0 %v2316
    %2731 = vmatprep.subr.bf16.mxu0 %v2325
    %2732 = vmatpush1.bf16.msra.mxu0 %v2324
    %2733 = vmatprep.subr.bf16.mxu0 %v2333
    %2734 = vmatpush1.bf16.msra.mxu0 %v2332
    %2735 = vmatprep.subr.bf16.mxu0 %v2341
    %2736 = vmatpush1.bf16.msra.mxu0 %v2340
    %2737 = vmatprep.subr.bf16.mxu0 %v2349
    %2738 = vmatpush1.bf16.msra.mxu0 %v2348
    %2739 = vmatprep.subr.bf16.mxu0 %v2357
    %2740 = vmatpush1.bf16.msra.mxu0 %v2356
    %2741 = vmatprep.subr.bf16.mxu0 %v2365
    %2742 = vmatpush1.bf16.msra.mxu0 %v2364
    %2743 = vmatprep.subr.bf16.mxu0 %v2373
    %2744 = vmatpush1.bf16.msra.mxu0 %v2372
    %2745 = vmatprep.subr.bf16.mxu0 %v2381
    %2746 = vmatpush1.bf16.msra.mxu0 %v2380
    %2747 = vmatprep.subr.bf16.mxu0 %v2389
    %2748 = vmatpush1.bf16.msra.mxu0 %v2388
    %2749 = vmatprep.subr.bf16.mxu0 %v2397
    %2750 = vmatpush1.bf16.msra.mxu0 %v2396
    %2751 = vmatprep.subr.bf16.mxu0 %v2405
    %2752 = vmatpush1.bf16.msra.mxu0 %v2404
    %2753 = vmatprep.subr.bf16.mxu0 %v2413
    %2754 = vmatpush1.bf16.msra.mxu0 %v2412
    %2755 = vmatprep.subr.bf16.mxu0 %v2421
    %2756 = vmatpush1.bf16.msra.mxu0 %v2420
    %2757 = vmatprep.mubr.bf16.mxu0 %v1105
    %2758 = vmatmul.mubr.bf16.gmra.mrb[0].mxu0 %v1104
    %v2759 = vpop.f32.mrb[0].mxu0
    %v2760 = vadd.f32 %v2719, %v2759
    %v2761 = vpop.f32.mrb[0].mxu0
    %v2762 = vadd.f32 %v2721, %v2761
    %v2763 = vpop.f32.mrb[0].mxu0
    %v2764 = vpop.f32.mrb[0].mxu0
    %2765 = vdwg.mxu0
    %2766 = vmatprep.subr.bf16.mxu0 %v2175
    %2767 = vmatpush1.bf16.msra.mxu0 %v2174
    %2768 = vmatprep.subr.bf16.mxu0 %v2183
    %2769 = vmatpush1.bf16.msra.mxu0 %v2182
    %2770 = vmatprep.subr.bf16.mxu0 %v2191
    %2771 = vmatpush1.bf16.msra.mxu0 %v2190
    %2772 = vmatprep.subr.bf16.mxu0 %v2199
    %2773 = vmatpush1.bf16.msra.mxu0 %v2198
    %2774 = vmatprep.subr.bf16.mxu0 %v2207
    %2775 = vmatpush1.bf16.msra.mxu0 %v2206
    %2776 = vmatprep.subr.bf16.mxu0 %v2215
    %2777 = vmatpush1.bf16.msra.mxu0 %v2214
    %2778 = vmatprep.subr.bf16.mxu0 %v2223
    %2779 = vmatpush1.bf16.msra.mxu0 %v2222
    %2780 = vmatprep.subr.bf16.mxu0 %v2231
    %2781 = vmatpush1.bf16.msra.mxu0 %v2230
    %2782 = vmatprep.subr.bf16.mxu0 %v2239
    %2783 = vmatpush1.bf16.msra.mxu0 %v2238
    %2784 = vmatprep.subr.bf16.mxu0 %v2247
    %2785 = vmatpush1.bf16.msra.mxu0 %v2246
    %2786 = vmatprep.subr.bf16.mxu0 %v2255
    %2787 = vmatpush1.bf16.msra.mxu0 %v2254
    %2788 = vmatprep.subr.bf16.mxu0 %v2263
    %2789 = vmatpush1.bf16.msra.mxu0 %v2262
    %2790 = vmatprep.subr.bf16.mxu0 %v2271
    %2791 = vmatpush1.bf16.msra.mxu0 %v2270
    %2792 = vmatprep.subr.bf16.mxu0 %v2279
    %2793 = vmatpush1.bf16.msra.mxu0 %v2278
    %2794 = vmatprep.subr.bf16.mxu0 %v2287
    %2795 = vmatpush1.bf16.msra.mxu0 %v2286
    %2796 = vmatprep.subr.bf16.mxu0 %v2295
    %2797 = vmatpush1.bf16.msra.mxu0 %v2294
    %2798 = vmatprep.mubr.bf16.mxu0 %v1103
    %2799 = vmatmul.mubr.bf16.gmra.mrb[0].mxu0 %v1102
    %v2800 = vpop.f32.mrb[0].mxu0
    %v2801 = vadd.f32 %v1375, %v2800
    %v2802 = vpop.f32.mrb[0].mxu0
    %v2803 = vadd.f32 %v1379, %v2802
    %v2804 = vpop.f32.mrb[0].mxu0
    %v2805 = vpop.f32.mrb[0].mxu0
    %2806 = vdwg.mxu0
    %2807 = vmatprep.subr.bf16.mxu0 %v2303
    %2808 = vmatpush1.bf16.msra.mxu0 %v2302
    %2809 = vmatprep.subr.bf16.mxu0 %v2311
    %2810 = vmatpush1.bf16.msra.mxu0 %v2310
    %2811 = vmatprep.subr.bf16.mxu0 %v2319
    %2812 = vmatpush1.bf16.msra.mxu0 %v2318
    %2813 = vmatprep.subr.bf16.mxu0 %v2327
    %2814 = vmatpush1.bf16.msra.mxu0 %v2326
    %2815 = vmatprep.subr.bf16.mxu0 %v2335
    %2816 = vmatpush1.bf16.msra.mxu0 %v2334
    %2817 = vmatprep.subr.bf16.mxu0 %v2343
    %2818 = vmatpush1.bf16.msra.mxu0 %v2342
    %2819 = vmatprep.subr.bf16.mxu0 %v2351
    %2820 = vmatpush1.bf16.msra.mxu0 %v2350
    %2821 = vmatprep.subr.bf16.mxu0 %v2359
    %2822 = vmatpush1.bf16.msra.mxu0 %v2358
    %2823 = vmatprep.subr.bf16.mxu0 %v2367
    %2824 = vmatpush1.bf16.msra.mxu0 %v2366
    %2825 = vmatprep.subr.bf16.mxu0 %v2375
    %2826 = vmatpush1.bf16.msra.mxu0 %v2374
    %2827 = vmatprep.subr.bf16.mxu0 %v2383
    %2828 = vmatpush1.bf16.msra.mxu0 %v2382
    %2829 = vmatprep.subr.bf16.mxu0 %v2391
    %2830 = vmatpush1.bf16.msra.mxu0 %v2390
    %2831 = vmatprep.subr.bf16.mxu0 %v2399
    %2832 = vmatpush1.bf16.msra.mxu0 %v2398
    %2833 = vmatprep.subr.bf16.mxu0 %v2407
    %2834 = vmatpush1.bf16.msra.mxu0 %v2406
    %2835 = vmatprep.subr.bf16.mxu0 %v2415
    %2836 = vmatpush1.bf16.msra.mxu0 %v2414
    %2837 = vmatprep.subr.bf16.mxu0 %v2423
    %2838 = vmatpush1.bf16.msra.mxu0 %v2422
    %2839 = vmatprep.mubr.bf16.mxu0 %v1105
    %2840 = vmatmul.mubr.bf16.gmra.mrb[0].mxu0 %v1104
    %v2841 = vpop.f32.mrb[0].mxu0
    %v2842 = vadd.f32 %v2801, %v2841
    %v2843 = vpop.f32.mrb[0].mxu0
    %v2844 = vadd.f32 %v2803, %v2843
    %v2845 = vpop.f32.mrb[0].mxu0
    %v2846 = vpop.f32.mrb[0].mxu0
    %2847 = vdwg.mxu0
    %2848 = vmatprep.subr.bf16.mxu0 %v2177
    %2849 = vmatpush1.bf16.msra.mxu0 %v2176
    %2850 = vmatprep.subr.bf16.mxu0 %v2185
    %2851 = vmatpush1.bf16.msra.mxu0 %v2184
    %2852 = vmatprep.subr.bf16.mxu0 %v2193
    %2853 = vmatpush1.bf16.msra.mxu0 %v2192
    %2854 = vmatprep.subr.bf16.mxu0 %v2201
    %2855 = vmatpush1.bf16.msra.mxu0 %v2200
    %2856 = vmatprep.subr.bf16.mxu0 %v2209
    %2857 = vmatpush1.bf16.msra.mxu0 %v2208
    %2858 = vmatprep.subr.bf16.mxu0 %v2217
    %2859 = vmatpush1.bf16.msra.mxu0 %v2216
    %2860 = vmatprep.subr.bf16.mxu0 %v2225
    %2861 = vmatpush1.bf16.msra.mxu0 %v2224
    %2862 = vmatprep.subr.bf16.mxu0 %v2233
    %2863 = vmatpush1.bf16.msra.mxu0 %v2232
    %2864 = vmatprep.subr.bf16.mxu0 %v2241
    %2865 = vmatpush1.bf16.msra.mxu0 %v2240
    %2866 = vmatprep.subr.bf16.mxu0 %v2249
    %2867 = vmatpush1.bf16.msra.mxu0 %v2248
    %2868 = vmatprep.subr.bf16.mxu0 %v2257
    %2869 = vmatpush1.bf16.msra.mxu0 %v2256
    %2870 = vmatprep.subr.bf16.mxu0 %v2265
    %2871 = vmatpush1.bf16.msra.mxu0 %v2264
    %2872 = vmatprep.subr.bf16.mxu0 %v2273
    %2873 = vmatpush1.bf16.msra.mxu0 %v2272
    %2874 = vmatprep.subr.bf16.mxu0 %v2281
    %2875 = vmatpush1.bf16.msra.mxu0 %v2280
    %2876 = vmatprep.subr.bf16.mxu0 %v2289
    %2877 = vmatpush1.bf16.msra.mxu0 %v2288
    %2878 = vmatprep.subr.bf16.mxu0 %v2297
    %2879 = vmatpush1.bf16.msra.mxu0 %v2296
    %2880 = vmatprep.mubr.bf16.mxu0 %v1103
    %2881 = vmatmul.mubr.bf16.gmra.mrb[0].mxu0 %v1102
    %v2882 = vpop.f32.mrb[0].mxu0
    %v2883 = vadd.f32 %v1383, %v2882
    %v2884 = vpop.f32.mrb[0].mxu0
    %v2885 = vadd.f32 %v1387, %v2884
    %v2886 = vpop.f32.mrb[0].mxu0
    %v2887 = vpop.f32.mrb[0].mxu0
    %2888 = vdwg.mxu0
    %2889 = vmatprep.subr.bf16.mxu0 %v2305
    %2890 = vmatpush1.bf16.msra.mxu0 %v2304
    %2891 = vmatprep.subr.bf16.mxu0 %v2313
    %2892 = vmatpush1.bf16.msra.mxu0 %v2312
    %2893 = vmatprep.subr.bf16.mxu0 %v2321
    %2894 = vmatpush1.bf16.msra.mxu0 %v2320
    %2895 = vmatprep.subr.bf16.mxu0 %v2329
    %2896 = vmatpush1.bf16.msra.mxu0 %v2328
    %2897 = vmatprep.subr.bf16.mxu0 %v2337
    %2898 = vmatpush1.bf16.msra.mxu0 %v2336
    %2899 = vmatprep.subr.bf16.mxu0 %v2345
    %2900 = vmatpush1.bf16.msra.mxu0 %v2344
    %2901 = vmatprep.subr.bf16.mxu0 %v2353
    %2902 = vmatpush1.bf16.msra.mxu0 %v2352
    %2903 = vmatprep.subr.bf16.mxu0 %v2361
    %2904 = vmatpush1.bf16.msra.mxu0 %v2360
    %2905 = vmatprep.subr.bf16.mxu0 %v2369
    %2906 = vmatpush1.bf16.msra.mxu0 %v2368
    %2907 = vmatprep.subr.bf16.mxu0 %v2377
    %2908 = vmatpush1.bf16.msra.mxu0 %v2376
    %2909 = vmatprep.subr.bf16.mxu0 %v2385
    %2910 = vmatpush1.bf16.msra.mxu0 %v2384
    %2911 = vmatprep.subr.bf16.mxu0 %v2393
    %2912 = vmatpush1.bf16.msra.mxu0 %v2392
    %2913 = vmatprep.subr.bf16.mxu0 %v2401
    %2914 = vmatpush1.bf16.msra.mxu0 %v2400
    %2915 = vmatprep.subr.bf16.mxu0 %v2409
    %2916 = vmatpush1.bf16.msra.mxu0 %v2408
    %2917 = vmatprep.subr.bf16.mxu0 %v2417
    %2918 = vmatpush1.bf16.msra.mxu0 %v2416
    %2919 = vmatprep.subr.bf16.mxu0 %v2425
    %2920 = vmatpush1.bf16.msra.mxu0 %v2424
    %2921 = vmatprep.mubr.bf16.mxu0 %v1105
    %2922 = vmatmul.mubr.bf16.gmra.mrb[0].mxu0 %v1104
    %v2923 = vpop.f32.mrb[0].mxu0
    %v2924 = vadd.f32 %v2883, %v2923
    %v2925 = vpop.f32.mrb[0].mxu0
    %v2926 = vadd.f32 %v2885, %v2925
    %v2927 = vpop.f32.mrb[0].mxu0
    %v2928 = vpop.f32.mrb[0].mxu0
    %2929 = vdwg.mxu0
    %2930 = vmatprep.subr.bf16.mxu0 %v2179
    %2931 = vmatpush1.bf16.msra.mxu0 %v2178
    %2932 = vmatprep.subr.bf16.mxu0 %v2187
    %2933 = vmatpush1.bf16.msra.mxu0 %v2186
    %2934 = vmatprep.subr.bf16.mxu0 %v2195
    %2935 = vmatpush1.bf16.msra.mxu0 %v2194
    %2936 = vmatprep.subr.bf16.mxu0 %v2203
    %2937 = vmatpush1.bf16.msra.mxu0 %v2202
    %2938 = vmatprep.subr.bf16.mxu0 %v2211
    %2939 = vmatpush1.bf16.msra.mxu0 %v2210
    %2940 = vmatprep.subr.bf16.mxu0 %v2219
    %2941 = vmatpush1.bf16.msra.mxu0 %v2218
    %2942 = vmatprep.subr.bf16.mxu0 %v2227
    %2943 = vmatpush1.bf16.msra.mxu0 %v2226
    %2944 = vmatprep.subr.bf16.mxu0 %v2235
    %2945 = vmatpush1.bf16.msra.mxu0 %v2234
    %2946 = vmatprep.subr.bf16.mxu0 %v2243
    %2947 = vmatpush1.bf16.msra.mxu0 %v2242
    %2948 = vmatprep.subr.bf16.mxu0 %v2251
    %2949 = vmatpush1.bf16.msra.mxu0 %v2250
    %2950 = vmatprep.subr.bf16.mxu0 %v2259
    %2951 = vmatpush1.bf16.msra.mxu0 %v2258
    %2952 = vmatprep.subr.bf16.mxu0 %v2267
    %2953 = vmatpush1.bf16.msra.mxu0 %v2266
    %2954 = vmatprep.subr.bf16.mxu0 %v2275
    %2955 = vmatpush1.bf16.msra.mxu0 %v2274
    %2956 = vmatprep.subr.bf16.mxu0 %v2283
    %2957 = vmatpush1.bf16.msra.mxu0 %v2282
    %2958 = vmatprep.subr.bf16.mxu0 %v2291
    %2959 = vmatpush1.bf16.msra.mxu0 %v2290
    %2960 = vmatprep.subr.bf16.mxu0 %v2299
    %2961 = vmatpush1.bf16.msra.mxu0 %v2298
    %2962 = vmatprep.mubr.bf16.mxu0 %v1103
    %2963 = vmatmul.mubr.bf16.gmra.mrb[0].mxu0 %v1102
    %v2964 = vpop.f32.mrb[0].mxu0
    %v2965 = vadd.f32 %v1391, %v2964
    %v2966 = vpop.f32.mrb[0].mxu0
    %v2967 = vadd.f32 %v1395, %v2966
    %v2968 = vpop.f32.mrb[0].mxu0
    %v2969 = vpop.f32.mrb[0].mxu0
    %2970 = vdwg.mxu0
    %2971 = vmatprep.subr.bf16.mxu0 %v2307
    %2972 = vmatpush1.bf16.msra.mxu0 %v2306
    %2973 = vmatprep.subr.bf16.mxu0 %v2315
    %2974 = vmatpush1.bf16.msra.mxu0 %v2314
    %2975 = vmatprep.subr.bf16.mxu0 %v2323
    %2976 = vmatpush1.bf16.msra.mxu0 %v2322
    %2977 = vmatprep.subr.bf16.mxu0 %v2331
    %2978 = vmatpush1.bf16.msra.mxu0 %v2330
    %2979 = vmatprep.subr.bf16.mxu0 %v2339
    %2980 = vmatpush1.bf16.msra.mxu0 %v2338
    %2981 = vmatprep.subr.bf16.mxu0 %v2347
    %2982 = vmatpush1.bf16.msra.mxu0 %v2346
    %2983 = vmatprep.subr.bf16.mxu0 %v2355
    %2984 = vmatpush1.bf16.msra.mxu0 %v2354
    %2985 = vmatprep.subr.bf16.mxu0 %v2363
    %2986 = vmatpush1.bf16.msra.mxu0 %v2362
    %2987 = vmatprep.subr.bf16.mxu0 %v2371
    %2988 = vmatpush1.bf16.msra.mxu0 %v2370
    %2989 = vmatprep.subr.bf16.mxu0 %v2379
    %2990 = vmatpush1.bf16.msra.mxu0 %v2378
    %2991 = vmatprep.subr.bf16.mxu0 %v2387
    %2992 = vmatpush1.bf16.msra.mxu0 %v2386
    %2993 = vmatprep.subr.bf16.mxu0 %v2395
    %2994 = vmatpush1.bf16.msra.mxu0 %v2394
    %2995 = vmatprep.subr.bf16.mxu0 %v2403
    %2996 = vmatpush1.bf16.msra.mxu0 %v2402
    %2997 = vmatprep.subr.bf16.mxu0 %v2411
    %2998 = vmatpush1.bf16.msra.mxu0 %v2410
    %2999 = vmatprep.subr.bf16.mxu0 %v2419
    %3000 = vmatpush1.bf16.msra.mxu0 %v2418
    %3001 = vmatprep.subr.bf16.mxu0 %v2427
    %3002 = vmatpush1.bf16.msra.mxu0 %v2426
    %3003 = vmatprep.mubr.bf16.mxu0 %v1105
    %3004 = vmatmul.mubr.bf16.gmra.mrb[0].mxu0 %v1104
    %v3005 = vpop.f32.mrb[0].mxu0
    %v3006 = vadd.f32 %v2965, %v3005
    %v3007 = vpop.f32.mrb[0].mxu0
    %v3008 = vadd.f32 %v2967, %v3007
    %v3009 = vpop.f32.mrb[0].mxu0
    %v3010 = vpop.f32.mrb[0].mxu0
    %3011 = vdwg.mxu0
    %v3012 = vrot.slane %v2760, 4
    %v3013 = vadd.f32 %v2760, %v3012
    %v3014 = vrot.slane %v3013, 2
    %v3015 = vadd.f32 %v3013, %v3014
    %v3016 = vrot.slane %v3015, 1
    %v3017 = vadd.f32 %v3015, %v3016
    %v3018 = vrot.slane %v2762, 4
    %v3019 = vadd.f32 %v2762, %v3018
    %v3020 = vrot.slane %v3019, 2
    %v3021 = vadd.f32 %v3019, %v3020
    %v3022 = vrot.slane %v3021, 1
    %v3023 = vadd.f32 %v3021, %v3022
    %v3024 = vrot.slane %v2842, 4
    %v3025 = vadd.f32 %v2842, %v3024
    %v3026 = vrot.slane %v3025, 2
    %v3027 = vadd.f32 %v3025, %v3026
    %v3028 = vrot.slane %v3027, 1
    %v3029 = vadd.f32 %v3027, %v3028
    %v3030 = vrot.slane %v2844, 4
    %v3031 = vadd.f32 %v2844, %v3030
    %v3032 = vrot.slane %v3031, 2
    %v3033 = vadd.f32 %v3031, %v3032
    %v3034 = vrot.slane %v3033, 1
    %v3035 = vadd.f32 %v3033, %v3034
    %v3036 = vrot.slane %v2924, 4
    %v3037 = vadd.f32 %v2924, %v3036
    %v3038 = vrot.slane %v3037, 2
    %v3039 = vadd.f32 %v3037, %v3038
    %v3040 = vrot.slane %v3039, 1
    %v3041 = vadd.f32 %v3039, %v3040
    %v3042 = vrot.slane %v2926, 4
    %v3043 = vadd.f32 %v2926, %v3042
    %v3044 = vrot.slane %v3043, 2
    %v3045 = vadd.f32 %v3043, %v3044
    %v3046 = vrot.slane %v3045, 1
    %v3047 = vadd.f32 %v3045, %v3046
    %v3048 = vrot.slane %v3006, 4
    %v3049 = vadd.f32 %v3006, %v3048
    %v3050 = vrot.slane %v3049, 2
    %v3051 = vadd.f32 %v3049, %v3050
    %v3052 = vrot.slane %v3051, 1
    %v3053 = vadd.f32 %v3051, %v3052
    %v3054 = vrot.slane %v3008, 4
    %v3055 = vadd.f32 %v3008, %v3054
    %v3056 = vrot.slane %v3055, 2
    %v3057 = vadd.f32 %v3055, %v3056
    %v3058 = vrot.slane %v3057, 1
    %v3059 = vadd.f32 %v3057, %v3058
    %v3060 = vmul.f32 %v2760, %v2760
    %v3061 = vmul.f32 %v2762, %v2762
    %v3062 = vmul.f32 %v2842, %v2842
    %v3063 = vmul.f32 %v2844, %v2844
    %v3064 = vmul.f32 %v2924, %v2924
    %v3065 = vmul.f32 %v2926, %v2926
    %v3066 = vmul.f32 %v3006, %v3006
    %v3067 = vmul.f32 %v3008, %v3008
    %v3068 = vrot.slane %v3060, 4
    %v3069 = vadd.f32 %v3060, %v3068
    %v3070 = vrot.slane %v3069, 2
    %v3071 = vadd.f32 %v3069, %v3070
    %v3072 = vrot.slane %v3071, 1
    %v3073 = vadd.f32 %v3071, %v3072
    %v3074 = vrot.slane %v3061, 4
    %v3075 = vadd.f32 %v3061, %v3074
    %v3076 = vrot.slane %v3075, 2
    %v3077 = vadd.f32 %v3075, %v3076
    %v3078 = vrot.slane %v3077, 1
    %v3079 = vadd.f32 %v3077, %v3078
    %v3080 = vrot.slane %v3062, 4
    %v3081 = vadd.f32 %v3062, %v3080
    %v3082 = vrot.slane %v3081, 2
    %v3083 = vadd.f32 %v3081, %v3082
    %v3084 = vrot.slane %v3083, 1
    %v3085 = vadd.f32 %v3083, %v3084
    %v3086 = vrot.slane %v3063, 4
    %v3087 = vadd.f32 %v3063, %v3086
    %v3088 = vrot.slane %v3087, 2
    %v3089 = vadd.f32 %v3087, %v3088
    %v3090 = vrot.slane %v3089, 1
    %v3091 = vadd.f32 %v3089, %v3090
    %v3092 = vrot.slane %v3064, 4
    %v3093 = vadd.f32 %v3064, %v3092
    %v3094 = vrot.slane %v3093, 2
    %v3095 = vadd.f32 %v3093, %v3094
    %v3096 = vrot.slane %v3095, 1
    %v3097 = vadd.f32 %v3095, %v3096
    %v3098 = vrot.slane %v3065, 4
    %v3099 = vadd.f32 %v3065, %v3098
    %v3100 = vrot.slane %v3099, 2
    %v3101 = vadd.f32 %v3099, %v3100
    %v3102 = vrot.slane %v3101, 1
    %v3103 = vadd.f32 %v3101, %v3102
    %v3104 = vrot.slane %v3066, 4
    %v3105 = vadd.f32 %v3066, %v3104
    %v3106 = vrot.slane %v3105, 2
    %v3107 = vadd.f32 %v3105, %v3106
    %v3108 = vrot.slane %v3107, 1
    %v3109 = vadd.f32 %v3107, %v3108
    %v3110 = vrot.slane %v3067, 4
    %v3111 = vadd.f32 %v3067, %v3110
    %v3112 = vrot.slane %v3111, 2
    %v3113 = vadd.f32 %v3111, %v3112
    %v3114 = vrot.slane %v3113, 1
    %v3115 = vadd.f32 %v3113, %v3114
    %v3116 = vmul.f32 %v3017, 0.125
    %v3117 = vmul.f32 %v3023, 0.125
    %v3118 = vmul.f32 %v3029, 0.125
    %v3119 = vmul.f32 %v3035, 0.125
    %v3120 = vmul.f32 %v3041, 0.125
    %v3121 = vmul.f32 %v3047, 0.125
    %v3122 = vmul.f32 %v3053, 0.125
    %v3123 = vmul.f32 %v3059, 0.125
    %v3124 = vmul.f32 %v3073, 0.125
    %v3125 = vmul.f32 %v3079, 0.125
    %v3126 = vmul.f32 %v3085, 0.125
    %v3127 = vmul.f32 %v3091, 0.125
    %v3128 = vmul.f32 %v3097, 0.125
    %v3129 = vmul.f32 %v3103, 0.125
    %v3130 = vmul.f32 %v3109, 0.125
    %v3131 = vmul.f32 %v3115, 0.125
    %v3132 = vmul.f32 %v3116, %v3116
    %v3133 = vmul.f32 %v3117, %v3117
    %v3134 = vmul.f32 %v3118, %v3118
    %v3135 = vmul.f32 %v3119, %v3119
    %v3136 = vmul.f32 %v3120, %v3120
    %v3137 = vmul.f32 %v3121, %v3121
    %v3138 = vmul.f32 %v3122, %v3122
    %v3139 = vmul.f32 %v3123, %v3123
    %v3140 = vsub.f32 %v3124, %v3132
    %v3141 = vsub.f32 %v3125, %v3133
    %v3142 = vsub.f32 %v3126, %v3134
    %v3143 = vsub.f32 %v3127, %v3135
    %v3144 = vsub.f32 %v3128, %v3136
    %v3145 = vsub.f32 %v3129, %v3137
    %v3146 = vsub.f32 %v3130, %v3138
    %v3147 = vsub.f32 %v3131, %v3139
    %v3148 = vsub.f32 %v2760, %v3116
    %v3149 = vsub.f32 %v2762, %v3117
    %v3150 = vsub.f32 %v2842, %v3118
    %v3151 = vsub.f32 %v2844, %v3119
    %v3152 = vsub.f32 %v2924, %v3120
    %v3153 = vsub.f32 %v2926, %v3121
    %v3154 = vsub.f32 %v3006, %v3122
    %v3155 = vsub.f32 %v3008, %v3123
    %v3156 = vadd.f32 %v3140, 0.8
    %v3157 = vadd.f32 %v3141, 0.8
    %v3158 = vadd.f32 %v3142, 0.8
    %v3159 = vadd.f32 %v3143, 0.8
    %v3160 = vadd.f32 %v3144, 0.8
    %v3161 = vadd.f32 %v3145, 0.8
    %v3162 = vadd.f32 %v3146, 0.8
    %v3163 = vadd.f32 %v3147, 0.8
    %v3164 = vrsqrt.pop %v3156
    %v3165 = vrsqrt.pop %v3157
    %v3166 = vrsqrt.pop %v3158
    %v3167 = vrsqrt.pop %v3159
    %v3168 = vrsqrt.pop %v3160
    %v3169 = vrsqrt.pop %v3161
    %v3170 = vrsqrt.pop %v3162
    %v3171 = vrsqrt.pop %v3163
    %v3172 = vmul.f32 %v3148, %v3164
    %v3173 = vmul.f32 %v3149, %v3165
    %v3174 = vmul.f32 %v3150, %v3166
    %v3175 = vmul.f32 %v3151, %v3167
    %v3176 = vmul.f32 %v3152, %v3168
    %v3177 = vmul.f32 %v3153, %v3169
    %v3178 = vmul.f32 %v3154, %v3170
    %v3179 = vmul.f32 %v3155, %v3171
    %v3180 = vld [vmem:[%s13] sm:$0xff]
    %v3182 = vlaneseq
    %v3183 = vshrl.u32 %v3182, 7
    %v3184 = vsub.s32 0, %v3183
    %v3185 = vrot.slane %v3180, %v3184
    %v3186 = vlaneseq
    %v3187 = vshrl.u32 %v3186, 7
    %v3188 = vsub.s32 1, %v3187
    %v3189 = vrot.slane %v3180, %v3188
    %v3190 = vlaneseq
    %v3191 = vshrl.u32 %v3190, 7
    %v3192 = vsub.s32 2, %v3191
    %v3193 = vrot.slane %v3180, %v3192
    %v3194 = vlaneseq
    %v3195 = vshrl.u32 %v3194, 7
    %v3196 = vsub.s32 3, %v3195
    %v3197 = vrot.slane %v3180, %v3196
    %v3198 = vlaneseq
    %v3199 = vshrl.u32 %v3198, 7
    %v3200 = vsub.s32 4, %v3199
    %v3201 = vrot.slane %v3180, %v3200
    %v3202 = vlaneseq
    %v3203 = vshrl.u32 %v3202, 7
    %v3204 = vsub.s32 5, %v3203
    %v3205 = vrot.slane %v3180, %v3204
    %v3206 = vlaneseq
    %v3207 = vshrl.u32 %v3206, 7
    %v3208 = vsub.s32 6, %v3207
    %v3209 = vrot.slane %v3180, %v3208
    %v3210 = vlaneseq
    %v3211 = vshrl.u32 %v3210, 7
    %v3212 = vsub.s32 7, %v3211
    %v3213 = vrot.slane %v3180, %v3212
    %v3222 = vmul.f32 %v3172, %v3185
    %v3223 = vmul.f32 %v3173, %v3189
    %v3224 = vmul.f32 %v3174, %v3193
    %v3225 = vmul.f32 %v3175, %v3197
    %v3226 = vmul.f32 %v3176, %v3201
    %v3227 = vmul.f32 %v3177, %v3205
    %v3228 = vmul.f32 %v3178, %v3209
    %v3229 = vmul.f32 %v3179, %v3213
    %v3230 = vld [vmem:[#allocation16] sm:$0xff]
    %v3232 = vlaneseq
    %v3233 = vshrl.u32 %v3232, 7
    %v3234 = vsub.s32 0, %v3233
    %v3235 = vrot.slane %v3230, %v3234
    %v3236 = vlaneseq
    %v3237 = vshrl.u32 %v3236, 7
    %v3238 = vsub.s32 1, %v3237
    %v3239 = vrot.slane %v3230, %v3238
    %v3240 = vlaneseq
    %v3241 = vshrl.u32 %v3240, 7
    %v3242 = vsub.s32 2, %v3241
    %v3243 = vrot.slane %v3230, %v3242
    %v3244 = vlaneseq
    %v3245 = vshrl.u32 %v3244, 7
    %v3246 = vsub.s32 3, %v3245
    %v3247 = vrot.slane %v3230, %v3246
    %v3248 = vlaneseq
    %v3249 = vshrl.u32 %v3248, 7
    %v3250 = vsub.s32 4, %v3249
    %v3251 = vrot.slane %v3230, %v3250
    %v3252 = vlaneseq
    %v3253 = vshrl.u32 %v3252, 7
    %v3254 = vsub.s32 5, %v3253
    %v3255 = vrot.slane %v3230, %v3254
    %v3256 = vlaneseq
    %v3257 = vshrl.u32 %v3256, 7
    %v3258 = vsub.s32 6, %v3257
    %v3259 = vrot.slane %v3230, %v3258
    %v3260 = vlaneseq
    %v3261 = vshrl.u32 %v3260, 7
    %v3262 = vsub.s32 7, %v3261
    %v3263 = vrot.slane %v3230, %v3262
    %v3272 = vadd.f32 %v3222, %v3235
    %v3273 = vadd.f32 %v3223, %v3239
    %v3274 = vadd.f32 %v3224, %v3243
    %v3275 = vadd.f32 %v3225, %v3247
    %v3276 = vadd.f32 %v3226, %v3251
    %v3277 = vadd.f32 %v3227, %v3255
    %v3278 = vadd.f32 %v3228, %v3259
    %v3279 = vadd.f32 %v3229, %v3263
    %v3280 = vmul.f32 %v3272, 0.2
    %v3281 = vmul.f32 %v3273, 0.2
    %v3282 = vmul.f32 %v3274, 0.2
    %v3283 = vmul.f32 %v3275, 0.2
    %v3284 = vmul.f32 %v3276, 0.2
    %v3285 = vmul.f32 %v3277, 0.2
    %v3286 = vmul.f32 %v3278, 0.2
    %v3287 = vmul.f32 %v3279, 0.2
    %v3288 = vmax.f32 %v3272, %v3280
    %v3289 = vmax.f32 %v3273, %v3281
    %v3290 = vmax.f32 %v3274, %v3282
    %v3291 = vmax.f32 %v3275, %v3283
    %v3292 = vmax.f32 %v3276, %v3284
    %v3293 = vmax.f32 %v3277, %v3285
    %v3294 = vmax.f32 %v3278, %v3286
    %v3295 = vmax.f32 %v3279, %v3287
    %v3296 = vpack.c.bf16 %v3288, %v3288
    %v3297 = vpack.c.bf16 %v3289, %v3289
    %v3298 = vpack.c.bf16 %v3290, %v3290
    %v3299 = vpack.c.bf16 %v3291, %v3291
    %v3300 = vpack.c.bf16 %v3292, %v3292
    %v3301 = vpack.c.bf16 %v3293, %v3293
    %v3302 = vpack.c.bf16 %v3294, %v3294
    %v3303 = vpack.c.bf16 %v3295, %v3295
    %v3312 = vunpack.c.l.b16 %v3296
    %v3313 = vunpack.c.l.b16 %v3297
    %v3314 = vunpack.c.l.b16 %v3298
    %v3315 = vunpack.c.l.b16 %v3299
    %v3316 = vunpack.c.l.b16 %v3300
    %v3317 = vunpack.c.l.b16 %v3301
    %v3318 = vunpack.c.l.b16 %v3302
    %v3319 = vunpack.c.l.b16 %v3303
    %v3320 = vpack.c.b16 %v3313, %v3312
    %v3321 = vpack.c.b16 %v3315, %v3314
    %v3322 = vpack.c.b16 %v3317, %v3316
    %v3323 = vpack.c.b16 %v3319, %v3318
    %3328 = vst [vmem:[%s15] sm:$0xff] %v3320
    %3329 = vst [vmem:[%s15 + $0x8] sm:$0xff] %v3321
    %3330 = vst [vmem:[%s15 + $0x10] sm:$0xff] %v3322
    %3331 = vst [vmem:[%s15 + $0x18] sm:$0xff] %v3323
    // Predicated region
    $region102: #{generator_forward.2} parent=1 // pred_check
      _
    $region103: #{generator_forward.2} parent=1 // pred_check_branch
      %3333 = sbr.rel (0) target = $region105
    $region104: #{generator_forward.2} parent=1 // pred_region
      _
    $region105: #{generator_forward.2} parent=1 // pred_fallthru
      _
    // Predicated region
    $region106: #{generator_forward.2} parent=1 // pred_check
      _
    $region107: #{generator_forward.2} parent=1 // pred_check_branch
      %3335 = sbr.rel (0) target = $region109
    $region108: #{generator_forward.2} parent=1 // pred_region
      _
    $region109: #{generator_forward.2} parent=1 // pred_fallthru
      _
    %3336 = vsyncpa [#allocation3], 1
    %3337 = vsyncpa [#allocation5], 1
    %3338 = vsyncpa [#allocation8], 1
    %3339 = vsyncpa [#allocation11], 1
    %3340 = vsyncpa [#allocation14], 1
    %3341 = vsyncpa [#allocation17], 1

</llo_original>
